<compile_context>
chip_gen: v7x
topology: tpu7x:2x2x1
jax: 0.10.0
libtpu: 0.0.40
codegen_flags: <defaults>
</compile_context>

<pallas_src>
import jax
import jax.numpy as jnp
from jax import lax
from jax.experimental import pallas as pl
from jax.experimental.pallas import tpu as pltpu


# ----------------------------- in-kernel helpers ----------------------------

def _layernorm(x, g, b):
    """f32 LayerNorm over the last dim, eps=1e-5 (PyTorch default)."""
    mean = jnp.mean(x, axis=-1, keepdims=True)
    var = jnp.mean(jnp.square(x - mean), axis=-1, keepdims=True)
    return (x - mean) * lax.rsqrt(var + 1e-5) * g + b


def _gelu_exact(g):
    """Exact (erf) GELU matching torch.nn.functional.gelu default, in f32."""
    return 0.5 * g * (1.0 + lax.erf(g * (2.0 ** -0.5)))


def _per_head_attention(q, k, v, wo, heads, dim_head, out_shape):
    """q:(Nq,inner) f32 (already scaled), k,v:(Nk,inner) f32, wo:(inner,Dq) bf16.

    Computes softmax(q_h k_h^T) v_h per head and folds the out-projection in
    head-by-head:  out = sum_h (attn_h @ v_h) @ wo[h*dh:(h+1)*dh, :].
    Everything stays in registers / VMEM.
    """
    acc = jnp.zeros(out_shape, jnp.float32)
    for h in range(heads):
        lo = h * dim_head
        qh = q[:, lo:lo + dim_head].astype(jnp.bfloat16)
        kh = k[:, lo:lo + dim_head].astype(jnp.bfloat16)
        vh = v[:, lo:lo + dim_head].astype(jnp.bfloat16)
        # QK^T via transposed contraction (no explicit k.T materialization).
        sim = lax.dot_general(qh, kh, (((1,), (1,)), ((), ())),
                              preferred_element_type=jnp.float32)      # (Nq, Nk)
        sim = sim - jnp.max(sim, axis=-1, keepdims=True)
        p = jnp.exp(sim)
        attn = p * pl.reciprocal(jnp.sum(p, axis=-1, keepdims=True), approx=True)
        oh = jnp.dot(attn.astype(jnp.bfloat16), vh,
                     preferred_element_type=jnp.float32)                # (Nq, dh)
        acc = acc + jnp.dot(oh.astype(jnp.bfloat16), wo[lo:lo + dim_head, :],
                            preferred_element_type=jnp.float32)         # (Nq, Dq)
    return acc


# ----------------------------- fused block kernels ---------------------------

def _make_cross_attn_block_kernel(heads, dim_head, scale):
    inner = heads * dim_head

    def kernel(x_ref, ctx_ref, g_ref, b_ref, gc_ref, bc_ref,
               wq_ref, wkv_ref, wo_ref, bo_ref, o_ref):
        x = x_ref[0]                                     # (Nq, Dq) f32
        ctx = ctx_ref[0]                                 # (Nk, Dc) f32
        xn = _layernorm(x, g_ref[...], b_ref[...])
        cn = _layernorm(ctx, gc_ref[...], bc_ref[...])
        # Q / KV projections (bias-free), bf16 MXU inputs, f32 accumulation.
        q = jnp.dot(xn.astype(jnp.bfloat16), wq_ref[...],
                    preferred_element_type=jnp.float32) * scale        # (Nq, inner)
        kv = jnp.dot(cn.astype(jnp.bfloat16), wkv_ref[...],
                     preferred_element_type=jnp.float32)               # (Nk, 2*inner)
        k = kv[:, :inner]
        v = kv[:, inner:]
        acc = _per_head_attention(q, k, v, wo_ref[...], heads, dim_head, x.shape)
        o_ref[0] = acc + bo_ref[...] + x                 # out-proj bias + residual

    return kernel


def _make_self_attn_block_kernel(heads, dim_head, scale):
    inner = heads * dim_head

    def kernel(x_ref, g_ref, b_ref, wqkv_ref, wo_ref, bo_ref, o_ref):
        x = x_ref[0]                                     # (N, D) f32
        xn = _layernorm(x, g_ref[...], b_ref[...])
        # Single fused QKV projection (context == x).
        qkv = jnp.dot(xn.astype(jnp.bfloat16), wqkv_ref[...],
                      preferred_element_type=jnp.float32)              # (N, 3*inner)
        q = qkv[:, :inner] * scale
        k = qkv[:, inner:2 * inner]
        v = qkv[:, 2 * inner:]
        acc = _per_head_attention(q, k, v, wo_ref[...], heads, dim_head, x.shape)
        o_ref[0] = acc + bo_ref[...] + x

    return kernel


def _ff_block_kernel(x_ref, g_ref, b_ref, w1_ref, b1_ref, w2_ref, b2_ref, o_ref):
    x = x_ref[0]                                         # (N, D) f32
    xn = _layernorm(x, g_ref[...], b_ref[...])
    h = jnp.dot(xn.astype(jnp.bfloat16), w1_ref[...],
                preferred_element_type=jnp.float32) + b1_ref[...]      # (N, 8D)
    half = h.shape[-1] // 2
    gated = h[:, :half] * _gelu_exact(h[:, half:])                      # (N, 4D)
    o_ref[0] = (jnp.dot(gated.astype(jnp.bfloat16), w2_ref[...],
                        preferred_element_type=jnp.float32)
                + b2_ref[...] + x)


# ----------------------------- kernel wrappers -------------------------------

_PARALLEL = pltpu.CompilerParams(dimension_semantics=("parallel",))


def cross_attn_block(x, ctx, p, heads, dim_head):
    """PreNorm(x) + PreNorm(ctx) -> Attention -> + x, one fused kernel."""
    B, Nq, Dq = x.shape
    _, Nk, Dc = ctx.shape
    inner = heads * dim_head
    scale = float(dim_head) ** -0.5
    kernel = _make_cross_attn_block_kernel(heads, dim_head, scale)
    return pl.pallas_call(
        kernel,
        out_shape=jax.ShapeDtypeStruct((B, Nq, Dq), jnp.float32),
        grid=(B,),
        in_specs=[
            pl.BlockSpec((1, Nq, Dq), lambda b: (b, 0, 0)),
            pl.BlockSpec((1, Nk, Dc), lambda b: (b, 0, 0)),
            pl.BlockSpec((1, Dq), lambda b: (0, 0)),
            pl.BlockSpec((1, Dq), lambda b: (0, 0)),
            pl.BlockSpec((1, Dc), lambda b: (0, 0)),
            pl.BlockSpec((1, Dc), lambda b: (0, 0)),
            pl.BlockSpec((Dq, inner), lambda b: (0, 0)),
            pl.BlockSpec((Dc, 2 * inner), lambda b: (0, 0)),
            pl.BlockSpec((inner, Dq), lambda b: (0, 0)),
            pl.BlockSpec((1, Dq), lambda b: (0, 0)),
        ],
        out_specs=pl.BlockSpec((1, Nq, Dq), lambda b: (b, 0, 0)),
        compiler_params=_PARALLEL,
    )(x, ctx,
      p["ln_g"].reshape(1, Dq), p["ln_b"].reshape(1, Dq),
      p["lnc_g"].reshape(1, Dc), p["lnc_b"].reshape(1, Dc),
      p["wq"], p["wkv"], p["wo"], p["bo"].reshape(1, Dq))


def self_attn_block(x, p, heads, dim_head):
    """PreNorm(x) -> self-Attention (fused QKV) -> + x, one fused kernel."""
    B, N, D = x.shape
    inner = heads * dim_head
    scale = float(dim_head) ** -0.5
    kernel = _make_self_attn_block_kernel(heads, dim_head, scale)
    return pl.pallas_call(
        kernel,
        out_shape=jax.ShapeDtypeStruct((B, N, D), jnp.float32),
        grid=(B,),
        in_specs=[
            pl.BlockSpec((1, N, D), lambda b: (b, 0, 0)),
            pl.BlockSpec((1, D), lambda b: (0, 0)),
            pl.BlockSpec((1, D), lambda b: (0, 0)),
            pl.BlockSpec((D, 3 * inner), lambda b: (0, 0)),
            pl.BlockSpec((inner, D), lambda b: (0, 0)),
            pl.BlockSpec((1, D), lambda b: (0, 0)),
        ],
        out_specs=pl.BlockSpec((1, N, D), lambda b: (b, 0, 0)),
        compiler_params=_PARALLEL,
    )(x, p["ln_g"].reshape(1, D), p["ln_b"].reshape(1, D),
      p["wqkv"], p["wo"], p["bo"].reshape(1, D))


def ff_block(x, p):
    """PreNorm(x) -> Linear -> GEGLU -> Linear -> + x, one fused kernel."""
    B, N, D = x.shape
    F2 = p["w1"].shape[1]          # 2 * mult * D
    F1 = p["w2"].shape[0]          # mult * D
    return pl.pallas_call(
        _ff_block_kernel,
        out_shape=jax.ShapeDtypeStruct((B, N, D), jnp.float32),
        grid=(B,),
        in_specs=[
            pl.BlockSpec((1, N, D), lambda b: (b, 0, 0)),
            pl.BlockSpec((1, D), lambda b: (0, 0)),
            pl.BlockSpec((1, D), lambda b: (0, 0)),
            pl.BlockSpec((D, F2), lambda b: (0, 0)),
            pl.BlockSpec((1, F2), lambda b: (0, 0)),
            pl.BlockSpec((F1, D), lambda b: (0, 0)),
            pl.BlockSpec((1, D), lambda b: (0, 0)),
        ],
        out_specs=pl.BlockSpec((1, N, D), lambda b: (b, 0, 0)),
        compiler_params=_PARALLEL,
    )(x, p["ln_g"].reshape(1, D), p["ln_b"].reshape(1, D),
      p["w1"], p["b1"].reshape(1, F2), p["w2"], p["b2"].reshape(1, D))


# ----------------------------- module forward --------------------------------

def attention_fusion_forward(params, cfg, data, queries_encoder, mask=None):
    assert mask is None  # TODO(synk): mask path not implemented
    x = queries_encoder

    # --- cross attention block (PreNorm on x and on context) + FF ---
    x = cross_attn_block(x, data, params["cross_attn"],
                         cfg["cross_heads"], cfg["cross_dim_head"])
    x = ff_block(x, params["cross_ff"])

    # --- latent self-attention stack ---
    for layer in params["layers"]:
        x = self_attn_block(x, layer["attn"],
                            cfg["latent_heads"], cfg["latent_dim_head"])
        x = ff_block(x, layer["ff"])
    return x


# ----------------------------- parameter init --------------------------------
# Matmul weights are stored in bf16 (MXU-native on all generations); biases and
# LayerNorm affine parameters stay f32 (elementwise math stays f32, v5e-safe).

def _normal(key, shape, scale=0.02):
    return scale * jax.random.normal(key, shape, jnp.float32)


def init_cross_attn_params(key, query_dim, context_dim, heads, dim_head):
    inner = heads * dim_head
    k1, k2, k3 = jax.random.split(key, 3)
    return dict(
        wq=_normal(k1, (query_dim, inner)).astype(jnp.bfloat16),      # to_q, no bias
        wkv=_normal(k2, (context_dim, 2 * inner)).astype(jnp.bfloat16),  # to_kv, no bias
        wo=_normal(k3, (inner, query_dim)).astype(jnp.bfloat16),      # to_out
        bo=jnp.zeros((query_dim,), jnp.float32),
        ln_g=jnp.ones((query_dim,), jnp.float32),
        ln_b=jnp.zeros((query_dim,), jnp.float32),
        lnc_g=jnp.ones((context_dim,), jnp.float32),
        lnc_b=jnp.zeros((context_dim,), jnp.float32),
    )


def init_self_attn_params(key, dim, heads, dim_head):
    inner = heads * dim_head
    k1, k2 = jax.random.split(key)
    return dict(
        wqkv=_normal(k1, (dim, 3 * inner)).astype(jnp.bfloat16),      # fused to_q|to_kv
        wo=_normal(k2, (inner, dim)).astype(jnp.bfloat16),
        bo=jnp.zeros((dim,), jnp.float32),
        ln_g=jnp.ones((dim,), jnp.float32),
        ln_b=jnp.zeros((dim,), jnp.float32),
    )


def init_ff_params(key, dim, mult):
    k1, k2 = jax.random.split(key)
    return dict(
        w1=_normal(k1, (dim, dim * mult * 2)).astype(jnp.bfloat16),
        b1=jnp.zeros((dim * mult * 2,), jnp.float32),
        w2=_normal(k2, (dim * mult, dim)).astype(jnp.bfloat16),
        b2=jnp.zeros((dim,), jnp.float32),
        ln_g=jnp.ones((dim,), jnp.float32),
        ln_b=jnp.zeros((dim,), jnp.float32),
    )


def init_attention_fusion(key, cfg):
    keys = jax.random.split(key, 2 + 2 * cfg["depth"])
    params = {
        "cross_attn": init_cross_attn_params(
            keys[0], cfg["latent_dim"], cfg["dim"],
            cfg["cross_heads"], cfg["cross_dim_head"]),
        "cross_ff": init_ff_params(keys[1], cfg["latent_dim"], cfg["ff_mult"]),
        "layers": [],
    }
    for i in range(cfg["depth"]):   # weight_tie_layers=False -> independent params
        ap = init_self_attn_params(keys[2 + 2 * i], cfg["latent_dim"],
                                   cfg["latent_heads"], cfg["latent_dim_head"])
        fp = init_ff_params(keys[3 + 2 * i], cfg["latent_dim"], cfg["ff_mult"])
        params["layers"].append(dict(attn=ap, ff=fp))
    return params


# ----------------------------------- main ------------------------------------

if __name__ == "__main__":
    cfg = dict(
        depth=2,
        dim=32,               # data (context) feature dim
        latent_dim=64,        # latent / query feature dim
        cross_heads=1,
        latent_heads=4,
        cross_dim_head=16,
        latent_dim_head=16,
        ff_mult=4,
    )

    key = jax.random.PRNGKey(0)
    kp, kd, kq = jax.random.split(key, 3)

    params = init_attention_fusion(kp, cfg)

    B, N_data, N_latent = 2, 16, 8
    data = jax.random.normal(kd, (B, N_data, cfg["dim"]), jnp.float32)
    queries_encoder = jax.random.normal(kq, (B, N_latent, cfg["latent_dim"]), jnp.float32)

    fwd = jax.jit(lambda p, d, q: attention_fusion_forward(p, cfg, d, q, mask=None))
    out = fwd(params, data, queries_encoder)
    out = jax.block_until_ready(out)
    assert out.shape == (B, N_latent, cfg["latent_dim"])
    assert bool(jnp.all(jnp.isfinite(out)))
    print("KERNEL_OK")
</pallas_src>

<mosaic_0001>
module attributes {stable_mosaic.version = 11 : i64} {
  func.func @kernel(%arg0: i32, %arg1: memref<1x8x64xf32, #tpu.memory_space<vmem>>, %arg2: memref<1x16x32xf32, #tpu.memory_space<vmem>>, %arg3: memref<1x64xf32, #tpu.memory_space<vmem>>, %arg4: memref<1x64xf32, #tpu.memory_space<vmem>>, %arg5: memref<1x32xf32, #tpu.memory_space<vmem>>, %arg6: memref<1x32xf32, #tpu.memory_space<vmem>>, %arg7: memref<64x16xbf16, #tpu.memory_space<vmem>>, %arg8: memref<32x32xbf16, #tpu.memory_space<vmem>>, %arg9: memref<16x64xbf16, #tpu.memory_space<vmem>>, %arg10: memref<1x64xf32, #tpu.memory_space<vmem>>, %arg11: memref<1x8x64xf32, #tpu.memory_space<vmem>>) attributes {dimension_semantics = [#tpu.dimension_semantics<parallel>], iteration_bounds = array<i64: 2>, scalar_prefetch = 0 : i64, scratch_operands = 0 : i64, tpu.core_type = #tpu.core_type<tc>, window_params = [{transform_indices = @transform_0, window_bounds = array<i64: 1, 8, 64>}, {transform_indices = @transform_1, window_bounds = array<i64: 1, 16, 32>}, {pipeline_mode = #tpu.pipeline_mode<synchronous>, transform_indices = @transform_2, window_bounds = array<i64: 1, 64>}, {pipeline_mode = #tpu.pipeline_mode<synchronous>, transform_indices = @transform_3, window_bounds = array<i64: 1, 64>}, {pipeline_mode = #tpu.pipeline_mode<synchronous>, transform_indices = @transform_4, window_bounds = array<i64: 1, 32>}, {pipeline_mode = #tpu.pipeline_mode<synchronous>, transform_indices = @transform_5, window_bounds = array<i64: 1, 32>}, {pipeline_mode = #tpu.pipeline_mode<synchronous>, transform_indices = @transform_6, window_bounds = array<i64: 64, 16>}, {pipeline_mode = #tpu.pipeline_mode<synchronous>, transform_indices = @transform_7, window_bounds = array<i64: 32, 32>}, {pipeline_mode = #tpu.pipeline_mode<synchronous>, transform_indices = @transform_8, window_bounds = array<i64: 16, 64>}, {pipeline_mode = #tpu.pipeline_mode<synchronous>, transform_indices = @transform_9, window_bounds = array<i64: 1, 64>}, {transform_indices = @transform_10, window_bounds = array<i64: 1, 8, 64>}]} {
    %c0 = arith.constant 0 : index
    %c0_0 = arith.constant 0 : index
    %c0_1 = arith.constant 0 : index
    %0 = vector.load %arg1[%c0, %c0_0, %c0_1] : memref<1x8x64xf32, #tpu.memory_space<vmem>>, vector<1x8x64xf32>
    %1 = vector.shape_cast %0 : vector<1x8x64xf32> to vector<8x64xf32>
    %c0_2 = arith.constant 0 : index
    %c0_3 = arith.constant 0 : index
    %c0_4 = arith.constant 0 : index
    %2 = vector.load %arg2[%c0_2, %c0_3, %c0_4] : memref<1x16x32xf32, #tpu.memory_space<vmem>>, vector<1x16x32xf32>
    %3 = vector.shape_cast %2 : vector<1x16x32xf32> to vector<16x32xf32>
    %c0_5 = arith.constant 0 : index
    %c0_6 = arith.constant 0 : index
    %4 = vector.load %arg3[%c0_5, %c0_6] : memref<1x64xf32, #tpu.memory_space<vmem>>, vector<1x64xf32>
    %c0_7 = arith.constant 0 : index
    %c0_8 = arith.constant 0 : index
    %5 = vector.load %arg4[%c0_7, %c0_8] : memref<1x64xf32, #tpu.memory_space<vmem>>, vector<1x64xf32>
    %cst = arith.constant dense<0.000000e+00> : vector<8xf32>
    %6 = vector.multi_reduction <add>, %1, %cst [1] : vector<8x64xf32> to vector<8xf32>
    %7 = vector.shape_cast %6 : vector<8xf32> to vector<8x1xf32>
    %cst_9 = arith.constant 6.400000e+01 : f32
    %8 = vector.broadcast %cst_9 : f32 to vector<8x1xf32>
    %9 = arith.divf %7, %8 : vector<8x1xf32>
    %10 = vector.broadcast %9 : vector<8x1xf32> to vector<8x64xf32>
    %11 = arith.subf %1, %10 : vector<8x64xf32>
    %12 = arith.mulf %11, %11 : vector<8x64xf32>
    %cst_10 = arith.constant dense<0.000000e+00> : vector<8xf32>
    %13 = vector.multi_reduction <add>, %12, %cst_10 [1] : vector<8x64xf32> to vector<8xf32>
    %14 = vector.shape_cast %13 : vector<8xf32> to vector<8x1xf32>
    %cst_11 = arith.constant 6.400000e+01 : f32
    %15 = vector.broadcast %cst_11 : f32 to vector<8x1xf32>
    %16 = arith.divf %14, %15 : vector<8x1xf32>
    %17 = vector.broadcast %9 : vector<8x1xf32> to vector<8x64xf32>
    %18 = arith.subf %1, %17 : vector<8x64xf32>
    %cst_12 = arith.constant 9.99999974E-6 : f32
    %19 = vector.broadcast %cst_12 : f32 to vector<8x1xf32>
    %20 = arith.addf %16, %19 : vector<8x1xf32>
    %21 = math.rsqrt %20 : vector<8x1xf32>
    %22 = vector.broadcast %21 : vector<8x1xf32> to vector<8x64xf32>
    %23 = arith.mulf %18, %22 : vector<8x64xf32>
    %24 = vector.broadcast %4 : vector<1x64xf32> to vector<8x64xf32>
    %25 = arith.mulf %23, %24 : vector<8x64xf32>
    %26 = vector.broadcast %5 : vector<1x64xf32> to vector<8x64xf32>
    %27 = arith.addf %25, %26 : vector<8x64xf32>
    %c0_13 = arith.constant 0 : index
    %c0_14 = arith.constant 0 : index
    %28 = vector.load %arg5[%c0_13, %c0_14] : memref<1x32xf32, #tpu.memory_space<vmem>>, vector<1x32xf32>
    %c0_15 = arith.constant 0 : index
    %c0_16 = arith.constant 0 : index
    %29 = vector.load %arg6[%c0_15, %c0_16] : memref<1x32xf32, #tpu.memory_space<vmem>>, vector<1x32xf32>
    %cst_17 = arith.constant dense<0.000000e+00> : vector<16xf32>
    %30 = vector.multi_reduction <add>, %3, %cst_17 [1] : vector<16x32xf32> to vector<16xf32>
    %31 = vector.shape_cast %30 : vector<16xf32> to vector<16x1xf32>
    %cst_18 = arith.constant 3.200000e+01 : f32
    %32 = vector.broadcast %cst_18 : f32 to vector<16x1xf32>
    %33 = arith.divf %31, %32 : vector<16x1xf32>
    %34 = vector.broadcast %33 : vector<16x1xf32> to vector<16x32xf32>
    %35 = arith.subf %3, %34 : vector<16x32xf32>
    %36 = arith.mulf %35, %35 : vector<16x32xf32>
    %cst_19 = arith.constant dense<0.000000e+00> : vector<16xf32>
    %37 = vector.multi_reduction <add>, %36, %cst_19 [1] : vector<16x32xf32> to vector<16xf32>
    %38 = vector.shape_cast %37 : vector<16xf32> to vector<16x1xf32>
    %cst_20 = arith.constant 3.200000e+01 : f32
    %39 = vector.broadcast %cst_20 : f32 to vector<16x1xf32>
    %40 = arith.divf %38, %39 : vector<16x1xf32>
    %41 = vector.broadcast %33 : vector<16x1xf32> to vector<16x32xf32>
    %42 = arith.subf %3, %41 : vector<16x32xf32>
    %cst_21 = arith.constant 9.99999974E-6 : f32
    %43 = vector.broadcast %cst_21 : f32 to vector<16x1xf32>
    %44 = arith.addf %40, %43 : vector<16x1xf32>
    %45 = math.rsqrt %44 : vector<16x1xf32>
    %46 = vector.broadcast %45 : vector<16x1xf32> to vector<16x32xf32>
    %47 = arith.mulf %42, %46 : vector<16x32xf32>
    %48 = vector.broadcast %28 : vector<1x32xf32> to vector<16x32xf32>
    %49 = arith.mulf %47, %48 : vector<16x32xf32>
    %50 = vector.broadcast %29 : vector<1x32xf32> to vector<16x32xf32>
    %51 = arith.addf %49, %50 : vector<16x32xf32>
    %52 = arith.truncf %27 : vector<8x64xf32> to vector<8x64xbf16>
    %c0_22 = arith.constant 0 : index
    %c0_23 = arith.constant 0 : index
    %53 = vector.load %arg7[%c0_22, %c0_23] : memref<64x16xbf16, #tpu.memory_space<vmem>>, vector<64x16xbf16>
    %cst_24 = arith.constant dense<0.000000e+00> : vector<8x16xf32>
    %54 = tpu.matmul %52, %53, %cst_24 {dimension_numbers = #tpu.dot_dimension_numbers<[1], [0], [0], [1], [0, 0, 1, 1], [], []>} : vector<8x64xbf16>, vector<64x16xbf16>, vector<8x16xf32> -> vector<8x16xf32>
    %cst_25 = arith.constant 2.500000e-01 : f32
    %55 = vector.broadcast %cst_25 : f32 to vector<8x16xf32>
    %56 = arith.mulf %54, %55 : vector<8x16xf32>
    %57 = arith.truncf %51 : vector<16x32xf32> to vector<16x32xbf16>
    %c0_26 = arith.constant 0 : index
    %c0_27 = arith.constant 0 : index
    %58 = vector.load %arg8[%c0_26, %c0_27] : memref<32x32xbf16, #tpu.memory_space<vmem>>, vector<32x32xbf16>
    %cst_28 = arith.constant dense<0.000000e+00> : vector<16x32xf32>
    %59 = tpu.matmul %57, %58, %cst_28 {dimension_numbers = #tpu.dot_dimension_numbers<[1], [0], [0], [1], [0, 0, 1, 1], [], []>} : vector<16x32xbf16>, vector<32x32xbf16>, vector<16x32xf32> -> vector<16x32xf32>
    %60 = vector.extract_strided_slice %59 {offsets = [0, 0], sizes = [16, 16], strides = [1, 1]} : vector<16x32xf32> to vector<16x16xf32>
    %61 = vector.extract_strided_slice %59 {offsets = [0, 16], sizes = [16, 16], strides = [1, 1]} : vector<16x32xf32> to vector<16x16xf32>
    %c0_29 = arith.constant 0 : index
    %c0_30 = arith.constant 0 : index
    %62 = vector.load %arg9[%c0_29, %c0_30] : memref<16x64xbf16, #tpu.memory_space<vmem>>, vector<16x64xbf16>
    %cst_31 = arith.constant 0.000000e+00 : f32
    %63 = vector.broadcast %cst_31 : f32 to vector<8x64xf32>
    %64 = arith.truncf %56 : vector<8x16xf32> to vector<8x16xbf16>
    %65 = arith.truncf %60 : vector<16x16xf32> to vector<16x16xbf16>
    %66 = arith.truncf %61 : vector<16x16xf32> to vector<16x16xbf16>
    %cst_32 = arith.constant dense<0.000000e+00> : vector<8x16xf32>
    %67 = tpu.matmul %64, %65, %cst_32 {dimension_numbers = #tpu.dot_dimension_numbers<[1], [1], [0], [0], [0, 0, 1, 0], [], []>} : vector<8x16xbf16>, vector<16x16xbf16>, vector<8x16xf32> -> vector<8x16xf32>
    %cst_33 = arith.constant dense<0xFF800000> : vector<8xf32>
    %68 = vector.multi_reduction <maximumf>, %67, %cst_33 [1] : vector<8x16xf32> to vector<8xf32>
    %69 = vector.shape_cast %68 : vector<8xf32> to vector<8x1xf32>
    %70 = vector.broadcast %69 : vector<8x1xf32> to vector<8x16xf32>
    %71 = arith.subf %67, %70 : vector<8x16xf32>
    %72 = math.exp %71 : vector<8x16xf32>
    %cst_34 = arith.constant dense<0.000000e+00> : vector<8xf32>
    %73 = vector.multi_reduction <add>, %72, %cst_34 [1] : vector<8x16xf32> to vector<8xf32>
    %74 = vector.shape_cast %73 : vector<8xf32> to vector<8x1xf32>
    %75 = tpu.reciprocal %74 {approx = true} : vector<8x1xf32> -> vector<8x1xf32>
    %76 = vector.broadcast %75 : vector<8x1xf32> to vector<8x16xf32>
    %77 = arith.mulf %72, %76 : vector<8x16xf32>
    %78 = arith.truncf %77 : vector<8x16xf32> to vector<8x16xbf16>
    %cst_35 = arith.constant dense<0.000000e+00> : vector<8x16xf32>
    %79 = tpu.matmul %78, %66, %cst_35 {dimension_numbers = #tpu.dot_dimension_numbers<[1], [0], [0], [1], [0, 0, 1, 1], [], []>} : vector<8x16xbf16>, vector<16x16xbf16>, vector<8x16xf32> -> vector<8x16xf32>
    %80 = arith.truncf %79 : vector<8x16xf32> to vector<8x16xbf16>
    %cst_36 = arith.constant dense<0.000000e+00> : vector<8x64xf32>
    %81 = tpu.matmul %80, %62, %cst_36 {dimension_numbers = #tpu.dot_dimension_numbers<[1], [0], [0], [1], [0, 0, 1, 1], [], []>} : vector<8x16xbf16>, vector<16x64xbf16>, vector<8x64xf32> -> vector<8x64xf32>
    %82 = arith.addf %63, %81 : vector<8x64xf32>
    %c0_37 = arith.constant 0 : index
    %c0_38 = arith.constant 0 : index
    %83 = vector.load %arg10[%c0_37, %c0_38] : memref<1x64xf32, #tpu.memory_space<vmem>>, vector<1x64xf32>
    %84 = vector.broadcast %83 : vector<1x64xf32> to vector<8x64xf32>
    %85 = arith.addf %82, %84 : vector<8x64xf32>
    %86 = arith.addf %85, %1 : vector<8x64xf32>
    %c0_39 = arith.constant 0 : index
    %c0_40 = arith.constant 0 : index
    %c0_41 = arith.constant 0 : index
    %87 = vector.load %arg11[%c0_39, %c0_40, %c0_41] : memref<1x8x64xf32, #tpu.memory_space<vmem>>, vector<1x8x64xf32>
    %88 = vector.shape_cast %87 : vector<1x8x64xf32> to vector<8x64xf32>
    %89 = vector.shape_cast %86 : vector<8x64xf32> to vector<1x8x64xf32>
    tpu.vector_store %arg11[%c0_39, %c0_40, %c0_41], %89 {strides = array<i32>} : memref<1x8x64xf32, #tpu.memory_space<vmem>>, vector<1x8x64xf32>,
    return
  }
  func.func @transform_0(%arg0: i32) -> (i32, i32, i32) {
    %c0_i32 = arith.constant 0 : i32
    %c0_i32_0 = arith.constant 0 : i32
    %c0_i32_1 = arith.constant 0 : i32
    return %arg0, %c0_i32, %c0_i32_0 : i32, i32, i32
  }
  func.func @transform_1(%arg0: i32) -> (i32, i32, i32) {
    %c0_i32 = arith.constant 0 : i32
    %c0_i32_0 = arith.constant 0 : i32
    %c0_i32_1 = arith.constant 0 : i32
    return %arg0, %c0_i32, %c0_i32_0 : i32, i32, i32
  }
  func.func @transform_2(%arg0: i32) -> (i32, i32) {
    %c0_i32 = arith.constant 0 : i32
    %c0_i32_0 = arith.constant 0 : i32
    %c0_i32_1 = arith.constant 0 : i32
    return %c0_i32, %c0_i32_0 : i32, i32
  }
  func.func @transform_3(%arg0: i32) -> (i32, i32) {
    %c0_i32 = arith.constant 0 : i32
    %c0_i32_0 = arith.constant 0 : i32
    %c0_i32_1 = arith.constant 0 : i32
    return %c0_i32, %c0_i32_0 : i32, i32
  }
  func.func @transform_4(%arg0: i32) -> (i32, i32) {
    %c0_i32 = arith.constant 0 : i32
    %c0_i32_0 = arith.constant 0 : i32
    %c0_i32_1 = arith.constant 0 : i32
    return %c0_i32, %c0_i32_0 : i32, i32
  }
  func.func @transform_5(%arg0: i32) -> (i32, i32) {
    %c0_i32 = arith.constant 0 : i32
    %c0_i32_0 = arith.constant 0 : i32
    %c0_i32_1 = arith.constant 0 : i32
    return %c0_i32, %c0_i32_0 : i32, i32
  }
  func.func @transform_6(%arg0: i32) -> (i32, i32) {
    %c0_i32 = arith.constant 0 : i32
    %c0_i32_0 = arith.constant 0 : i32
    %c0_i32_1 = arith.constant 0 : i32
    return %c0_i32, %c0_i32_0 : i32, i32
  }
  func.func @transform_7(%arg0: i32) -> (i32, i32) {
    %c0_i32 = arith.constant 0 : i32
    %c0_i32_0 = arith.constant 0 : i32
    %c0_i32_1 = arith.constant 0 : i32
    return %c0_i32, %c0_i32_0 : i32, i32
  }
  func.func @transform_8(%arg0: i32) -> (i32, i32) {
    %c0_i32 = arith.constant 0 : i32
    %c0_i32_0 = arith.constant 0 : i32
    %c0_i32_1 = arith.constant 0 : i32
    return %c0_i32, %c0_i32_0 : i32, i32
  }
  func.func @transform_9(%arg0: i32) -> (i32, i32) {
    %c0_i32 = arith.constant 0 : i32
    %c0_i32_0 = arith.constant 0 : i32
    %c0_i32_1 = arith.constant 0 : i32
    return %c0_i32, %c0_i32_0 : i32, i32
  }
  func.func @transform_10(%arg0: i32) -> (i32, i32, i32) {
    %c0_i32 = arith.constant 0 : i32
    %c0_i32_0 = arith.constant 0 : i32
    %c0_i32_1 = arith.constant 0 : i32
    return %arg0, %c0_i32, %c0_i32_0 : i32, i32, i32
  }
}

module attributes {stable_mosaic.version = 11 : i64} {
  func.func @_ff_block_kernel(%arg0: i32, %arg1: memref<1x8x64xf32, #tpu.memory_space<vmem>>, %arg2: memref<1x64xf32, #tpu.memory_space<vmem>>, %arg3: memref<1x64xf32, #tpu.memory_space<vmem>>, %arg4: memref<64x512xbf16, #tpu.memory_space<vmem>>, %arg5: memref<1x512xf32, #tpu.memory_space<vmem>>, %arg6: memref<256x64xbf16, #tpu.memory_space<vmem>>, %arg7: memref<1x64xf32, #tpu.memory_space<vmem>>, %arg8: memref<1x8x64xf32, #tpu.memory_space<vmem>>) attributes {dimension_semantics = [#tpu.dimension_semantics<parallel>], iteration_bounds = array<i64: 2>, scalar_prefetch = 0 : i64, scratch_operands = 0 : i64, tpu.core_type = #tpu.core_type<tc>, window_params = [{transform_indices = @transform_0, window_bounds = array<i64: 1, 8, 64>}, {pipeline_mode = #tpu.pipeline_mode<synchronous>, transform_indices = @transform_1, window_bounds = array<i64: 1, 64>}, {pipeline_mode = #tpu.pipeline_mode<synchronous>, transform_indices = @transform_2, window_bounds = array<i64: 1, 64>}, {pipeline_mode = #tpu.pipeline_mode<synchronous>, transform_indices = @transform_3, window_bounds = array<i64: 64, 512>}, {pipeline_mode = #tpu.pipeline_mode<synchronous>, transform_indices = @transform_4, window_bounds = array<i64: 1, 512>}, {pipeline_mode = #tpu.pipeline_mode<synchronous>, transform_indices = @transform_5, window_bounds = array<i64: 256, 64>}, {pipeline_mode = #tpu.pipeline_mode<synchronous>, transform_indices = @transform_6, window_bounds = array<i64: 1, 64>}, {transform_indices = @transform_7, window_bounds = array<i64: 1, 8, 64>}]} {
    %c0 = arith.constant 0 : index
    %c0_0 = arith.constant 0 : index
    %c0_1 = arith.constant 0 : index
    %0 = vector.load %arg1[%c0, %c0_0, %c0_1] : memref<1x8x64xf32, #tpu.memory_space<vmem>>, vector<1x8x64xf32>
    %1 = vector.shape_cast %0 : vector<1x8x64xf32> to vector<8x64xf32>
    %c0_2 = arith.constant 0 : index
    %c0_3 = arith.constant 0 : index
    %2 = vector.load %arg2[%c0_2, %c0_3] : memref<1x64xf32, #tpu.memory_space<vmem>>, vector<1x64xf32>
    %c0_4 = arith.constant 0 : index
    %c0_5 = arith.constant 0 : index
    %3 = vector.load %arg3[%c0_4, %c0_5] : memref<1x64xf32, #tpu.memory_space<vmem>>, vector<1x64xf32>
    %cst = arith.constant dense<0.000000e+00> : vector<8xf32>
    %4 = vector.multi_reduction <add>, %1, %cst [1] : vector<8x64xf32> to vector<8xf32>
    %5 = vector.shape_cast %4 : vector<8xf32> to vector<8x1xf32>
    %cst_6 = arith.constant 6.400000e+01 : f32
    %6 = vector.broadcast %cst_6 : f32 to vector<8x1xf32>
    %7 = arith.divf %5, %6 : vector<8x1xf32>
    %8 = vector.broadcast %7 : vector<8x1xf32> to vector<8x64xf32>
    %9 = arith.subf %1, %8 : vector<8x64xf32>
    %10 = arith.mulf %9, %9 : vector<8x64xf32>
    %cst_7 = arith.constant dense<0.000000e+00> : vector<8xf32>
    %11 = vector.multi_reduction <add>, %10, %cst_7 [1] : vector<8x64xf32> to vector<8xf32>
    %12 = vector.shape_cast %11 : vector<8xf32> to vector<8x1xf32>
    %cst_8 = arith.constant 6.400000e+01 : f32
    %13 = vector.broadcast %cst_8 : f32 to vector<8x1xf32>
    %14 = arith.divf %12, %13 : vector<8x1xf32>
    %15 = vector.broadcast %7 : vector<8x1xf32> to vector<8x64xf32>
    %16 = arith.subf %1, %15 : vector<8x64xf32>
    %cst_9 = arith.constant 9.99999974E-6 : f32
    %17 = vector.broadcast %cst_9 : f32 to vector<8x1xf32>
    %18 = arith.addf %14, %17 : vector<8x1xf32>
    %19 = math.rsqrt %18 : vector<8x1xf32>
    %20 = vector.broadcast %19 : vector<8x1xf32> to vector<8x64xf32>
    %21 = arith.mulf %16, %20 : vector<8x64xf32>
    %22 = vector.broadcast %2 : vector<1x64xf32> to vector<8x64xf32>
    %23 = arith.mulf %21, %22 : vector<8x64xf32>
    %24 = vector.broadcast %3 : vector<1x64xf32> to vector<8x64xf32>
    %25 = arith.addf %23, %24 : vector<8x64xf32>
    %26 = arith.truncf %25 : vector<8x64xf32> to vector<8x64xbf16>
    %c0_10 = arith.constant 0 : index
    %c0_11 = arith.constant 0 : index
    %27 = vector.load %arg4[%c0_10, %c0_11] : memref<64x512xbf16, #tpu.memory_space<vmem>>, vector<64x512xbf16>
    %cst_12 = arith.constant dense<0.000000e+00> : vector<8x512xf32>
    %28 = tpu.matmul %26, %27, %cst_12 {dimension_numbers = #tpu.dot_dimension_numbers<[1], [0], [0], [1], [0, 0, 1, 1], [], []>} : vector<8x64xbf16>, vector<64x512xbf16>, vector<8x512xf32> -> vector<8x512xf32>
    %c0_13 = arith.constant 0 : index
    %c0_14 = arith.constant 0 : index
    %29 = vector.load %arg5[%c0_13, %c0_14] : memref<1x512xf32, #tpu.memory_space<vmem>>, vector<1x512xf32>
    %30 = vector.broadcast %29 : vector<1x512xf32> to vector<8x512xf32>
    %31 = arith.addf %28, %30 : vector<8x512xf32>
    %32 = vector.extract_strided_slice %31 {offsets = [0, 0], sizes = [8, 256], strides = [1, 1]} : vector<8x512xf32> to vector<8x256xf32>
    %33 = vector.extract_strided_slice %31 {offsets = [0, 256], sizes = [8, 256], strides = [1, 1]} : vector<8x512xf32> to vector<8x256xf32>
    %cst_15 = arith.constant 5.000000e-01 : f32
    %34 = vector.broadcast %cst_15 : f32 to vector<8x256xf32>
    %35 = arith.mulf %34, %33 : vector<8x256xf32>
    %cst_16 = arith.constant 0.707106769 : f32
    %36 = vector.broadcast %cst_16 : f32 to vector<8x256xf32>
    %37 = arith.mulf %33, %36 : vector<8x256xf32>
    %38 = math.erf %37 : vector<8x256xf32>
    %cst_17 = arith.constant 1.000000e+00 : f32
    %39 = vector.broadcast %cst_17 : f32 to vector<8x256xf32>
    %40 = arith.addf %39, %38 : vector<8x256xf32>
    %41 = arith.mulf %35, %40 : vector<8x256xf32>
    %42 = arith.mulf %32, %41 : vector<8x256xf32>
    %43 = arith.truncf %42 : vector<8x256xf32> to vector<8x256xbf16>
    %c0_18 = arith.constant 0 : index
    %c0_19 = arith.constant 0 : index
    %44 = vector.load %arg6[%c0_18, %c0_19] : memref<256x64xbf16, #tpu.memory_space<vmem>>, vector<256x64xbf16>
    %cst_20 = arith.constant dense<0.000000e+00> : vector<8x64xf32>
    %45 = tpu.matmul %43, %44, %cst_20 {dimension_numbers = #tpu.dot_dimension_numbers<[1], [0], [0], [1], [0, 0, 1, 1], [], []>} : vector<8x256xbf16>, vector<256x64xbf16>, vector<8x64xf32> -> vector<8x64xf32>
    %c0_21 = arith.constant 0 : index
    %c0_22 = arith.constant 0 : index
    %46 = vector.load %arg7[%c0_21, %c0_22] : memref<1x64xf32, #tpu.memory_space<vmem>>, vector<1x64xf32>
    %47 = vector.broadcast %46 : vector<1x64xf32> to vector<8x64xf32>
    %48 = arith.addf %45, %47 : vector<8x64xf32>
    %49 = arith.addf %48, %1 : vector<8x64xf32>
    %c0_23 = arith.constant 0 : index
    %c0_24 = arith.constant 0 : index
    %c0_25 = arith.constant 0 : index
    %50 = vector.load %arg8[%c0_23, %c0_24, %c0_25] : memref<1x8x64xf32, #tpu.memory_space<vmem>>, vector<1x8x64xf32>
    %51 = vector.shape_cast %50 : vector<1x8x64xf32> to vector<8x64xf32>
    %52 = vector.shape_cast %49 : vector<8x64xf32> to vector<1x8x64xf32>
    tpu.vector_store %arg8[%c0_23, %c0_24, %c0_25], %52 {strides = array<i32>} : memref<1x8x64xf32, #tpu.memory_space<vmem>>, vector<1x8x64xf32>,
    return
  }
  func.func @transform_0(%arg0: i32) -> (i32, i32, i32) {
    %c0_i32 = arith.constant 0 : i32
    %c0_i32_0 = arith.constant 0 : i32
    %c0_i32_1 = arith.constant 0 : i32
    return %arg0, %c0_i32, %c0_i32_0 : i32, i32, i32
  }
  func.func @transform_1(%arg0: i32) -> (i32, i32) {
    %c0_i32 = arith.constant 0 : i32
    %c0_i32_0 = arith.constant 0 : i32
    %c0_i32_1 = arith.constant 0 : i32
    return %c0_i32, %c0_i32_0 : i32, i32
  }
  func.func @transform_2(%arg0: i32) -> (i32, i32) {
    %c0_i32 = arith.constant 0 : i32
    %c0_i32_0 = arith.constant 0 : i32
    %c0_i32_1 = arith.constant 0 : i32
    return %c0_i32, %c0_i32_0 : i32, i32
  }
  func.func @transform_3(%arg0: i32) -> (i32, i32) {
    %c0_i32 = arith.constant 0 : i32
    %c0_i32_0 = arith.constant 0 : i32
    %c0_i32_1 = arith.constant 0 : i32
    return %c0_i32, %c0_i32_0 : i32, i32
  }
  func.func @transform_4(%arg0: i32) -> (i32, i32) {
    %c0_i32 = arith.constant 0 : i32
    %c0_i32_0 = arith.constant 0 : i32
    %c0_i32_1 = arith.constant 0 : i32
    return %c0_i32, %c0_i32_0 : i32, i32
  }
  func.func @transform_5(%arg0: i32) -> (i32, i32) {
    %c0_i32 = arith.constant 0 : i32
    %c0_i32_0 = arith.constant 0 : i32
    %c0_i32_1 = arith.constant 0 : i32
    return %c0_i32, %c0_i32_0 : i32, i32
  }
  func.func @transform_6(%arg0: i32) -> (i32, i32) {
    %c0_i32 = arith.constant 0 : i32
    %c0_i32_0 = arith.constant 0 : i32
    %c0_i32_1 = arith.constant 0 : i32
    return %c0_i32, %c0_i32_0 : i32, i32
  }
  func.func @transform_7(%arg0: i32) -> (i32, i32, i32) {
    %c0_i32 = arith.constant 0 : i32
    %c0_i32_0 = arith.constant 0 : i32
    %c0_i32_1 = arith.constant 0 : i32
    return %arg0, %c0_i32, %c0_i32_0 : i32, i32, i32
  }
}

module attributes {stable_mosaic.version = 11 : i64} {
  func.func @kernel(%arg0: i32, %arg1: memref<1x8x64xf32, #tpu.memory_space<vmem>>, %arg2: memref<1x64xf32, #tpu.memory_space<vmem>>, %arg3: memref<1x64xf32, #tpu.memory_space<vmem>>, %arg4: memref<64x192xbf16, #tpu.memory_space<vmem>>, %arg5: memref<64x64xbf16, #tpu.memory_space<vmem>>, %arg6: memref<1x64xf32, #tpu.memory_space<vmem>>, %arg7: memref<1x8x64xf32, #tpu.memory_space<vmem>>) attributes {dimension_semantics = [#tpu.dimension_semantics<parallel>], iteration_bounds = array<i64: 2>, scalar_prefetch = 0 : i64, scratch_operands = 0 : i64, tpu.core_type = #tpu.core_type<tc>, window_params = [{transform_indices = @transform_0, window_bounds = array<i64: 1, 8, 64>}, {pipeline_mode = #tpu.pipeline_mode<synchronous>, transform_indices = @transform_1, window_bounds = array<i64: 1, 64>}, {pipeline_mode = #tpu.pipeline_mode<synchronous>, transform_indices = @transform_2, window_bounds = array<i64: 1, 64>}, {pipeline_mode = #tpu.pipeline_mode<synchronous>, transform_indices = @transform_3, window_bounds = array<i64: 64, 192>}, {pipeline_mode = #tpu.pipeline_mode<synchronous>, transform_indices = @transform_4, window_bounds = array<i64: 64, 64>}, {pipeline_mode = #tpu.pipeline_mode<synchronous>, transform_indices = @transform_5, window_bounds = array<i64: 1, 64>}, {transform_indices = @transform_6, window_bounds = array<i64: 1, 8, 64>}]} {
    %c0 = arith.constant 0 : index
    %c0_0 = arith.constant 0 : index
    %c0_1 = arith.constant 0 : index
    %0 = vector.load %arg1[%c0, %c0_0, %c0_1] : memref<1x8x64xf32, #tpu.memory_space<vmem>>, vector<1x8x64xf32>
    %1 = vector.shape_cast %0 : vector<1x8x64xf32> to vector<8x64xf32>
    %c0_2 = arith.constant 0 : index
    %c0_3 = arith.constant 0 : index
    %2 = vector.load %arg2[%c0_2, %c0_3] : memref<1x64xf32, #tpu.memory_space<vmem>>, vector<1x64xf32>
    %c0_4 = arith.constant 0 : index
    %c0_5 = arith.constant 0 : index
    %3 = vector.load %arg3[%c0_4, %c0_5] : memref<1x64xf32, #tpu.memory_space<vmem>>, vector<1x64xf32>
    %cst = arith.constant dense<0.000000e+00> : vector<8xf32>
    %4 = vector.multi_reduction <add>, %1, %cst [1] : vector<8x64xf32> to vector<8xf32>
    %5 = vector.shape_cast %4 : vector<8xf32> to vector<8x1xf32>
    %cst_6 = arith.constant 6.400000e+01 : f32
    %6 = vector.broadcast %cst_6 : f32 to vector<8x1xf32>
    %7 = arith.divf %5, %6 : vector<8x1xf32>
    %8 = vector.broadcast %7 : vector<8x1xf32> to vector<8x64xf32>
    %9 = arith.subf %1, %8 : vector<8x64xf32>
    %10 = arith.mulf %9, %9 : vector<8x64xf32>
    %cst_7 = arith.constant dense<0.000000e+00> : vector<8xf32>
    %11 = vector.multi_reduction <add>, %10, %cst_7 [1] : vector<8x64xf32> to vector<8xf32>
    %12 = vector.shape_cast %11 : vector<8xf32> to vector<8x1xf32>
    %cst_8 = arith.constant 6.400000e+01 : f32
    %13 = vector.broadcast %cst_8 : f32 to vector<8x1xf32>
    %14 = arith.divf %12, %13 : vector<8x1xf32>
    %15 = vector.broadcast %7 : vector<8x1xf32> to vector<8x64xf32>
    %16 = arith.subf %1, %15 : vector<8x64xf32>
    %cst_9 = arith.constant 9.99999974E-6 : f32
    %17 = vector.broadcast %cst_9 : f32 to vector<8x1xf32>
    %18 = arith.addf %14, %17 : vector<8x1xf32>
    %19 = math.rsqrt %18 : vector<8x1xf32>
    %20 = vector.broadcast %19 : vector<8x1xf32> to vector<8x64xf32>
    %21 = arith.mulf %16, %20 : vector<8x64xf32>
    %22 = vector.broadcast %2 : vector<1x64xf32> to vector<8x64xf32>
    %23 = arith.mulf %21, %22 : vector<8x64xf32>
    %24 = vector.broadcast %3 : vector<1x64xf32> to vector<8x64xf32>
    %25 = arith.addf %23, %24 : vector<8x64xf32>
    %26 = arith.truncf %25 : vector<8x64xf32> to vector<8x64xbf16>
    %c0_10 = arith.constant 0 : index
    %c0_11 = arith.constant 0 : index
    %27 = vector.load %arg4[%c0_10, %c0_11] : memref<64x192xbf16, #tpu.memory_space<vmem>>, vector<64x192xbf16>
    %cst_12 = arith.constant dense<0.000000e+00> : vector<8x192xf32>
    %28 = tpu.matmul %26, %27, %cst_12 {dimension_numbers = #tpu.dot_dimension_numbers<[1], [0], [0], [1], [0, 0, 1, 1], [], []>} : vector<8x64xbf16>, vector<64x192xbf16>, vector<8x192xf32> -> vector<8x192xf32>
    %29 = vector.extract_strided_slice %28 {offsets = [0, 0], sizes = [8, 64], strides = [1, 1]} : vector<8x192xf32> to vector<8x64xf32>
    %cst_13 = arith.constant 2.500000e-01 : f32
    %30 = vector.broadcast %cst_13 : f32 to vector<8x64xf32>
    %31 = arith.mulf %29, %30 : vector<8x64xf32>
    %32 = vector.extract_strided_slice %28 {offsets = [0, 64], sizes = [8, 64], strides = [1, 1]} : vector<8x192xf32> to vector<8x64xf32>
    %33 = vector.extract_strided_slice %28 {offsets = [0, 128], sizes = [8, 64], strides = [1, 1]} : vector<8x192xf32> to vector<8x64xf32>
    %c0_14 = arith.constant 0 : index
    %c0_15 = arith.constant 0 : index
    %34 = vector.load %arg5[%c0_14, %c0_15] : memref<64x64xbf16, #tpu.memory_space<vmem>>, vector<64x64xbf16>
    %cst_16 = arith.constant 0.000000e+00 : f32
    %35 = vector.broadcast %cst_16 : f32 to vector<8x64xf32>
    %36 = vector.extract_strided_slice %31 {offsets = [0, 0], sizes = [8, 16], strides = [1, 1]} : vector<8x64xf32> to vector<8x16xf32>
    %37 = arith.truncf %36 : vector<8x16xf32> to vector<8x16xbf16>
    %38 = vector.extract_strided_slice %32 {offsets = [0, 0], sizes = [8, 16], strides = [1, 1]} : vector<8x64xf32> to vector<8x16xf32>
    %39 = arith.truncf %38 : vector<8x16xf32> to vector<8x16xbf16>
    %40 = vector.extract_strided_slice %33 {offsets = [0, 0], sizes = [8, 16], strides = [1, 1]} : vector<8x64xf32> to vector<8x16xf32>
    %41 = arith.truncf %40 : vector<8x16xf32> to vector<8x16xbf16>
    %cst_17 = arith.constant dense<0.000000e+00> : vector<8x8xf32>
    %42 = tpu.matmul %37, %39, %cst_17 {dimension_numbers = #tpu.dot_dimension_numbers<[1], [1], [0], [0], [0, 0, 1, 0], [], []>} : vector<8x16xbf16>, vector<8x16xbf16>, vector<8x8xf32> -> vector<8x8xf32>
    %cst_18 = arith.constant dense<0xFF800000> : vector<8xf32>
    %43 = vector.multi_reduction <maximumf>, %42, %cst_18 [1] : vector<8x8xf32> to vector<8xf32>
    %44 = vector.shape_cast %43 : vector<8xf32> to vector<8x1xf32>
    %45 = vector.broadcast %44 : vector<8x1xf32> to vector<8x8xf32>
    %46 = arith.subf %42, %45 : vector<8x8xf32>
    %47 = math.exp %46 : vector<8x8xf32>
    %cst_19 = arith.constant dense<0.000000e+00> : vector<8xf32>
    %48 = vector.multi_reduction <add>, %47, %cst_19 [1] : vector<8x8xf32> to vector<8xf32>
    %49 = vector.shape_cast %48 : vector<8xf32> to vector<8x1xf32>
    %50 = tpu.reciprocal %49 {approx = true} : vector<8x1xf32> -> vector<8x1xf32>
    %51 = vector.broadcast %50 : vector<8x1xf32> to vector<8x8xf32>
    %52 = arith.mulf %47, %51 : vector<8x8xf32>
    %53 = arith.truncf %52 : vector<8x8xf32> to vector<8x8xbf16>
    %cst_20 = arith.constant dense<0.000000e+00> : vector<8x16xf32>
    %54 = tpu.matmul %53, %41, %cst_20 {dimension_numbers = #tpu.dot_dimension_numbers<[1], [0], [0], [1], [0, 0, 1, 1], [], []>} : vector<8x8xbf16>, vector<8x16xbf16>, vector<8x16xf32> -> vector<8x16xf32>
    %55 = arith.truncf %54 : vector<8x16xf32> to vector<8x16xbf16>
    %56 = vector.extract_strided_slice %34 {offsets = [0, 0], sizes = [16, 64], strides = [1, 1]} : vector<64x64xbf16> to vector<16x64xbf16>
    %cst_21 = arith.constant dense<0.000000e+00> : vector<8x64xf32>
    %57 = tpu.matmul %55, %56, %cst_21 {dimension_numbers = #tpu.dot_dimension_numbers<[1], [0], [0], [1], [0, 0, 1, 1], [], []>} : vector<8x16xbf16>, vector<16x64xbf16>, vector<8x64xf32> -> vector<8x64xf32>
    %58 = arith.addf %35, %57 : vector<8x64xf32>
    %59 = vector.extract_strided_slice %31 {offsets = [0, 16], sizes = [8, 16], strides = [1, 1]} : vector<8x64xf32> to vector<8x16xf32>
    %60 = arith.truncf %59 : vector<8x16xf32> to vector<8x16xbf16>
    %61 = vector.extract_strided_slice %32 {offsets = [0, 16], sizes = [8, 16], strides = [1, 1]} : vector<8x64xf32> to vector<8x16xf32>
    %62 = arith.truncf %61 : vector<8x16xf32> to vector<8x16xbf16>
    %63 = vector.extract_strided_slice %33 {offsets = [0, 16], sizes = [8, 16], strides = [1, 1]} : vector<8x64xf32> to vector<8x16xf32>
    %64 = arith.truncf %63 : vector<8x16xf32> to vector<8x16xbf16>
    %cst_22 = arith.constant dense<0.000000e+00> : vector<8x8xf32>
    %65 = tpu.matmul %60, %62, %cst_22 {dimension_numbers = #tpu.dot_dimension_numbers<[1], [1], [0], [0], [0, 0, 1, 0], [], []>} : vector<8x16xbf16>, vector<8x16xbf16>, vector<8x8xf32> -> vector<8x8xf32>
    %cst_23 = arith.constant dense<0xFF800000> : vector<8xf32>
    %66 = vector.multi_reduction <maximumf>, %65, %cst_23 [1] : vector<8x8xf32> to vector<8xf32>
    %67 = vector.shape_cast %66 : vector<8xf32> to vector<8x1xf32>
    %68 = vector.broadcast %67 : vector<8x1xf32> to vector<8x8xf32>
    %69 = arith.subf %65, %68 : vector<8x8xf32>
    %70 = math.exp %69 : vector<8x8xf32>
    %cst_24 = arith.constant dense<0.000000e+00> : vector<8xf32>
    %71 = vector.multi_reduction <add>, %70, %cst_24 [1] : vector<8x8xf32> to vector<8xf32>
    %72 = vector.shape_cast %71 : vector<8xf32> to vector<8x1xf32>
    %73 = tpu.reciprocal %72 {approx = true} : vector<8x1xf32> -> vector<8x1xf32>
    %74 = vector.broadcast %73 : vector<8x1xf32> to vector<8x8xf32>
    %75 = arith.mulf %70, %74 : vector<8x8xf32>
    %76 = arith.truncf %75 : vector<8x8xf32> to vector<8x8xbf16>
    %cst_25 = arith.constant dense<0.000000e+00> : vector<8x16xf32>
    %77 = tpu.matmul %76, %64, %cst_25 {dimension_numbers = #tpu.dot_dimension_numbers<[1], [0], [0], [1], [0, 0, 1, 1], [], []>} : vector<8x8xbf16>, vector<8x16xbf16>, vector<8x16xf32> -> vector<8x16xf32>
    %78 = arith.truncf %77 : vector<8x16xf32> to vector<8x16xbf16>
    %79 = vector.extract_strided_slice %34 {offsets = [16, 0], sizes = [16, 64], strides = [1, 1]} : vector<64x64xbf16> to vector<16x64xbf16>
    %cst_26 = arith.constant dense<0.000000e+00> : vector<8x64xf32>
    %80 = tpu.matmul %78, %79, %cst_26 {dimension_numbers = #tpu.dot_dimension_numbers<[1], [0], [0], [1], [0, 0, 1, 1], [], []>} : vector<8x16xbf16>, vector<16x64xbf16>, vector<8x64xf32> -> vector<8x64xf32>
    %81 = arith.addf %58, %80 : vector<8x64xf32>
    %82 = vector.extract_strided_slice %31 {offsets = [0, 32], sizes = [8, 16], strides = [1, 1]} : vector<8x64xf32> to vector<8x16xf32>
    %83 = arith.truncf %82 : vector<8x16xf32> to vector<8x16xbf16>
    %84 = vector.extract_strided_slice %32 {offsets = [0, 32], sizes = [8, 16], strides = [1, 1]} : vector<8x64xf32> to vector<8x16xf32>
    %85 = arith.truncf %84 : vector<8x16xf32> to vector<8x16xbf16>
    %86 = vector.extract_strided_slice %33 {offsets = [0, 32], sizes = [8, 16], strides = [1, 1]} : vector<8x64xf32> to vector<8x16xf32>
    %87 = arith.truncf %86 : vector<8x16xf32> to vector<8x16xbf16>
    %cst_27 = arith.constant dense<0.000000e+00> : vector<8x8xf32>
    %88 = tpu.matmul %83, %85, %cst_27 {dimension_numbers = #tpu.dot_dimension_numbers<[1], [1], [0], [0], [0, 0, 1, 0], [], []>} : vector<8x16xbf16>, vector<8x16xbf16>, vector<8x8xf32> -> vector<8x8xf32>
    %cst_28 = arith.constant dense<0xFF800000> : vector<8xf32>
    %89 = vector.multi_reduction <maximumf>, %88, %cst_28 [1] : vector<8x8xf32> to vector<8xf32>
    %90 = vector.shape_cast %89 : vector<8xf32> to vector<8x1xf32>
    %91 = vector.broadcast %90 : vector<8x1xf32> to vector<8x8xf32>
    %92 = arith.subf %88, %91 : vector<8x8xf32>
    %93 = math.exp %92 : vector<8x8xf32>
    %cst_29 = arith.constant dense<0.000000e+00> : vector<8xf32>
    %94 = vector.multi_reduction <add>, %93, %cst_29 [1] : vector<8x8xf32> to vector<8xf32>
    %95 = vector.shape_cast %94 : vector<8xf32> to vector<8x1xf32>
    %96 = tpu.reciprocal %95 {approx = true} : vector<8x1xf32> -> vector<8x1xf32>
    %97 = vector.broadcast %96 : vector<8x1xf32> to vector<8x8xf32>
    %98 = arith.mulf %93, %97 : vector<8x8xf32>
    %99 = arith.truncf %98 : vector<8x8xf32> to vector<8x8xbf16>
    %cst_30 = arith.constant dense<0.000000e+00> : vector<8x16xf32>
    %100 = tpu.matmul %99, %87, %cst_30 {dimension_numbers = #tpu.dot_dimension_numbers<[1], [0], [0], [1], [0, 0, 1, 1], [], []>} : vector<8x8xbf16>, vector<8x16xbf16>, vector<8x16xf32> -> vector<8x16xf32>
    %101 = arith.truncf %100 : vector<8x16xf32> to vector<8x16xbf16>
    %102 = vector.extract_strided_slice %34 {offsets = [32, 0], sizes = [16, 64], strides = [1, 1]} : vector<64x64xbf16> to vector<16x64xbf16>
    %cst_31 = arith.constant dense<0.000000e+00> : vector<8x64xf32>
    %103 = tpu.matmul %101, %102, %cst_31 {dimension_numbers = #tpu.dot_dimension_numbers<[1], [0], [0], [1], [0, 0, 1, 1], [], []>} : vector<8x16xbf16>, vector<16x64xbf16>, vector<8x64xf32> -> vector<8x64xf32>
    %104 = arith.addf %81, %103 : vector<8x64xf32>
    %105 = vector.extract_strided_slice %31 {offsets = [0, 48], sizes = [8, 16], strides = [1, 1]} : vector<8x64xf32> to vector<8x16xf32>
    %106 = arith.truncf %105 : vector<8x16xf32> to vector<8x16xbf16>
    %107 = vector.extract_strided_slice %32 {offsets = [0, 48], sizes = [8, 16], strides = [1, 1]} : vector<8x64xf32> to vector<8x16xf32>
    %108 = arith.truncf %107 : vector<8x16xf32> to vector<8x16xbf16>
    %109 = vector.extract_strided_slice %33 {offsets = [0, 48], sizes = [8, 16], strides = [1, 1]} : vector<8x64xf32> to vector<8x16xf32>
    %110 = arith.truncf %109 : vector<8x16xf32> to vector<8x16xbf16>
    %cst_32 = arith.constant dense<0.000000e+00> : vector<8x8xf32>
    %111 = tpu.matmul %106, %108, %cst_32 {dimension_numbers = #tpu.dot_dimension_numbers<[1], [1], [0], [0], [0, 0, 1, 0], [], []>} : vector<8x16xbf16>, vector<8x16xbf16>, vector<8x8xf32> -> vector<8x8xf32>
    %cst_33 = arith.constant dense<0xFF800000> : vector<8xf32>
    %112 = vector.multi_reduction <maximumf>, %111, %cst_33 [1] : vector<8x8xf32> to vector<8xf32>
    %113 = vector.shape_cast %112 : vector<8xf32> to vector<8x1xf32>
    %114 = vector.broadcast %113 : vector<8x1xf32> to vector<8x8xf32>
    %115 = arith.subf %111, %114 : vector<8x8xf32>
    %116 = math.exp %115 : vector<8x8xf32>
    %cst_34 = arith.constant dense<0.000000e+00> : vector<8xf32>
    %117 = vector.multi_reduction <add>, %116, %cst_34 [1] : vector<8x8xf32> to vector<8xf32>
    %118 = vector.shape_cast %117 : vector<8xf32> to vector<8x1xf32>
    %119 = tpu.reciprocal %118 {approx = true} : vector<8x1xf32> -> vector<8x1xf32>
    %120 = vector.broadcast %119 : vector<8x1xf32> to vector<8x8xf32>
    %121 = arith.mulf %116, %120 : vector<8x8xf32>
    %122 = arith.truncf %121 : vector<8x8xf32> to vector<8x8xbf16>
    %cst_35 = arith.constant dense<0.000000e+00> : vector<8x16xf32>
    %123 = tpu.matmul %122, %110, %cst_35 {dimension_numbers = #tpu.dot_dimension_numbers<[1], [0], [0], [1], [0, 0, 1, 1], [], []>} : vector<8x8xbf16>, vector<8x16xbf16>, vector<8x16xf32> -> vector<8x16xf32>
    %124 = arith.truncf %123 : vector<8x16xf32> to vector<8x16xbf16>
    %125 = vector.extract_strided_slice %34 {offsets = [48, 0], sizes = [16, 64], strides = [1, 1]} : vector<64x64xbf16> to vector<16x64xbf16>
    %cst_36 = arith.constant dense<0.000000e+00> : vector<8x64xf32>
    %126 = tpu.matmul %124, %125, %cst_36 {dimension_numbers = #tpu.dot_dimension_numbers<[1], [0], [0], [1], [0, 0, 1, 1], [], []>} : vector<8x16xbf16>, vector<16x64xbf16>, vector<8x64xf32> -> vector<8x64xf32>
    %127 = arith.addf %104, %126 : vector<8x64xf32>
    %c0_37 = arith.constant 0 : index
    %c0_38 = arith.constant 0 : index
    %128 = vector.load %arg6[%c0_37, %c0_38] : memref<1x64xf32, #tpu.memory_space<vmem>>, vector<1x64xf32>
    %129 = vector.broadcast %128 : vector<1x64xf32> to vector<8x64xf32>
    %130 = arith.addf %127, %129 : vector<8x64xf32>
    %131 = arith.addf %130, %1 : vector<8x64xf32>
    %c0_39 = arith.constant 0 : index
    %c0_40 = arith.constant 0 : index
    %c0_41 = arith.constant 0 : index
    %132 = vector.load %arg7[%c0_39, %c0_40, %c0_41] : memref<1x8x64xf32, #tpu.memory_space<vmem>>, vector<1x8x64xf32>
    %133 = vector.shape_cast %132 : vector<1x8x64xf32> to vector<8x64xf32>
    %134 = vector.shape_cast %131 : vector<8x64xf32> to vector<1x8x64xf32>
    tpu.vector_store %arg7[%c0_39, %c0_40, %c0_41], %134 {strides = array<i32>} : memref<1x8x64xf32, #tpu.memory_space<vmem>>, vector<1x8x64xf32>,
    return
  }
  func.func @transform_0(%arg0: i32) -> (i32, i32, i32) {
    %c0_i32 = arith.constant 0 : i32
    %c0_i32_0 = arith.constant 0 : i32
    %c0_i32_1 = arith.constant 0 : i32
    return %arg0, %c0_i32, %c0_i32_0 : i32, i32, i32
  }
  func.func @transform_1(%arg0: i32) -> (i32, i32) {
    %c0_i32 = arith.constant 0 : i32
    %c0_i32_0 = arith.constant 0 : i32
    %c0_i32_1 = arith.constant 0 : i32
    return %c0_i32, %c0_i32_0 : i32, i32
  }
  func.func @transform_2(%arg0: i32) -> (i32, i32) {
    %c0_i32 = arith.constant 0 : i32
    %c0_i32_0 = arith.constant 0 : i32
    %c0_i32_1 = arith.constant 0 : i32
    return %c0_i32, %c0_i32_0 : i32, i32
  }
  func.func @transform_3(%arg0: i32) -> (i32, i32) {
    %c0_i32 = arith.constant 0 : i32
    %c0_i32_0 = arith.constant 0 : i32
    %c0_i32_1 = arith.constant 0 : i32
    return %c0_i32, %c0_i32_0 : i32, i32
  }
  func.func @transform_4(%arg0: i32) -> (i32, i32) {
    %c0_i32 = arith.constant 0 : i32
    %c0_i32_0 = arith.constant 0 : i32
    %c0_i32_1 = arith.constant 0 : i32
    return %c0_i32, %c0_i32_0 : i32, i32
  }
  func.func @transform_5(%arg0: i32) -> (i32, i32) {
    %c0_i32 = arith.constant 0 : i32
    %c0_i32_0 = arith.constant 0 : i32
    %c0_i32_1 = arith.constant 0 : i32
    return %c0_i32, %c0_i32_0 : i32, i32
  }
  func.func @transform_6(%arg0: i32) -> (i32, i32, i32) {
    %c0_i32 = arith.constant 0 : i32
    %c0_i32_0 = arith.constant 0 : i32
    %c0_i32_1 = arith.constant 0 : i32
    return %arg0, %c0_i32, %c0_i32_0 : i32, i32, i32
  }
}

module attributes {stable_mosaic.version = 11 : i64} {
  func.func @_ff_block_kernel(%arg0: i32, %arg1: memref<1x8x64xf32, #tpu.memory_space<vmem>>, %arg2: memref<1x64xf32, #tpu.memory_space<vmem>>, %arg3: memref<1x64xf32, #tpu.memory_space<vmem>>, %arg4: memref<64x512xbf16, #tpu.memory_space<vmem>>, %arg5: memref<1x512xf32, #tpu.memory_space<vmem>>, %arg6: memref<256x64xbf16, #tpu.memory_space<vmem>>, %arg7: memref<1x64xf32, #tpu.memory_space<vmem>>, %arg8: memref<1x8x64xf32, #tpu.memory_space<vmem>>) attributes {dimension_semantics = [#tpu.dimension_semantics<parallel>], iteration_bounds = array<i64: 2>, scalar_prefetch = 0 : i64, scratch_operands = 0 : i64, tpu.core_type = #tpu.core_type<tc>, window_params = [{transform_indices = @transform_0, window_bounds = array<i64: 1, 8, 64>}, {pipeline_mode = #tpu.pipeline_mode<synchronous>, transform_indices = @transform_1, window_bounds = array<i64: 1, 64>}, {pipeline_mode = #tpu.pipeline_mode<synchronous>, transform_indices = @transform_2, window_bounds = array<i64: 1, 64>}, {pipeline_mode = #tpu.pipeline_mode<synchronous>, transform_indices = @transform_3, window_bounds = array<i64: 64, 512>}, {pipeline_mode = #tpu.pipeline_mode<synchronous>, transform_indices = @transform_4, window_bounds = array<i64: 1, 512>}, {pipeline_mode = #tpu.pipeline_mode<synchronous>, transform_indices = @transform_5, window_bounds = array<i64: 256, 64>}, {pipeline_mode = #tpu.pipeline_mode<synchronous>, transform_indices = @transform_6, window_bounds = array<i64: 1, 64>}, {transform_indices = @transform_7, window_bounds = array<i64: 1, 8, 64>}]} {
    %c0 = arith.constant 0 : index
    %c0_0 = arith.constant 0 : index
    %c0_1 = arith.constant 0 : index
    %0 = vector.load %arg1[%c0, %c0_0, %c0_1] : memref<1x8x64xf32, #tpu.memory_space<vmem>>, vector<1x8x64xf32>
    %1 = vector.shape_cast %0 : vector<1x8x64xf32> to vector<8x64xf32>
    %c0_2 = arith.constant 0 : index
    %c0_3 = arith.constant 0 : index
    %2 = vector.load %arg2[%c0_2, %c0_3] : memref<1x64xf32, #tpu.memory_space<vmem>>, vector<1x64xf32>
    %c0_4 = arith.constant 0 : index
    %c0_5 = arith.constant 0 : index
    %3 = vector.load %arg3[%c0_4, %c0_5] : memref<1x64xf32, #tpu.memory_space<vmem>>, vector<1x64xf32>
    %cst = arith.constant dense<0.000000e+00> : vector<8xf32>
    %4 = vector.multi_reduction <add>, %1, %cst [1] : vector<8x64xf32> to vector<8xf32>
    %5 = vector.shape_cast %4 : vector<8xf32> to vector<8x1xf32>
    %cst_6 = arith.constant 6.400000e+01 : f32
    %6 = vector.broadcast %cst_6 : f32 to vector<8x1xf32>
    %7 = arith.divf %5, %6 : vector<8x1xf32>
    %8 = vector.broadcast %7 : vector<8x1xf32> to vector<8x64xf32>
    %9 = arith.subf %1, %8 : vector<8x64xf32>
    %10 = arith.mulf %9, %9 : vector<8x64xf32>
    %cst_7 = arith.constant dense<0.000000e+00> : vector<8xf32>
    %11 = vector.multi_reduction <add>, %10, %cst_7 [1] : vector<8x64xf32> to vector<8xf32>
    %12 = vector.shape_cast %11 : vector<8xf32> to vector<8x1xf32>
    %cst_8 = arith.constant 6.400000e+01 : f32
    %13 = vector.broadcast %cst_8 : f32 to vector<8x1xf32>
    %14 = arith.divf %12, %13 : vector<8x1xf32>
    %15 = vector.broadcast %7 : vector<8x1xf32> to vector<8x64xf32>
    %16 = arith.subf %1, %15 : vector<8x64xf32>
    %cst_9 = arith.constant 9.99999974E-6 : f32
    %17 = vector.broadcast %cst_9 : f32 to vector<8x1xf32>
    %18 = arith.addf %14, %17 : vector<8x1xf32>
    %19 = math.rsqrt %18 : vector<8x1xf32>
    %20 = vector.broadcast %19 : vector<8x1xf32> to vector<8x64xf32>
    %21 = arith.mulf %16, %20 : vector<8x64xf32>
    %22 = vector.broadcast %2 : vector<1x64xf32> to vector<8x64xf32>
    %23 = arith.mulf %21, %22 : vector<8x64xf32>
    %24 = vector.broadcast %3 : vector<1x64xf32> to vector<8x64xf32>
    %25 = arith.addf %23, %24 : vector<8x64xf32>
    %26 = arith.truncf %25 : vector<8x64xf32> to vector<8x64xbf16>
    %c0_10 = arith.constant 0 : index
    %c0_11 = arith.constant 0 : index
    %27 = vector.load %arg4[%c0_10, %c0_11] : memref<64x512xbf16, #tpu.memory_space<vmem>>, vector<64x512xbf16>
    %cst_12 = arith.constant dense<0.000000e+00> : vector<8x512xf32>
    %28 = tpu.matmul %26, %27, %cst_12 {dimension_numbers = #tpu.dot_dimension_numbers<[1], [0], [0], [1], [0, 0, 1, 1], [], []>} : vector<8x64xbf16>, vector<64x512xbf16>, vector<8x512xf32> -> vector<8x512xf32>
    %c0_13 = arith.constant 0 : index
    %c0_14 = arith.constant 0 : index
    %29 = vector.load %arg5[%c0_13, %c0_14] : memref<1x512xf32, #tpu.memory_space<vmem>>, vector<1x512xf32>
    %30 = vector.broadcast %29 : vector<1x512xf32> to vector<8x512xf32>
    %31 = arith.addf %28, %30 : vector<8x512xf32>
    %32 = vector.extract_strided_slice %31 {offsets = [0, 0], sizes = [8, 256], strides = [1, 1]} : vector<8x512xf32> to vector<8x256xf32>
    %33 = vector.extract_strided_slice %31 {offsets = [0, 256], sizes = [8, 256], strides = [1, 1]} : vector<8x512xf32> to vector<8x256xf32>
    %cst_15 = arith.constant 5.000000e-01 : f32
    %34 = vector.broadcast %cst_15 : f32 to vector<8x256xf32>
    %35 = arith.mulf %34, %33 : vector<8x256xf32>
    %cst_16 = arith.constant 0.707106769 : f32
    %36 = vector.broadcast %cst_16 : f32 to vector<8x256xf32>
    %37 = arith.mulf %33, %36 : vector<8x256xf32>
    %38 = math.erf %37 : vector<8x256xf32>
    %cst_17 = arith.constant 1.000000e+00 : f32
    %39 = vector.broadcast %cst_17 : f32 to vector<8x256xf32>
    %40 = arith.addf %39, %38 : vector<8x256xf32>
    %41 = arith.mulf %35, %40 : vector<8x256xf32>
    %42 = arith.mulf %32, %41 : vector<8x256xf32>
    %43 = arith.truncf %42 : vector<8x256xf32> to vector<8x256xbf16>
    %c0_18 = arith.constant 0 : index
    %c0_19 = arith.constant 0 : index
    %44 = vector.load %arg6[%c0_18, %c0_19] : memref<256x64xbf16, #tpu.memory_space<vmem>>, vector<256x64xbf16>
    %cst_20 = arith.constant dense<0.000000e+00> : vector<8x64xf32>
    %45 = tpu.matmul %43, %44, %cst_20 {dimension_numbers = #tpu.dot_dimension_numbers<[1], [0], [0], [1], [0, 0, 1, 1], [], []>} : vector<8x256xbf16>, vector<256x64xbf16>, vector<8x64xf32> -> vector<8x64xf32>
    %c0_21 = arith.constant 0 : index
    %c0_22 = arith.constant 0 : index
    %46 = vector.load %arg7[%c0_21, %c0_22] : memref<1x64xf32, #tpu.memory_space<vmem>>, vector<1x64xf32>
    %47 = vector.broadcast %46 : vector<1x64xf32> to vector<8x64xf32>
    %48 = arith.addf %45, %47 : vector<8x64xf32>
    %49 = arith.addf %48, %1 : vector<8x64xf32>
    %c0_23 = arith.constant 0 : index
    %c0_24 = arith.constant 0 : index
    %c0_25 = arith.constant 0 : index
    %50 = vector.load %arg8[%c0_23, %c0_24, %c0_25] : memref<1x8x64xf32, #tpu.memory_space<vmem>>, vector<1x8x64xf32>
    %51 = vector.shape_cast %50 : vector<1x8x64xf32> to vector<8x64xf32>
    %52 = vector.shape_cast %49 : vector<8x64xf32> to vector<1x8x64xf32>
    tpu.vector_store %arg8[%c0_23, %c0_24, %c0_25], %52 {strides = array<i32>} : memref<1x8x64xf32, #tpu.memory_space<vmem>>, vector<1x8x64xf32>,
    return
  }
  func.func @transform_0(%arg0: i32) -> (i32, i32, i32) {
    %c0_i32 = arith.constant 0 : i32
    %c0_i32_0 = arith.constant 0 : i32
    %c0_i32_1 = arith.constant 0 : i32
    return %arg0, %c0_i32, %c0_i32_0 : i32, i32, i32
  }
  func.func @transform_1(%arg0: i32) -> (i32, i32) {
    %c0_i32 = arith.constant 0 : i32
    %c0_i32_0 = arith.constant 0 : i32
    %c0_i32_1 = arith.constant 0 : i32
    return %c0_i32, %c0_i32_0 : i32, i32
  }
  func.func @transform_2(%arg0: i32) -> (i32, i32) {
    %c0_i32 = arith.constant 0 : i32
    %c0_i32_0 = arith.constant 0 : i32
    %c0_i32_1 = arith.constant 0 : i32
    return %c0_i32, %c0_i32_0 : i32, i32
  }
  func.func @transform_3(%arg0: i32) -> (i32, i32) {
    %c0_i32 = arith.constant 0 : i32
    %c0_i32_0 = arith.constant 0 : i32
    %c0_i32_1 = arith.constant 0 : i32
    return %c0_i32, %c0_i32_0 : i32, i32
  }
  func.func @transform_4(%arg0: i32) -> (i32, i32) {
    %c0_i32 = arith.constant 0 : i32
    %c0_i32_0 = arith.constant 0 : i32
    %c0_i32_1 = arith.constant 0 : i32
    return %c0_i32, %c0_i32_0 : i32, i32
  }
  func.func @transform_5(%arg0: i32) -> (i32, i32) {
    %c0_i32 = arith.constant 0 : i32
    %c0_i32_0 = arith.constant 0 : i32
    %c0_i32_1 = arith.constant 0 : i32
    return %c0_i32, %c0_i32_0 : i32, i32
  }
  func.func @transform_6(%arg0: i32) -> (i32, i32) {
    %c0_i32 = arith.constant 0 : i32
    %c0_i32_0 = arith.constant 0 : i32
    %c0_i32_1 = arith.constant 0 : i32
    return %c0_i32, %c0_i32_0 : i32, i32
  }
  func.func @transform_7(%arg0: i32) -> (i32, i32, i32) {
    %c0_i32 = arith.constant 0 : i32
    %c0_i32_0 = arith.constant 0 : i32
    %c0_i32_1 = arith.constant 0 : i32
    return %arg0, %c0_i32, %c0_i32_0 : i32, i32, i32
  }
}

</mosaic_0001>

<llo_original>
// kernel: _lambda_.6
$region0: #{_lambda_.6}
  #allocation0 [shape = 'u32[]', space=smem, size = 0x4, offset = 0x4, fixed_abs, tag = 'smem constant byte address 0x4 - core index']
  #allocation1 [shape = 'u32[144,128]{1,0:T(1,128)}', space=vmem, size = 0x12000, scoped, tag = 'internal scratch']
  %s0 = inlined_call_operand.vmem [shape: f32[2,8,64], index: 0, kind: input, shape index: {}]
  %s1 = inlined_call_operand.vmem [shape: f32[2,16,32], index: 1, kind: input, shape index: {}]
  %s2 = inlined_call_operand.vmem [shape: f32[1,64], index: 2, kind: input, shape index: {}]
  %s3 = inlined_call_operand.vmem [shape: f32[1,64], index: 3, kind: input, shape index: {}]
  %s4 = inlined_call_operand.vmem [shape: f32[1,32], index: 4, kind: input, shape index: {}]
  %s5 = inlined_call_operand.vmem [shape: f32[1,32], index: 5, kind: input, shape index: {}]
  %s6 = inlined_call_operand.vmem [shape: bf16[64,16], index: 6, kind: input, shape index: {}]
  %s7 = inlined_call_operand.vmem [shape: bf16[32,32], index: 7, kind: input, shape index: {}]
  %s8 = inlined_call_operand.vmem [shape: bf16[16,64], index: 8, kind: input, shape index: {}]
  %s9 = inlined_call_operand.vmem [shape: f32[1,64], index: 9, kind: input, shape index: {}]
  %s10 = inlined_call_operand.vmem [shape: f32[2,8,64], index: 10, kind: output, shape index: {}]
  %s11 = sld [smem:[#allocation0]]
  $region73: #{_lambda_.6} parent=0
    _
  %s13 = ssub.s32 1, %s11
  %s14 = scalar_select 0, %s13, %s11
  loop: start=0, step=1, limit=4
  $region2: #{_lambda_.6} parent=0 // loop_pre_header
    _
  $region3: #{_lambda_.6} parent=0 // loop_header
    %s16 = sphi 0, %s20
    %p17 = scmp.ge.s32.totalorder %s16, 4
    %s26 = sphi 0, %s28
    %s29 = sphi 0, %s26
    %s30 = sphi 0, %s29
    %s46 = sphi 0, %s30
    %s52 = sphi 0, %s54
    %s55 = sphi 0, %s52
    %s56 = sphi 0, %s55
    %s72 = sphi 0, %s56
    %s76 = sphi 0, %s76
    %s78 = sphi 0, %s76
    %s79 = sphi 0, %s78
    %s93 = sphi 0, %s79
    %s97 = sphi 0, %s97
    %s99 = sphi 0, %s97
    %s100 = sphi 0, %s99
    %s114 = sphi 0, %s100
    %s118 = sphi 0, %s118
    %s120 = sphi 0, %s118
    %s121 = sphi 0, %s120
    %s135 = sphi 0, %s121
    %s139 = sphi 0, %s139
    %s141 = sphi 0, %s139
    %s142 = sphi 0, %s141
    %s156 = sphi 0, %s142
    %s160 = sphi 0, %s160
    %s162 = sphi 0, %s160
    %s163 = sphi 0, %s162
    %s177 = sphi 0, %s163
    %s181 = sphi 0, %s181
    %s183 = sphi 0, %s181
    %s184 = sphi 0, %s183
    %s198 = sphi 0, %s184
    %s202 = sphi 0, %s202
    %s204 = sphi 0, %s202
    %s205 = sphi 0, %s204
    %s219 = sphi 0, %s205
    %s223 = sphi 0, %s223
    %s225 = sphi 0, %s223
    %s226 = sphi 0, %s225
    %s240 = sphi 0, %s226
    %s246 = sphi 0, %s248
    %s249 = sphi 0, %s246
    %s250 = sphi 0, %s249
    %s266 = sphi 0, %s250
  $region4: #{_lambda_.6} parent=0 // loop_header_branch
    %19 = sbr.rel (%p17) target = $region8
  $region5: #{_lambda_.6} parent=0 // loop_body
    %s21 = ssub.s32 %s16, 1
    %s22 = ssub.s32 %s16, 2
    %s23 = sadd.s32 %s16, 1
    %s24 = ssub.s32 %s16, %s23
    %p25 = scmp.eq.s32.totalorder %s24, 0
    %s27 = sadd.s32 %s26, 1
    %s28 = scalar_select %p25, %s26, %s27
    %p31 = pneg %p25
    %p32 = scmp.eq.s32.totalorder %s16, 1
    %p33 = por %p31, %p32
    %p34 = scmp.ne.s32.totalorder %s26, %s29
    %p35 = scmp.eq.s32.totalorder %s16, 0
    %p36 = por %p34, %p35
    %p37 = scmp.ne.s32.totalorder %s26, %s29
    %p38 = scmp.eq.s32.totalorder %s21, 1
    %p39 = por %p37, %p38
    %p40 = scmp.ne.s32.totalorder %s29, %s30
    %p41 = scmp.eq.s32.totalorder %s21, 0
    %p42 = por %p40, %p41
    %p43 = scmp.ne.s32.totalorder %s29, %s30
    %p44 = scmp.eq.s32.totalorder %s22, 1
    %p45 = por %p43, %p44
    %p47 = scmp.ne.s32.totalorder %s30, %s46
    %p48 = scmp.eq.s32.totalorder %s22, 0
    %p49 = por %p47, %p48
    %s50 = ssub.s32 %s16, %s23
    %p51 = scmp.eq.s32.totalorder %s50, 0
    %s53 = sadd.s32 %s52, 1
    %s54 = scalar_select %p51, %s52, %s53
    %p57 = pneg %p51
    %p58 = scmp.eq.s32.totalorder %s16, 1
    %p59 = por %p57, %p58
    %p60 = scmp.ne.s32.totalorder %s52, %s55
    %p61 = scmp.eq.s32.totalorder %s16, 0
    %p62 = por %p60, %p61
    %p63 = scmp.ne.s32.totalorder %s52, %s55
    %p64 = scmp.eq.s32.totalorder %s21, 1
    %p65 = por %p63, %p64
    %p66 = scmp.ne.s32.totalorder %s55, %s56
    %p67 = scmp.eq.s32.totalorder %s21, 0
    %p68 = por %p66, %p67
    %p69 = scmp.ne.s32.totalorder %s55, %s56
    %p70 = scmp.eq.s32.totalorder %s22, 1
    %p71 = por %p69, %p70
    %p73 = scmp.ne.s32.totalorder %s56, %s72
    %p74 = scmp.eq.s32.totalorder %s22, 0
    %p75 = por %p73, %p74
    %s77 = sadd.s32 %s76, 1
    %p80 = scmp.eq.s32.totalorder %s16, 1
    %p81 = scmp.ne.s32.totalorder %s76, %s78
    %p82 = scmp.eq.s32.totalorder %s16, 0
    %p83 = por %p81, %p82
    %p84 = scmp.ne.s32.totalorder %s76, %s78
    %p85 = scmp.eq.s32.totalorder %s21, 1
    %p86 = por %p84, %p85
    %p87 = scmp.ne.s32.totalorder %s78, %s79
    %p88 = scmp.eq.s32.totalorder %s21, 0
    %p89 = por %p87, %p88
    %p90 = scmp.ne.s32.totalorder %s78, %s79
    %p91 = scmp.eq.s32.totalorder %s22, 1
    %p92 = por %p90, %p91
    %p94 = scmp.ne.s32.totalorder %s79, %s93
    %p95 = scmp.eq.s32.totalorder %s22, 0
    %p96 = por %p94, %p95
    %s98 = sadd.s32 %s97, 1
    %p101 = scmp.eq.s32.totalorder %s16, 1
    %p102 = scmp.ne.s32.totalorder %s97, %s99
    %p103 = scmp.eq.s32.totalorder %s16, 0
    %p104 = por %p102, %p103
    %p105 = scmp.ne.s32.totalorder %s97, %s99
    %p106 = scmp.eq.s32.totalorder %s21, 1
    %p107 = por %p105, %p106
    %p108 = scmp.ne.s32.totalorder %s99, %s100
    %p109 = scmp.eq.s32.totalorder %s21, 0
    %p110 = por %p108, %p109
    %p111 = scmp.ne.s32.totalorder %s99, %s100
    %p112 = scmp.eq.s32.totalorder %s22, 1
    %p113 = por %p111, %p112
    %p115 = scmp.ne.s32.totalorder %s100, %s114
    %p116 = scmp.eq.s32.totalorder %s22, 0
    %p117 = por %p115, %p116
    %s119 = sadd.s32 %s118, 1
    %p122 = scmp.eq.s32.totalorder %s16, 1
    %p123 = scmp.ne.s32.totalorder %s118, %s120
    %p124 = scmp.eq.s32.totalorder %s16, 0
    %p125 = por %p123, %p124
    %p126 = scmp.ne.s32.totalorder %s118, %s120
    %p127 = scmp.eq.s32.totalorder %s21, 1
    %p128 = por %p126, %p127
    %p129 = scmp.ne.s32.totalorder %s120, %s121
    %p130 = scmp.eq.s32.totalorder %s21, 0
    %p131 = por %p129, %p130
    %p132 = scmp.ne.s32.totalorder %s120, %s121
    %p133 = scmp.eq.s32.totalorder %s22, 1
    %p134 = por %p132, %p133
    %p136 = scmp.ne.s32.totalorder %s121, %s135
    %p137 = scmp.eq.s32.totalorder %s22, 0
    %p138 = por %p136, %p137
    %s140 = sadd.s32 %s139, 1
    %p143 = scmp.eq.s32.totalorder %s16, 1
    %p144 = scmp.ne.s32.totalorder %s139, %s141
    %p145 = scmp.eq.s32.totalorder %s16, 0
    %p146 = por %p144, %p145
    %p147 = scmp.ne.s32.totalorder %s139, %s141
    %p148 = scmp.eq.s32.totalorder %s21, 1
    %p149 = por %p147, %p148
    %p150 = scmp.ne.s32.totalorder %s141, %s142
    %p151 = scmp.eq.s32.totalorder %s21, 0
    %p152 = por %p150, %p151
    %p153 = scmp.ne.s32.totalorder %s141, %s142
    %p154 = scmp.eq.s32.totalorder %s22, 1
    %p155 = por %p153, %p154
    %p157 = scmp.ne.s32.totalorder %s142, %s156
    %p158 = scmp.eq.s32.totalorder %s22, 0
    %p159 = por %p157, %p158
    %s161 = sadd.s32 %s160, 1
    %p164 = scmp.eq.s32.totalorder %s16, 1
    %p165 = scmp.ne.s32.totalorder %s160, %s162
    %p166 = scmp.eq.s32.totalorder %s16, 0
    %p167 = por %p165, %p166
    %p168 = scmp.ne.s32.totalorder %s160, %s162
    %p169 = scmp.eq.s32.totalorder %s21, 1
    %p170 = por %p168, %p169
    %p171 = scmp.ne.s32.totalorder %s162, %s163
    %p172 = scmp.eq.s32.totalorder %s21, 0
    %p173 = por %p171, %p172
    %p174 = scmp.ne.s32.totalorder %s162, %s163
    %p175 = scmp.eq.s32.totalorder %s22, 1
    %p176 = por %p174, %p175
    %p178 = scmp.ne.s32.totalorder %s163, %s177
    %p179 = scmp.eq.s32.totalorder %s22, 0
    %p180 = por %p178, %p179
    %s182 = sadd.s32 %s181, 1
    %p185 = scmp.eq.s32.totalorder %s16, 1
    %p186 = scmp.ne.s32.totalorder %s181, %s183
    %p187 = scmp.eq.s32.totalorder %s16, 0
    %p188 = por %p186, %p187
    %p189 = scmp.ne.s32.totalorder %s181, %s183
    %p190 = scmp.eq.s32.totalorder %s21, 1
    %p191 = por %p189, %p190
    %p192 = scmp.ne.s32.totalorder %s183, %s184
    %p193 = scmp.eq.s32.totalorder %s21, 0
    %p194 = por %p192, %p193
    %p195 = scmp.ne.s32.totalorder %s183, %s184
    %p196 = scmp.eq.s32.totalorder %s22, 1
    %p197 = por %p195, %p196
    %p199 = scmp.ne.s32.totalorder %s184, %s198
    %p200 = scmp.eq.s32.totalorder %s22, 0
    %p201 = por %p199, %p200
    %s203 = sadd.s32 %s202, 1
    %p206 = scmp.eq.s32.totalorder %s16, 1
    %p207 = scmp.ne.s32.totalorder %s202, %s204
    %p208 = scmp.eq.s32.totalorder %s16, 0
    %p209 = por %p207, %p208
    %p210 = scmp.ne.s32.totalorder %s202, %s204
    %p211 = scmp.eq.s32.totalorder %s21, 1
    %p212 = por %p210, %p211
    %p213 = scmp.ne.s32.totalorder %s204, %s205
    %p214 = scmp.eq.s32.totalorder %s21, 0
    %p215 = por %p213, %p214
    %p216 = scmp.ne.s32.totalorder %s204, %s205
    %p217 = scmp.eq.s32.totalorder %s22, 1
    %p218 = por %p216, %p217
    %p220 = scmp.ne.s32.totalorder %s205, %s219
    %p221 = scmp.eq.s32.totalorder %s22, 0
    %p222 = por %p220, %p221
    %s224 = sadd.s32 %s223, 1
    %p227 = scmp.eq.s32.totalorder %s16, 1
    %p228 = scmp.ne.s32.totalorder %s223, %s225
    %p229 = scmp.eq.s32.totalorder %s16, 0
    %p230 = por %p228, %p229
    %p231 = scmp.ne.s32.totalorder %s223, %s225
    %p232 = scmp.eq.s32.totalorder %s21, 1
    %p233 = por %p231, %p232
    %p234 = scmp.ne.s32.totalorder %s225, %s226
    %p235 = scmp.eq.s32.totalorder %s21, 0
    %p236 = por %p234, %p235
    %p237 = scmp.ne.s32.totalorder %s225, %s226
    %p238 = scmp.eq.s32.totalorder %s22, 1
    %p239 = por %p237, %p238
    %p241 = scmp.ne.s32.totalorder %s226, %s240
    %p242 = scmp.eq.s32.totalorder %s22, 0
    %p243 = por %p241, %p242
    %s244 = ssub.s32 %s16, %s23
    %p245 = scmp.eq.s32.totalorder %s244, 0
    %s247 = sadd.s32 %s246, 1
    %s248 = scalar_select %p245, %s246, %s247
    %p251 = pneg %p245
    %p252 = scmp.eq.s32.totalorder %s16, 1
    %p253 = por %p251, %p252
    %p254 = scmp.ne.s32.totalorder %s246, %s249
    %p255 = scmp.eq.s32.totalorder %s16, 0
    %p256 = por %p254, %p255
    %p257 = scmp.ne.s32.totalorder %s246, %s249
    %p258 = scmp.eq.s32.totalorder %s21, 1
    %p259 = por %p257, %p258
    %p260 = scmp.ne.s32.totalorder %s249, %s250
    %p261 = scmp.eq.s32.totalorder %s21, 0
    %p262 = por %p260, %p261
    %p263 = scmp.ne.s32.totalorder %s249, %s250
    %p264 = scmp.eq.s32.totalorder %s22, 1
    %p265 = por %p263, %p264
    %p267 = scmp.ne.s32.totalorder %s250, %s266
    %p268 = scmp.eq.s32.totalorder %s22, 0
    %p269 = por %p267, %p268
    %p270 = scmp.le.s32.totalorder 1, %s16
    %p271 = scmp.lt.s32.totalorder %s16, 3
    %p272 = pnand %p270, %p271
    %p273 = pneg %p272
    // Predicated region
    $region9: #{_lambda_.6} parent=5 // pred_check
      _
    $region10: #{_lambda_.6} parent=5 // pred_check_branch
      %275 = sbr.rel (%p272) target = $region12
    $region11: #{_lambda_.6} parent=5 // pred_region
      %s276 = ssub.s32 %s16, 1
      // Predicated region
      $region13: #{_lambda_.6} parent=11 // pred_check
        %p277 = pneg %p89
      $region14: #{_lambda_.6} parent=11 // pred_check_branch
        %279 = sbr.rel (%p277) target = $region16
      $region15: #{_lambda_.6} parent=11 // pred_region
        _
      $region16: #{_lambda_.6} parent=11 // pred_fallthru
        _
      // Predicated region
      $region17: #{_lambda_.6} parent=11 // pred_check
        %p280 = pneg %p110
      $region18: #{_lambda_.6} parent=11 // pred_check_branch
        %282 = sbr.rel (%p280) target = $region20
      $region19: #{_lambda_.6} parent=11 // pred_region
        _
      $region20: #{_lambda_.6} parent=11 // pred_fallthru
        _
      // Predicated region
      $region21: #{_lambda_.6} parent=11 // pred_check
        %p283 = pneg %p131
      $region22: #{_lambda_.6} parent=11 // pred_check_branch
        %285 = sbr.rel (%p283) target = $region24
      $region23: #{_lambda_.6} parent=11 // pred_region
        _
      $region24: #{_lambda_.6} parent=11 // pred_fallthru
        _
      // Predicated region
      $region25: #{_lambda_.6} parent=11 // pred_check
        %p286 = pneg %p152
      $region26: #{_lambda_.6} parent=11 // pred_check_branch
        %288 = sbr.rel (%p286) target = $region28
      $region27: #{_lambda_.6} parent=11 // pred_region
        _
      $region28: #{_lambda_.6} parent=11 // pred_fallthru
        _
      // Predicated region
      $region29: #{_lambda_.6} parent=11 // pred_check
        %p289 = pneg %p173
      $region30: #{_lambda_.6} parent=11 // pred_check_branch
        %291 = sbr.rel (%p289) target = $region32
      $region31: #{_lambda_.6} parent=11 // pred_region
        _
      $region32: #{_lambda_.6} parent=11 // pred_fallthru
        _
      // Predicated region
      $region33: #{_lambda_.6} parent=11 // pred_check
        %p292 = pneg %p194
      $region34: #{_lambda_.6} parent=11 // pred_check_branch
        %294 = sbr.rel (%p292) target = $region36
      $region35: #{_lambda_.6} parent=11 // pred_region
        _
      $region36: #{_lambda_.6} parent=11 // pred_fallthru
        _
      // Predicated region
      $region37: #{_lambda_.6} parent=11 // pred_check
        %p295 = pneg %p215
      $region38: #{_lambda_.6} parent=11 // pred_check_branch
        %297 = sbr.rel (%p295) target = $region40
      $region39: #{_lambda_.6} parent=11 // pred_region
        _
      $region40: #{_lambda_.6} parent=11 // pred_fallthru
        _
      // Predicated region
      $region41: #{_lambda_.6} parent=11 // pred_check
        %p298 = pneg %p236
      $region42: #{_lambda_.6} parent=11 // pred_check_branch
        %300 = sbr.rel (%p298) target = $region44
      $region43: #{_lambda_.6} parent=11 // pred_region
        _
      $region44: #{_lambda_.6} parent=11 // pred_fallthru
        _
    $region12: #{_lambda_.6} parent=5 // pred_fallthru
      _
    %p301 = scmp.lt.s32.totalorder %s16, 2
    // Predicated region
    $region45: #{_lambda_.6} parent=5 // pred_check
      %p302 = pneg %p301
    $region46: #{_lambda_.6} parent=5 // pred_check_branch
      %304 = sbr.rel (%p302) target = $region48
    $region47: #{_lambda_.6} parent=5 // pred_region
      // Predicated region
      $region49: #{_lambda_.6} parent=47 // pred_check
        %p305 = pneg %p36
      $region50: #{_lambda_.6} parent=47 // pred_check_branch
        %307 = sbr.rel (%p305) target = $region52
      $region51: #{_lambda_.6} parent=47 // pred_region
        %p308 = scmp.lt.s32.totalorder %s16, 1
        %s309 = scalar_select %p308, %s16, 1
        %s310 = smul.addr %s309, 8
        %s311 = scalar_lea.vmem %s0, %s310
      $region52: #{_lambda_.6} parent=47 // pred_fallthru
        _
      // Predicated region
      $region53: #{_lambda_.6} parent=47 // pred_check
        %p312 = pneg %p62
      $region54: #{_lambda_.6} parent=47 // pred_check_branch
        %314 = sbr.rel (%p312) target = $region56
      $region55: #{_lambda_.6} parent=47 // pred_region
        %p315 = scmp.lt.s32.totalorder %s16, 1
        %s316 = scalar_select %p315, %s16, 1
        %s317 = smul.addr %s316, 2
        %s318 = smul.addr %s317, 8
        %s319 = scalar_lea.vmem %s1, %s318
      $region56: #{_lambda_.6} parent=47 // pred_fallthru
        _
    $region48: #{_lambda_.6} parent=5 // pred_fallthru
      _
    %p320 = scmp.le.s32.totalorder 1, %s16
    %p321 = scmp.lt.s32.totalorder %s16, 3
    %p322 = pnand %p320, %p321
    %p323 = pneg %p322
    // Predicated region
    $region57: #{_lambda_.6} parent=5 // pred_check
      _
    $region58: #{_lambda_.6} parent=5 // pred_check_branch
      %325 = sbr.rel (%p322) target = $region60
    $region59: #{_lambda_.6} parent=5 // pred_region
      %s326 = ssub.s32 %s16, 1
      %p327 = scmp.lt.s32.totalorder %s21, 1
      %s328 = scalar_select %p327, %s21, 1
      %s329 = smul.addr %s328, 8
      %s330 = scalar_lea.vmem %s0, %s329
      %p331 = pneg %p42
      %p332 = pneg %p39
      %p333 = scmp.lt.s32.totalorder %s21, 1
      %s334 = scalar_select %p333, %s21, 1
      %s335 = smul.addr %s334, 2
      %s336 = smul.addr %s335, 8
      %s337 = scalar_lea.vmem %s1, %s336
      %p338 = pneg %p68
      %p339 = pneg %p65
      %p340 = pneg %p89
      %p341 = pneg %p86
      %p342 = pneg %p110
      %p343 = pneg %p107
      %p344 = pneg %p131
      %p345 = pneg %p128
      %p346 = pneg %p152
      %p347 = pneg %p149
      %p348 = pneg %p173
      %p349 = pneg %p170
      %p350 = pneg %p194
      %p351 = pneg %p191
      %p352 = pneg %p215
      %p353 = pneg %p212
      %p354 = pneg %p236
      %p355 = pneg %p233
      %p356 = pneg %p262
      %p357 = pneg %p259
      %p358 = scmp.lt.s32.totalorder %s21, 1
      %s359 = scalar_select %p358, %s21, 1
      %s360 = smul.addr %s359, 8
      %s361 = scalar_lea.vmem %s10, %s360
      %p362 = scmp.lt.s32.totalorder %s21, 1
      %s363 = scalar_select %p362, %s21, 1
      %s364 = smul.addr %s363, 8
      %s365 = scalar_lea.vmem %s0, %s364
      %p366 = scmp.lt.s32.totalorder %s21, 1
      %s367 = scalar_select %p366, %s21, 1
      %s368 = smul.addr %s367, 2
      %s369 = smul.addr %s368, 8
      %s370 = scalar_lea.vmem %s1, %s369
      %p371 = scmp.lt.s32.totalorder %s21, 1
      %s372 = scalar_select %p371, %s21, 1
      %s373 = smul.addr %s372, 8
      %s374 = scalar_lea.vmem %s10, %s373
      %v376 = vld [vmem:[%s365] sm:$0xff]
      %v377 = vld [vmem:[%s370] sm:$0xff]
      %v378 = vld [vmem:[%s370 + $0x8] sm:$0xff]
      %v379 = vld [vmem:[%s2] sm:$0x1]
      %v380 = vld [vmem:[%s3] sm:$0x1]
      %vm381 = vcmask 523264
      %v382 = vsel %vm381, %v376, 0.0
      %383 = vadd.xlane.f32.xlu0 %v382
      %v384 = vpop.xlane.xlu0 %383
      %v385 = vrcp.pop 64.0
      %v386 = vmul.f32 %v384, %v385
      %v387 = vsub.f32 %v376, %v386
      %v388 = vmul.f32 %v387, %v387
      %v389 = vsel %vm381, %v388, 0.0
      %390 = vadd.xlane.f32.xlu0 %v389
      %v391 = vpop.xlane.xlu0 %390
      %v392 = vmul.f32 %v391, %v385
      %v393 = vadd.f32 %v392, 1e-05
      %v394 = vrsqrt.pop %v393
      %v395 = vmul.f32 %v387, %v394
      %v397 = vlaneseq
      %v398 = vshrl.u32 %v397, 7
      %v399 = vsub.s32 0, %v398
      %v400 = vrot.slane %v379, %v399
      %v402 = vmul.f32 %v395, %v400
      %v404 = vlaneseq
      %v405 = vshrl.u32 %v404, 7
      %v406 = vsub.s32 0, %v405
      %v407 = vrot.slane %v380, %v406
      %v409 = vadd.f32 %v402, %v407
      %v410 = vld [vmem:[%s4] sm:$0x1]
      %v411 = vld [vmem:[%s5] sm:$0x1]
      %vm412 = vcmask 261120
      %v413 = vsel %vm412, %v377, 0.0
      %414 = vadd.xlane.f32.xlu0 %v413
      %v415 = vpop.xlane.xlu0 %414
      %v416 = vsel %vm412, %v378, 0.0
      %417 = vadd.xlane.f32.xlu0 %v416
      %v418 = vpop.xlane.xlu0 %417
      %v419 = vrcp.pop 32.0
      %v420 = vmul.f32 %v415, %v419
      %v421 = vmul.f32 %v418, %v419
      %v422 = vsub.f32 %v377, %v420
      %v423 = vsub.f32 %v378, %v421
      %v424 = vmul.f32 %v422, %v422
      %v425 = vmul.f32 %v423, %v423
      %v426 = vsel %vm412, %v424, 0.0
      %427 = vadd.xlane.f32.xlu0 %v426
      %v428 = vpop.xlane.xlu0 %427
      %v429 = vsel %vm412, %v425, 0.0
      %430 = vadd.xlane.f32.xlu0 %v429
      %v431 = vpop.xlane.xlu0 %430
      %v432 = vmul.f32 %v428, %v419
      %v433 = vmul.f32 %v431, %v419
      %v434 = vadd.f32 %v432, 1e-05
      %v435 = vadd.f32 %v433, 1e-05
      %v436 = vrsqrt.pop %v434
      %v437 = vrsqrt.pop %v435
      %v438 = vmul.f32 %v422, %v436
      %v439 = vmul.f32 %v423, %v437
      %v441 = vlaneseq
      %v442 = vshrl.u32 %v441, 7
      %v443 = vsub.s32 0, %v442
      %v444 = vrot.slane %v410, %v443
      %v446 = vmul.f32 %v438, %v444
      %v447 = vmul.f32 %v439, %v444
      %v449 = vlaneseq
      %v450 = vshrl.u32 %v449, 7
      %v451 = vsub.s32 0, %v450
      %v452 = vrot.slane %v411, %v451
      %v454 = vadd.f32 %v446, %v452
      %v455 = vadd.f32 %v447, %v452
      %v456 = vpack.c.bf16 %v409, %v409
      %v457 = vld [vmem:[%s6] sm:$0xf]
      %v458 = vld [vmem:[%s6 + $0x4] sm:$0xf]
      %v459 = vld [vmem:[%s6 + $0x8] sm:$0xf]
      %v460 = vld [vmem:[%s6 + $0xc] sm:$0xf]
      %v461 = vld [vmem:[%s6 + $0x10] sm:$0xf]
      %v462 = vld [vmem:[%s6 + $0x14] sm:$0xf]
      %v463 = vld [vmem:[%s6 + $0x18] sm:$0xf]
      %v464 = vld [vmem:[%s6 + $0x1c] sm:$0xf]
      %v473 = vunpack.c.l.b16 %v457
      %v474 = vunpack.c.l.b16 %v458
      %v475 = vunpack.c.l.b16 %v459
      %v476 = vunpack.c.l.b16 %v460
      %v477 = vunpack.c.l.b16 %v461
      %v478 = vunpack.c.l.b16 %v462
      %v479 = vunpack.c.l.b16 %v463
      %v480 = vunpack.c.l.b16 %v464
      %v481 = vpack.c.b16 %v474, %v473
      %v482 = vpack.c.b16 %v476, %v475
      %v483 = vpack.c.b16 %v478, %v477
      %v484 = vpack.c.b16 %v480, %v479
      %v490 = vsel %vm381, %v456, 0
      %492 = vmatprep.subr.bf16.mxu0 0
      %493 = vmatpush1.bf16.msra.mxu0 %v481
      %494 = vmatprep.subr.bf16.mxu0 0
      %495 = vmatpush1.bf16.msra.mxu0 %v482
      %496 = vmatprep.subr.bf16.mxu0 0
      %497 = vmatpush1.bf16.msra.mxu0 %v483
      %498 = vmatprep.subr.bf16.mxu0 0
      %499 = vmatpush1.bf16.msra.mxu0 %v484
      %500 = vmatprep.subr.bf16.mxu0 0
      %501 = vmatpush1.bf16.msra.mxu0 0
      %502 = vmatprep.subr.bf16.mxu0 0
      %503 = vmatpush1.bf16.msra.mxu0 0
      %504 = vmatprep.subr.bf16.mxu0 0
      %505 = vmatpush1.bf16.msra.mxu0 0
      %506 = vmatprep.subr.bf16.mxu0 0
      %507 = vmatpush1.bf16.msra.mxu0 0
      %508 = vmatprep.subr.bf16.mxu0 0
      %509 = vmatpush1.bf16.msra.mxu0 0
      %510 = vmatprep.subr.bf16.mxu0 0
      %511 = vmatpush1.bf16.msra.mxu0 0
      %512 = vmatprep.subr.bf16.mxu0 0
      %513 = vmatpush1.bf16.msra.mxu0 0
      %514 = vmatprep.subr.bf16.mxu0 0
      %515 = vmatpush1.bf16.msra.mxu0 0
      %516 = vmatprep.subr.bf16.mxu0 0
      %517 = vmatpush1.bf16.msra.mxu0 0
      %518 = vmatprep.subr.bf16.mxu0 0
      %519 = vmatpush1.bf16.msra.mxu0 0
      %520 = vmatprep.subr.bf16.mxu0 0
      %521 = vmatpush1.bf16.msra.mxu0 0
      %522 = vmatprep.subr.bf16.mxu0 0
      %523 = vmatpush1.bf16.msra.mxu0 0
      %524 = vmatprep.mubr.bf16.mxu0 0
      %525 = vmatmul.mubr.bf16.gmra.mrb[0].mxu0 %v490
      %v526 = vpop.f32.mrb[0].mxu0
      %v527 = vadd.f32 0.0, %v526
      %v528 = vpop.f32.mrb[0].mxu0
      %v529 = vpop.f32.mrb[0].mxu0
      %v530 = vpop.f32.mrb[0].mxu0
      %531 = vdwg.mxu0
      %v532 = vmul.f32 %v527, 0.25
      %v533 = vpack.c.bf16 %v455, %v454
      %v534 = vld [vmem:[%s7] sm:$0xf]
      %v535 = vld [vmem:[%s7 + $0x4] sm:$0xf]
      %v536 = vld [vmem:[%s7 + $0x8] sm:$0xf]
      %v537 = vld [vmem:[%s7 + $0xc] sm:$0xf]
      %v542 = vunpack.c.l.b16 %v534
      %v543 = vunpack.c.l.b16 %v535
      %v544 = vunpack.c.l.b16 %v536
      %v545 = vunpack.c.l.b16 %v537
      %v546 = vpack.c.b16 %v543, %v542
      %v547 = vpack.c.b16 %v545, %v544
      %v551 = vsel %vm412, %v533, 0
      %553 = vmatprep.subr.bf16.mxu0 0
      %554 = vmatpush1.bf16.msra.mxu0 %v546
      %555 = vmatprep.subr.bf16.mxu0 0
      %556 = vmatpush1.bf16.msra.mxu0 %v547
      %557 = vmatprep.subr.bf16.mxu0 0
      %558 = vmatpush1.bf16.msra.mxu0 0
      %559 = vmatprep.subr.bf16.mxu0 0
      %560 = vmatpush1.bf16.msra.mxu0 0
      %561 = vmatprep.subr.bf16.mxu0 0
      %562 = vmatpush1.bf16.msra.mxu0 0
      %563 = vmatprep.subr.bf16.mxu0 0
      %564 = vmatpush1.bf16.msra.mxu0 0
      %565 = vmatprep.subr.bf16.mxu0 0
      %566 = vmatpush1.bf16.msra.mxu0 0
      %567 = vmatprep.subr.bf16.mxu0 0
      %568 = vmatpush1.bf16.msra.mxu0 0
      %569 = vmatprep.subr.bf16.mxu0 0
      %570 = vmatpush1.bf16.msra.mxu0 0
      %571 = vmatprep.subr.bf16.mxu0 0
      %572 = vmatpush1.bf16.msra.mxu0 0
      %573 = vmatprep.subr.bf16.mxu0 0
      %574 = vmatpush1.bf16.msra.mxu0 0
      %575 = vmatprep.subr.bf16.mxu0 0
      %576 = vmatpush1.bf16.msra.mxu0 0
      %577 = vmatprep.subr.bf16.mxu0 0
      %578 = vmatpush1.bf16.msra.mxu0 0
      %579 = vmatprep.subr.bf16.mxu0 0
      %580 = vmatpush1.bf16.msra.mxu0 0
      %581 = vmatprep.subr.bf16.mxu0 0
      %582 = vmatpush1.bf16.msra.mxu0 0
      %583 = vmatprep.subr.bf16.mxu0 0
      %584 = vmatpush1.bf16.msra.mxu0 0
      %585 = vmatprep.mubr.bf16.mxu0 0
      %586 = vmatmul.mubr.bf16.gmra.mrb[0].mxu0 %v551
      %v587 = vpop.f32.mrb[0].mxu0
      %v588 = vadd.f32 0.0, %v587
      %v589 = vpop.f32.mrb[0].mxu0
      %v590 = vpop.f32.mrb[0].mxu0
      %v591 = vadd.f32 0.0, %v590
      %v592 = vpop.f32.mrb[0].mxu0
      %593 = vdwg.mxu0
      %v594 = vld [vmem:[%s8] sm:$0xf]
      %v595 = vld [vmem:[%s8 + $0x4] sm:$0xf]
      %v596 = vpack.c.bf16 %v532, %v532
      %v597 = vpack.c.bf16 %v591, %v588
      %vm598 = vcmask 130048
      %v600 = vsel %vm598, %v596, 0
      %v603 = vsel %vm598, %v597, 0
      %605 = vmatprep.subr.bf16.mxu0 0
      %606 = vmatpush1.bf16.xpose.msra.mxu0 %v603
      %607 = vmatprep.subr.bf16.mxu0 0
      %608 = vmatpush1.bf16.xpose.msra.mxu0 0
      %609 = vmatprep.subr.bf16.mxu0 0
      %610 = vmatpush1.bf16.xpose.msra.mxu0 0
      %611 = vmatprep.subr.bf16.mxu0 0
      %612 = vmatpush1.bf16.xpose.msra.mxu0 0
      %613 = vmatprep.subr.bf16.mxu0 0
      %614 = vmatpush1.bf16.xpose.msra.mxu0 0
      %615 = vmatprep.subr.bf16.mxu0 0
      %616 = vmatpush1.bf16.xpose.msra.mxu0 0
      %617 = vmatprep.subr.bf16.mxu0 0
      %618 = vmatpush1.bf16.xpose.msra.mxu0 0
      %619 = vmatprep.subr.bf16.mxu0 0
      %620 = vmatpush1.bf16.xpose.msra.mxu0 0
      %621 = vmatprep.subr.bf16.mxu0 0
      %622 = vmatpush1.bf16.xpose.msra.mxu0 0
      %623 = vmatprep.subr.bf16.mxu0 0
      %624 = vmatpush1.bf16.xpose.msra.mxu0 0
      %625 = vmatprep.subr.bf16.mxu0 0
      %626 = vmatpush1.bf16.xpose.msra.mxu0 0
      %627 = vmatprep.subr.bf16.mxu0 0
      %628 = vmatpush1.bf16.xpose.msra.mxu0 0
      %629 = vmatprep.subr.bf16.mxu0 0
      %630 = vmatpush1.bf16.xpose.msra.mxu0 0
      %631 = vmatprep.subr.bf16.mxu0 0
      %632 = vmatpush1.bf16.xpose.msra.mxu0 0
      %633 = vmatprep.subr.bf16.mxu0 0
      %634 = vmatpush1.bf16.xpose.msra.mxu0 0
      %635 = vmatprep.subr.bf16.mxu0 0
      %636 = vmatpush1.bf16.xpose.msra.mxu0 0
      %637 = vmatprep.mubr.bf16.mxu0 0
      %638 = vmatmul.mubr.bf16.gmra.mrb[0].mxu0 %v600
      %v639 = vpop.f32.mrb[0].mxu0
      %v640 = vadd.f32 0.0, %v639
      %v641 = vpop.f32.mrb[0].mxu0
      %v642 = vpop.f32.mrb[0].mxu0
      %v643 = vpop.f32.mrb[0].mxu0
      %644 = vdwg.mxu0
      %v645 = vsel %vm598, %v640, -inf
      %646 = vmax.xlane.f32.xlu0 %v645
      %v647 = vpop.xlane.xlu0 %646
      %v648 = vsub.f32 %v640, %v647
      %v649 = vmul.f32 %v648, 1.442695
      %v650 = vpow.pop %v649
      %v651 = vsel %vm598, %v650, 0.0
      %652 = vadd.xlane.f32.xlu0 %v651
      %v653 = vpop.xlane.xlu0 %652
      %v654 = vrcp.pop %v653
      %v655 = vmul.f32 %v650, %v654
      %v656 = vpack.c.bf16 %v655, %v655
      %658 = vrot.lane.b32.xlu0 %v597, 112
      %v659 = vpop.permute.xlu0 %658
      %v662 = vsel %vm598, %v656, 0
      %664 = vmatprep.subr.bf16.mxu0 0
      %665 = vmatpush1.bf16.msra.mxu0 %v659
      %666 = vmatprep.subr.bf16.mxu0 0
      %667 = vmatpush1.bf16.msra.mxu0 0
      %668 = vmatprep.subr.bf16.mxu0 0
      %669 = vmatpush1.bf16.msra.mxu0 0
      %670 = vmatprep.subr.bf16.mxu0 0
      %671 = vmatpush1.bf16.msra.mxu0 0
      %672 = vmatprep.subr.bf16.mxu0 0
      %673 = vmatpush1.bf16.msra.mxu0 0
      %674 = vmatprep.subr.bf16.mxu0 0
      %675 = vmatpush1.bf16.msra.mxu0 0
      %676 = vmatprep.subr.bf16.mxu0 0
      %677 = vmatpush1.bf16.msra.mxu0 0
      %678 = vmatprep.subr.bf16.mxu0 0
      %679 = vmatpush1.bf16.msra.mxu0 0
      %680 = vmatprep.subr.bf16.mxu0 0
      %681 = vmatpush1.bf16.msra.mxu0 0
      %682 = vmatprep.subr.bf16.mxu0 0
      %683 = vmatpush1.bf16.msra.mxu0 0
      %684 = vmatprep.subr.bf16.mxu0 0
      %685 = vmatpush1.bf16.msra.mxu0 0
      %686 = vmatprep.subr.bf16.mxu0 0
      %687 = vmatpush1.bf16.msra.mxu0 0
      %688 = vmatprep.subr.bf16.mxu0 0
      %689 = vmatpush1.bf16.msra.mxu0 0
      %690 = vmatprep.subr.bf16.mxu0 0
      %691 = vmatpush1.bf16.msra.mxu0 0
      %692 = vmatprep.subr.bf16.mxu0 0
      %693 = vmatpush1.bf16.msra.mxu0 0
      %694 = vmatprep.subr.bf16.mxu0 0
      %695 = vmatpush1.bf16.msra.mxu0 0
      %696 = vmatprep.mubr.bf16.mxu0 0
      %697 = vmatmul.mubr.bf16.gmra.mrb[0].mxu0 %v662
      %v698 = vpop.f32.mrb[0].mxu0
      %v699 = vadd.f32 0.0, %v698
      %v700 = vpop.f32.mrb[0].mxu0
      %v701 = vpop.f32.mrb[0].mxu0
      %v702 = vpop.f32.mrb[0].mxu0
      %703 = vdwg.mxu0
      %v704 = vpack.c.bf16 %v699, %v699
      %v705 = vld [vmem:[%s9] sm:$0x1]
      %v707 = vlaneseq
      %v708 = vshrl.u32 %v707, 7
      %v709 = vsub.s32 0, %v708
      %v710 = vrot.slane %v705, %v709
      %v714 = vunpack.c.l.b16 %v594
      %v715 = vunpack.c.l.b16 %v595
      %v716 = vpack.c.b16 %v715, %v714
      %v719 = vsel %vm598, %v704, 0
      %721 = vmatprep.subr.bf16.mxu0 0
      %722 = vmatpush1.bf16.msra.mxu0 %v716
      %723 = vmatprep.subr.bf16.mxu0 0
      %724 = vmatpush1.bf16.msra.mxu0 0
      %725 = vmatprep.subr.bf16.mxu0 0
      %726 = vmatpush1.bf16.msra.mxu0 0
      %727 = vmatprep.subr.bf16.mxu0 0
      %728 = vmatpush1.bf16.msra.mxu0 0
      %729 = vmatprep.subr.bf16.mxu0 0
      %730 = vmatpush1.bf16.msra.mxu0 0
      %731 = vmatprep.subr.bf16.mxu0 0
      %732 = vmatpush1.bf16.msra.mxu0 0
      %733 = vmatprep.subr.bf16.mxu0 0
      %734 = vmatpush1.bf16.msra.mxu0 0
      %735 = vmatprep.subr.bf16.mxu0 0
      %736 = vmatpush1.bf16.msra.mxu0 0
      %737 = vmatprep.subr.bf16.mxu0 0
      %738 = vmatpush1.bf16.msra.mxu0 0
      %739 = vmatprep.subr.bf16.mxu0 0
      %740 = vmatpush1.bf16.msra.mxu0 0
      %741 = vmatprep.subr.bf16.mxu0 0
      %742 = vmatpush1.bf16.msra.mxu0 0
      %743 = vmatprep.subr.bf16.mxu0 0
      %744 = vmatpush1.bf16.msra.mxu0 0
      %745 = vmatprep.subr.bf16.mxu0 0
      %746 = vmatpush1.bf16.msra.mxu0 0
      %747 = vmatprep.subr.bf16.mxu0 0
      %748 = vmatpush1.bf16.msra.mxu0 0
      %749 = vmatprep.subr.bf16.mxu0 0
      %750 = vmatpush1.bf16.msra.mxu0 0
      %751 = vmatprep.subr.bf16.mxu0 0
      %752 = vmatpush1.bf16.msra.mxu0 0
      %753 = vmatprep.mubr.bf16.mxu0 0
      %754 = vmatmul.mubr.bf16.gmra.mrb[0].mxu0 %v719
      %v755 = vpop.f32.mrb[0].mxu0
      %v756 = vadd.f32 %v710, %v755
      %v757 = vpop.f32.mrb[0].mxu0
      %v758 = vpop.f32.mrb[0].mxu0
      %v759 = vpop.f32.mrb[0].mxu0
      %760 = vdwg.mxu0
      %v761 = vadd.f32 %v756, %v376
      %762 = vst.msk [vmem:[%s374] sm:$0xff] %vm381, %v761
      %p763 = scmp.lt.s32.totalorder %s21, 1
      %s764 = scalar_select %p763, %s21, 1
      %s765 = smul.addr %s764, 8
      %s766 = scalar_lea.vmem %s10, %s765
      // Predicated region
      $region61: #{_lambda_.6} parent=59 // pred_check
        %p767 = pneg %p259
      $region62: #{_lambda_.6} parent=59 // pred_check_branch
        %769 = sbr.rel (%p767) target = $region64
      $region63: #{_lambda_.6} parent=59 // pred_region
        _
      $region64: #{_lambda_.6} parent=59 // pred_fallthru
        _
    $region60: #{_lambda_.6} parent=5 // pred_fallthru
      _
    %p770 = scmp.le.s32.totalorder 2, %s16
    // Predicated region
    $region65: #{_lambda_.6} parent=5 // pred_check
      %p771 = pneg %p770
    $region66: #{_lambda_.6} parent=5 // pred_check_branch
      %773 = sbr.rel (%p771) target = $region68
    $region67: #{_lambda_.6} parent=5 // pred_region
      %s774 = ssub.s32 %s16, 2
      // Predicated region
      $region69: #{_lambda_.6} parent=67 // pred_check
        %p775 = pneg %p265
      $region70: #{_lambda_.6} parent=67 // pred_check_branch
        %777 = sbr.rel (%p775) target = $region72
      $region71: #{_lambda_.6} parent=67 // pred_region
        %p778 = scmp.lt.s32.totalorder %s22, 1
        %s779 = scalar_select %p778, %s22, 1
        %s780 = smul.addr %s779, 8
        %s781 = scalar_lea.vmem %s10, %s780
      $region72: #{_lambda_.6} parent=67 // pred_fallthru
        _
    $region68: #{_lambda_.6} parent=5 // pred_fallthru
      _
  $region6: #{_lambda_.6} parent=0 // loop_footer
    %s20 = sadd.s32 1, %s16
  $region7: #{_lambda_.6} parent=0 // loop_footer_branch
    %15 = sbr.rel target = $region3
  $region8: #{_lambda_.6} parent=0 // loop_exit
    _

// kernel: _lambda_.7
$region0: #{_lambda_.7}
  #allocation0 [shape = 'u32[]', space=smem, size = 0x4, offset = 0x4, fixed_abs, tag = 'smem constant byte address 0x4 - core index']
  #allocation1 [shape = 'u32[144,128]{1,0:T(1,128)}', space=vmem, size = 0x12000, scoped, tag = 'internal scratch']
  %s0 = inlined_call_operand.vmem [shape: f32[2,8,64], index: 0, kind: input, shape index: {}]
  %s1 = inlined_call_operand.vmem [shape: f32[1,64], index: 1, kind: input, shape index: {}]
  %s2 = inlined_call_operand.vmem [shape: f32[1,64], index: 2, kind: input, shape index: {}]
  %s3 = inlined_call_operand.vmem [shape: bf16[64,512], index: 3, kind: input, shape index: {}]
  %s4 = inlined_call_operand.vmem [shape: f32[1,512], index: 4, kind: input, shape index: {}]
  %s5 = inlined_call_operand.vmem [shape: bf16[256,64], index: 5, kind: input, shape index: {}]
  %s6 = inlined_call_operand.vmem [shape: f32[1,64], index: 6, kind: input, shape index: {}]
  %s7 = inlined_call_operand.vmem [shape: f32[2,8,64], index: 7, kind: output, shape index: {}]
  %s8 = sld [smem:[#allocation0]]
  $region61: #{_lambda_.7} parent=0
    _
  %s10 = ssub.s32 1, %s8
  %s11 = scalar_select 0, %s10, %s8
  loop: start=0, step=1, limit=4
  $region2: #{_lambda_.7} parent=0 // loop_pre_header
    _
  $region3: #{_lambda_.7} parent=0 // loop_header
    %s13 = sphi 0, %s17
    %p14 = scmp.ge.s32.totalorder %s13, 4
    %s23 = sphi 0, %s25
    %s26 = sphi 0, %s23
    %s27 = sphi 0, %s26
    %s43 = sphi 0, %s27
    %s47 = sphi 0, %s47
    %s49 = sphi 0, %s47
    %s50 = sphi 0, %s49
    %s64 = sphi 0, %s50
    %s68 = sphi 0, %s68
    %s70 = sphi 0, %s68
    %s71 = sphi 0, %s70
    %s85 = sphi 0, %s71
    %s89 = sphi 0, %s89
    %s91 = sphi 0, %s89
    %s92 = sphi 0, %s91
    %s106 = sphi 0, %s92
    %s110 = sphi 0, %s110
    %s112 = sphi 0, %s110
    %s113 = sphi 0, %s112
    %s127 = sphi 0, %s113
    %s131 = sphi 0, %s131
    %s133 = sphi 0, %s131
    %s134 = sphi 0, %s133
    %s148 = sphi 0, %s134
    %s152 = sphi 0, %s152
    %s154 = sphi 0, %s152
    %s155 = sphi 0, %s154
    %s169 = sphi 0, %s155
    %s175 = sphi 0, %s177
    %s178 = sphi 0, %s175
    %s179 = sphi 0, %s178
    %s195 = sphi 0, %s179
  $region4: #{_lambda_.7} parent=0 // loop_header_branch
    %16 = sbr.rel (%p14) target = $region8
  $region5: #{_lambda_.7} parent=0 // loop_body
    %s18 = ssub.s32 %s13, 1
    %s19 = ssub.s32 %s13, 2
    %s20 = sadd.s32 %s13, 1
    %s21 = ssub.s32 %s13, %s20
    %p22 = scmp.eq.s32.totalorder %s21, 0
    %s24 = sadd.s32 %s23, 1
    %s25 = scalar_select %p22, %s23, %s24
    %p28 = pneg %p22
    %p29 = scmp.eq.s32.totalorder %s13, 1
    %p30 = por %p28, %p29
    %p31 = scmp.ne.s32.totalorder %s23, %s26
    %p32 = scmp.eq.s32.totalorder %s13, 0
    %p33 = por %p31, %p32
    %p34 = scmp.ne.s32.totalorder %s23, %s26
    %p35 = scmp.eq.s32.totalorder %s18, 1
    %p36 = por %p34, %p35
    %p37 = scmp.ne.s32.totalorder %s26, %s27
    %p38 = scmp.eq.s32.totalorder %s18, 0
    %p39 = por %p37, %p38
    %p40 = scmp.ne.s32.totalorder %s26, %s27
    %p41 = scmp.eq.s32.totalorder %s19, 1
    %p42 = por %p40, %p41
    %p44 = scmp.ne.s32.totalorder %s27, %s43
    %p45 = scmp.eq.s32.totalorder %s19, 0
    %p46 = por %p44, %p45
    %s48 = sadd.s32 %s47, 1
    %p51 = scmp.eq.s32.totalorder %s13, 1
    %p52 = scmp.ne.s32.totalorder %s47, %s49
    %p53 = scmp.eq.s32.totalorder %s13, 0
    %p54 = por %p52, %p53
    %p55 = scmp.ne.s32.totalorder %s47, %s49
    %p56 = scmp.eq.s32.totalorder %s18, 1
    %p57 = por %p55, %p56
    %p58 = scmp.ne.s32.totalorder %s49, %s50
    %p59 = scmp.eq.s32.totalorder %s18, 0
    %p60 = por %p58, %p59
    %p61 = scmp.ne.s32.totalorder %s49, %s50
    %p62 = scmp.eq.s32.totalorder %s19, 1
    %p63 = por %p61, %p62
    %p65 = scmp.ne.s32.totalorder %s50, %s64
    %p66 = scmp.eq.s32.totalorder %s19, 0
    %p67 = por %p65, %p66
    %s69 = sadd.s32 %s68, 1
    %p72 = scmp.eq.s32.totalorder %s13, 1
    %p73 = scmp.ne.s32.totalorder %s68, %s70
    %p74 = scmp.eq.s32.totalorder %s13, 0
    %p75 = por %p73, %p74
    %p76 = scmp.ne.s32.totalorder %s68, %s70
    %p77 = scmp.eq.s32.totalorder %s18, 1
    %p78 = por %p76, %p77
    %p79 = scmp.ne.s32.totalorder %s70, %s71
    %p80 = scmp.eq.s32.totalorder %s18, 0
    %p81 = por %p79, %p80
    %p82 = scmp.ne.s32.totalorder %s70, %s71
    %p83 = scmp.eq.s32.totalorder %s19, 1
    %p84 = por %p82, %p83
    %p86 = scmp.ne.s32.totalorder %s71, %s85
    %p87 = scmp.eq.s32.totalorder %s19, 0
    %p88 = por %p86, %p87
    %s90 = sadd.s32 %s89, 1
    %p93 = scmp.eq.s32.totalorder %s13, 1
    %p94 = scmp.ne.s32.totalorder %s89, %s91
    %p95 = scmp.eq.s32.totalorder %s13, 0
    %p96 = por %p94, %p95
    %p97 = scmp.ne.s32.totalorder %s89, %s91
    %p98 = scmp.eq.s32.totalorder %s18, 1
    %p99 = por %p97, %p98
    %p100 = scmp.ne.s32.totalorder %s91, %s92
    %p101 = scmp.eq.s32.totalorder %s18, 0
    %p102 = por %p100, %p101
    %p103 = scmp.ne.s32.totalorder %s91, %s92
    %p104 = scmp.eq.s32.totalorder %s19, 1
    %p105 = por %p103, %p104
    %p107 = scmp.ne.s32.totalorder %s92, %s106
    %p108 = scmp.eq.s32.totalorder %s19, 0
    %p109 = por %p107, %p108
    %s111 = sadd.s32 %s110, 1
    %p114 = scmp.eq.s32.totalorder %s13, 1
    %p115 = scmp.ne.s32.totalorder %s110, %s112
    %p116 = scmp.eq.s32.totalorder %s13, 0
    %p117 = por %p115, %p116
    %p118 = scmp.ne.s32.totalorder %s110, %s112
    %p119 = scmp.eq.s32.totalorder %s18, 1
    %p120 = por %p118, %p119
    %p121 = scmp.ne.s32.totalorder %s112, %s113
    %p122 = scmp.eq.s32.totalorder %s18, 0
    %p123 = por %p121, %p122
    %p124 = scmp.ne.s32.totalorder %s112, %s113
    %p125 = scmp.eq.s32.totalorder %s19, 1
    %p126 = por %p124, %p125
    %p128 = scmp.ne.s32.totalorder %s113, %s127
    %p129 = scmp.eq.s32.totalorder %s19, 0
    %p130 = por %p128, %p129
    %s132 = sadd.s32 %s131, 1
    %p135 = scmp.eq.s32.totalorder %s13, 1
    %p136 = scmp.ne.s32.totalorder %s131, %s133
    %p137 = scmp.eq.s32.totalorder %s13, 0
    %p138 = por %p136, %p137
    %p139 = scmp.ne.s32.totalorder %s131, %s133
    %p140 = scmp.eq.s32.totalorder %s18, 1
    %p141 = por %p139, %p140
    %p142 = scmp.ne.s32.totalorder %s133, %s134
    %p143 = scmp.eq.s32.totalorder %s18, 0
    %p144 = por %p142, %p143
    %p145 = scmp.ne.s32.totalorder %s133, %s134
    %p146 = scmp.eq.s32.totalorder %s19, 1
    %p147 = por %p145, %p146
    %p149 = scmp.ne.s32.totalorder %s134, %s148
    %p150 = scmp.eq.s32.totalorder %s19, 0
    %p151 = por %p149, %p150
    %s153 = sadd.s32 %s152, 1
    %p156 = scmp.eq.s32.totalorder %s13, 1
    %p157 = scmp.ne.s32.totalorder %s152, %s154
    %p158 = scmp.eq.s32.totalorder %s13, 0
    %p159 = por %p157, %p158
    %p160 = scmp.ne.s32.totalorder %s152, %s154
    %p161 = scmp.eq.s32.totalorder %s18, 1
    %p162 = por %p160, %p161
    %p163 = scmp.ne.s32.totalorder %s154, %s155
    %p164 = scmp.eq.s32.totalorder %s18, 0
    %p165 = por %p163, %p164
    %p166 = scmp.ne.s32.totalorder %s154, %s155
    %p167 = scmp.eq.s32.totalorder %s19, 1
    %p168 = por %p166, %p167
    %p170 = scmp.ne.s32.totalorder %s155, %s169
    %p171 = scmp.eq.s32.totalorder %s19, 0
    %p172 = por %p170, %p171
    %s173 = ssub.s32 %s13, %s20
    %p174 = scmp.eq.s32.totalorder %s173, 0
    %s176 = sadd.s32 %s175, 1
    %s177 = scalar_select %p174, %s175, %s176
    %p180 = pneg %p174
    %p181 = scmp.eq.s32.totalorder %s13, 1
    %p182 = por %p180, %p181
    %p183 = scmp.ne.s32.totalorder %s175, %s178
    %p184 = scmp.eq.s32.totalorder %s13, 0
    %p185 = por %p183, %p184
    %p186 = scmp.ne.s32.totalorder %s175, %s178
    %p187 = scmp.eq.s32.totalorder %s18, 1
    %p188 = por %p186, %p187
    %p189 = scmp.ne.s32.totalorder %s178, %s179
    %p190 = scmp.eq.s32.totalorder %s18, 0
    %p191 = por %p189, %p190
    %p192 = scmp.ne.s32.totalorder %s178, %s179
    %p193 = scmp.eq.s32.totalorder %s19, 1
    %p194 = por %p192, %p193
    %p196 = scmp.ne.s32.totalorder %s179, %s195
    %p197 = scmp.eq.s32.totalorder %s19, 0
    %p198 = por %p196, %p197
    %p199 = scmp.le.s32.totalorder 1, %s13
    %p200 = scmp.lt.s32.totalorder %s13, 3
    %p201 = pnand %p199, %p200
    %p202 = pneg %p201
    // Predicated region
    $region9: #{_lambda_.7} parent=5 // pred_check
      _
    $region10: #{_lambda_.7} parent=5 // pred_check_branch
      %204 = sbr.rel (%p201) target = $region12
    $region11: #{_lambda_.7} parent=5 // pred_region
      %s205 = ssub.s32 %s13, 1
      // Predicated region
      $region13: #{_lambda_.7} parent=11 // pred_check
        %p206 = pneg %p60
      $region14: #{_lambda_.7} parent=11 // pred_check_branch
        %208 = sbr.rel (%p206) target = $region16
      $region15: #{_lambda_.7} parent=11 // pred_region
        _
      $region16: #{_lambda_.7} parent=11 // pred_fallthru
        _
      // Predicated region
      $region17: #{_lambda_.7} parent=11 // pred_check
        %p209 = pneg %p81
      $region18: #{_lambda_.7} parent=11 // pred_check_branch
        %211 = sbr.rel (%p209) target = $region20
      $region19: #{_lambda_.7} parent=11 // pred_region
        _
      $region20: #{_lambda_.7} parent=11 // pred_fallthru
        _
      // Predicated region
      $region21: #{_lambda_.7} parent=11 // pred_check
        %p212 = pneg %p102
      $region22: #{_lambda_.7} parent=11 // pred_check_branch
        %214 = sbr.rel (%p212) target = $region24
      $region23: #{_lambda_.7} parent=11 // pred_region
        _
      $region24: #{_lambda_.7} parent=11 // pred_fallthru
        _
      // Predicated region
      $region25: #{_lambda_.7} parent=11 // pred_check
        %p215 = pneg %p123
      $region26: #{_lambda_.7} parent=11 // pred_check_branch
        %217 = sbr.rel (%p215) target = $region28
      $region27: #{_lambda_.7} parent=11 // pred_region
        _
      $region28: #{_lambda_.7} parent=11 // pred_fallthru
        _
      // Predicated region
      $region29: #{_lambda_.7} parent=11 // pred_check
        %p218 = pneg %p144
      $region30: #{_lambda_.7} parent=11 // pred_check_branch
        %220 = sbr.rel (%p218) target = $region32
      $region31: #{_lambda_.7} parent=11 // pred_region
        _
      $region32: #{_lambda_.7} parent=11 // pred_fallthru
        _
      // Predicated region
      $region33: #{_lambda_.7} parent=11 // pred_check
        %p221 = pneg %p165
      $region34: #{_lambda_.7} parent=11 // pred_check_branch
        %223 = sbr.rel (%p221) target = $region36
      $region35: #{_lambda_.7} parent=11 // pred_region
        _
      $region36: #{_lambda_.7} parent=11 // pred_fallthru
        _
    $region12: #{_lambda_.7} parent=5 // pred_fallthru
      _
    %p224 = scmp.lt.s32.totalorder %s13, 2
    // Predicated region
    $region37: #{_lambda_.7} parent=5 // pred_check
      %p225 = pneg %p224
    $region38: #{_lambda_.7} parent=5 // pred_check_branch
      %227 = sbr.rel (%p225) target = $region40
    $region39: #{_lambda_.7} parent=5 // pred_region
      // Predicated region
      $region41: #{_lambda_.7} parent=39 // pred_check
        %p228 = pneg %p33
      $region42: #{_lambda_.7} parent=39 // pred_check_branch
        %230 = sbr.rel (%p228) target = $region44
      $region43: #{_lambda_.7} parent=39 // pred_region
        %p231 = scmp.lt.s32.totalorder %s13, 1
        %s232 = scalar_select %p231, %s13, 1
        %s233 = smul.addr %s232, 8
        %s234 = scalar_lea.vmem %s0, %s233
      $region44: #{_lambda_.7} parent=39 // pred_fallthru
        _
    $region40: #{_lambda_.7} parent=5 // pred_fallthru
      _
    %p235 = scmp.le.s32.totalorder 1, %s13
    %p236 = scmp.lt.s32.totalorder %s13, 3
    %p237 = pnand %p235, %p236
    %p238 = pneg %p237
    // Predicated region
    $region45: #{_lambda_.7} parent=5 // pred_check
      _
    $region46: #{_lambda_.7} parent=5 // pred_check_branch
      %240 = sbr.rel (%p237) target = $region48
    $region47: #{_lambda_.7} parent=5 // pred_region
      %s241 = ssub.s32 %s13, 1
      %p242 = scmp.lt.s32.totalorder %s18, 1
      %s243 = scalar_select %p242, %s18, 1
      %s244 = smul.addr %s243, 8
      %s245 = scalar_lea.vmem %s0, %s244
      %p246 = pneg %p39
      %p247 = pneg %p36
      %p248 = pneg %p60
      %p249 = pneg %p57
      %p250 = pneg %p81
      %p251 = pneg %p78
      %p252 = pneg %p102
      %p253 = pneg %p99
      %p254 = pneg %p123
      %p255 = pneg %p120
      %p256 = pneg %p144
      %p257 = pneg %p141
      %p258 = pneg %p165
      %p259 = pneg %p162
      %p260 = pneg %p191
      %p261 = pneg %p188
      %p262 = scmp.lt.s32.totalorder %s18, 1
      %s263 = scalar_select %p262, %s18, 1
      %s264 = smul.addr %s263, 8
      %s265 = scalar_lea.vmem %s7, %s264
      %p266 = scmp.lt.s32.totalorder %s18, 1
      %s267 = scalar_select %p266, %s18, 1
      %s268 = smul.addr %s267, 8
      %s269 = scalar_lea.vmem %s0, %s268
      %p270 = scmp.lt.s32.totalorder %s18, 1
      %s271 = scalar_select %p270, %s18, 1
      %s272 = smul.addr %s271, 8
      %s273 = scalar_lea.vmem %s7, %s272
      %v275 = vld [vmem:[%s269] sm:$0xff]
      %v276 = vld [vmem:[%s1] sm:$0x1]
      %v277 = vld [vmem:[%s2] sm:$0x1]
      %vm278 = vcmask 523264
      %v279 = vsel %vm278, %v275, 0.0
      %280 = vadd.xlane.f32.xlu0 %v279
      %v281 = vpop.xlane.xlu0 %280
      %v282 = vrcp.pop 64.0
      %v283 = vmul.f32 %v281, %v282
      %v284 = vsub.f32 %v275, %v283
      %v285 = vmul.f32 %v284, %v284
      %v286 = vsel %vm278, %v285, 0.0
      %287 = vadd.xlane.f32.xlu0 %v286
      %v288 = vpop.xlane.xlu0 %287
      %v289 = vmul.f32 %v288, %v282
      %v290 = vadd.f32 %v289, 1e-05
      %v291 = vrsqrt.pop %v290
      %v292 = vmul.f32 %v284, %v291
      %v294 = vlaneseq
      %v295 = vshrl.u32 %v294, 7
      %v296 = vsub.s32 0, %v295
      %v297 = vrot.slane %v276, %v296
      %v299 = vmul.f32 %v292, %v297
      %v301 = vlaneseq
      %v302 = vshrl.u32 %v301, 7
      %v303 = vsub.s32 0, %v302
      %v304 = vrot.slane %v277, %v303
      %v306 = vadd.f32 %v299, %v304
      %v307 = vpack.c.bf16 %v306, %v306
      %v308 = vld [vmem:[%s3] sm:$0xff]
      %v309 = vld [vmem:[%s3 + $0x8] sm:$0xff]
      %v310 = vld [vmem:[%s3 + $0x10] sm:$0xff]
      %v311 = vld [vmem:[%s3 + $0x18] sm:$0xff]
      %v312 = vld [vmem:[%s3 + $0x20] sm:$0xff]
      %v313 = vld [vmem:[%s3 + $0x28] sm:$0xff]
      %v314 = vld [vmem:[%s3 + $0x30] sm:$0xff]
      %v315 = vld [vmem:[%s3 + $0x38] sm:$0xff]
      %v316 = vld [vmem:[%s3 + $0x40] sm:$0xff]
      %v317 = vld [vmem:[%s3 + $0x48] sm:$0xff]
      %v318 = vld [vmem:[%s3 + $0x50] sm:$0xff]
      %v319 = vld [vmem:[%s3 + $0x58] sm:$0xff]
      %v320 = vld [vmem:[%s3 + $0x60] sm:$0xff]
      %v321 = vld [vmem:[%s3 + $0x68] sm:$0xff]
      %v322 = vld [vmem:[%s3 + $0x70] sm:$0xff]
      %v323 = vld [vmem:[%s3 + $0x78] sm:$0xff]
      %v324 = vld [vmem:[%s4] sm:$0xf]
      %v326 = vlaneseq
      %v327 = vshrl.u32 %v326, 7
      %v328 = vsub.s32 0, %v327
      %v329 = vrot.slane %v324, %v328
      %v330 = vlaneseq
      %v331 = vshrl.u32 %v330, 7
      %v332 = vsub.s32 1, %v331
      %v333 = vrot.slane %v324, %v332
      %v334 = vlaneseq
      %v335 = vshrl.u32 %v334, 7
      %v336 = vsub.s32 2, %v335
      %v337 = vrot.slane %v324, %v336
      %v338 = vlaneseq
      %v339 = vshrl.u32 %v338, 7
      %v340 = vsub.s32 3, %v339
      %v341 = vrot.slane %v324, %v340
      %v362 = vunpack.c.l.b16 %v308
      %v363 = vunpack.c.h.b16 %v308
      %v364 = vunpack.c.l.b16 %v309
      %v365 = vunpack.c.h.b16 %v309
      %v366 = vunpack.c.l.b16 %v310
      %v367 = vunpack.c.h.b16 %v310
      %v368 = vunpack.c.l.b16 %v311
      %v369 = vunpack.c.h.b16 %v311
      %v370 = vunpack.c.l.b16 %v312
      %v371 = vunpack.c.h.b16 %v312
      %v372 = vunpack.c.l.b16 %v313
      %v373 = vunpack.c.h.b16 %v313
      %v374 = vunpack.c.l.b16 %v314
      %v375 = vunpack.c.h.b16 %v314
      %v376 = vunpack.c.l.b16 %v315
      %v377 = vunpack.c.h.b16 %v315
      %v378 = vunpack.c.l.b16 %v316
      %v379 = vunpack.c.h.b16 %v316
      %v380 = vunpack.c.l.b16 %v317
      %v381 = vunpack.c.h.b16 %v317
      %v382 = vunpack.c.l.b16 %v318
      %v383 = vunpack.c.h.b16 %v318
      %v384 = vunpack.c.l.b16 %v319
      %v385 = vunpack.c.h.b16 %v319
      %v386 = vunpack.c.l.b16 %v320
      %v387 = vunpack.c.h.b16 %v320
      %v388 = vunpack.c.l.b16 %v321
      %v389 = vunpack.c.h.b16 %v321
      %v390 = vunpack.c.l.b16 %v322
      %v391 = vunpack.c.h.b16 %v322
      %v392 = vunpack.c.l.b16 %v323
      %v393 = vunpack.c.h.b16 %v323
      %v394 = vpack.c.b16 %v366, %v362
      %v395 = vpack.c.b16 %v367, %v363
      %v396 = vpack.c.b16 %v368, %v364
      %v397 = vpack.c.b16 %v369, %v365
      %v398 = vpack.c.b16 %v374, %v370
      %v399 = vpack.c.b16 %v375, %v371
      %v400 = vpack.c.b16 %v376, %v372
      %v401 = vpack.c.b16 %v377, %v373
      %v402 = vpack.c.b16 %v382, %v378
      %v403 = vpack.c.b16 %v383, %v379
      %v404 = vpack.c.b16 %v384, %v380
      %v405 = vpack.c.b16 %v385, %v381
      %v406 = vpack.c.b16 %v390, %v386
      %v407 = vpack.c.b16 %v391, %v387
      %v408 = vpack.c.b16 %v392, %v388
      %v409 = vpack.c.b16 %v393, %v389
      %v427 = vsel %vm278, %v307, 0
      %429 = vmatprep.subr.bf16.mxu0 %v395
      %430 = vmatpush1.bf16.msra.mxu0 %v394
      %431 = vmatprep.subr.bf16.mxu0 %v399
      %432 = vmatpush1.bf16.msra.mxu0 %v398
      %433 = vmatprep.subr.bf16.mxu0 %v403
      %434 = vmatpush1.bf16.msra.mxu0 %v402
      %435 = vmatprep.subr.bf16.mxu0 %v407
      %436 = vmatpush1.bf16.msra.mxu0 %v406
      %437 = vmatprep.subr.bf16.mxu0 0
      %438 = vmatpush1.bf16.msra.mxu0 0
      %439 = vmatprep.subr.bf16.mxu0 0
      %440 = vmatpush1.bf16.msra.mxu0 0
      %441 = vmatprep.subr.bf16.mxu0 0
      %442 = vmatpush1.bf16.msra.mxu0 0
      %443 = vmatprep.subr.bf16.mxu0 0
      %444 = vmatpush1.bf16.msra.mxu0 0
      %445 = vmatprep.subr.bf16.mxu0 0
      %446 = vmatpush1.bf16.msra.mxu0 0
      %447 = vmatprep.subr.bf16.mxu0 0
      %448 = vmatpush1.bf16.msra.mxu0 0
      %449 = vmatprep.subr.bf16.mxu0 0
      %450 = vmatpush1.bf16.msra.mxu0 0
      %451 = vmatprep.subr.bf16.mxu0 0
      %452 = vmatpush1.bf16.msra.mxu0 0
      %453 = vmatprep.subr.bf16.mxu0 0
      %454 = vmatpush1.bf16.msra.mxu0 0
      %455 = vmatprep.subr.bf16.mxu0 0
      %456 = vmatpush1.bf16.msra.mxu0 0
      %457 = vmatprep.subr.bf16.mxu0 0
      %458 = vmatpush1.bf16.msra.mxu0 0
      %459 = vmatprep.subr.bf16.mxu0 0
      %460 = vmatpush1.bf16.msra.mxu0 0
      %461 = vmatprep.mubr.bf16.mxu0 0
      %462 = vmatmul.mubr.bf16.gmra.mrb[0].mxu0 %v427
      %v463 = vpop.f32.mrb[0].mxu0
      %v464 = vadd.f32 %v329, %v463
      %v465 = vpop.f32.mrb[0].mxu0
      %v466 = vadd.f32 %v333, %v465
      %v467 = vpop.f32.mrb[0].mxu0
      %v468 = vpop.f32.mrb[0].mxu0
      %469 = vdwg.mxu0
      %470 = vmatprep.subr.bf16.mxu0 %v397
      %471 = vmatpush1.bf16.msra.mxu0 %v396
      %472 = vmatprep.subr.bf16.mxu0 %v401
      %473 = vmatpush1.bf16.msra.mxu0 %v400
      %474 = vmatprep.subr.bf16.mxu0 %v405
      %475 = vmatpush1.bf16.msra.mxu0 %v404
      %476 = vmatprep.subr.bf16.mxu0 %v409
      %477 = vmatpush1.bf16.msra.mxu0 %v408
      %478 = vmatprep.subr.bf16.mxu0 0
      %479 = vmatpush1.bf16.msra.mxu0 0
      %480 = vmatprep.subr.bf16.mxu0 0
      %481 = vmatpush1.bf16.msra.mxu0 0
      %482 = vmatprep.subr.bf16.mxu0 0
      %483 = vmatpush1.bf16.msra.mxu0 0
      %484 = vmatprep.subr.bf16.mxu0 0
      %485 = vmatpush1.bf16.msra.mxu0 0
      %486 = vmatprep.subr.bf16.mxu0 0
      %487 = vmatpush1.bf16.msra.mxu0 0
      %488 = vmatprep.subr.bf16.mxu0 0
      %489 = vmatpush1.bf16.msra.mxu0 0
      %490 = vmatprep.subr.bf16.mxu0 0
      %491 = vmatpush1.bf16.msra.mxu0 0
      %492 = vmatprep.subr.bf16.mxu0 0
      %493 = vmatpush1.bf16.msra.mxu0 0
      %494 = vmatprep.subr.bf16.mxu0 0
      %495 = vmatpush1.bf16.msra.mxu0 0
      %496 = vmatprep.subr.bf16.mxu0 0
      %497 = vmatpush1.bf16.msra.mxu0 0
      %498 = vmatprep.subr.bf16.mxu0 0
      %499 = vmatpush1.bf16.msra.mxu0 0
      %500 = vmatprep.subr.bf16.mxu0 0
      %501 = vmatpush1.bf16.msra.mxu0 0
      %502 = vmatprep.mubr.bf16.mxu0 0
      %503 = vmatmul.mubr.bf16.gmra.mrb[0].mxu0 %v427
      %v504 = vpop.f32.mrb[0].mxu0
      %v505 = vadd.f32 %v337, %v504
      %v506 = vpop.f32.mrb[0].mxu0
      %v507 = vadd.f32 %v341, %v506
      %v508 = vpop.f32.mrb[0].mxu0
      %v509 = vpop.f32.mrb[0].mxu0
      %510 = vdwg.mxu0
      %v511 = vmul.f32 %v505, 0.5
      %v512 = vmul.f32 %v507, 0.5
      %v513 = vmul.f32 %v505, 0.70710677
      %v514 = vmul.f32 %v507, 0.70710677
      %v515 = verf.f32.pop %v513
      %v516 = verf.f32.pop %v514
      %v517 = vadd.f32 %v515, 1.0
      %v518 = vadd.f32 %v516, 1.0
      %v519 = vmul.f32 %v511, %v517
      %v520 = vmul.f32 %v512, %v518
      %v521 = vmul.f32 %v464, %v519
      %v522 = vmul.f32 %v466, %v520
      %v523 = vpack.c.bf16 %v521, %v521
      %v524 = vpack.c.bf16 %v522, %v522
      %v525 = vld [vmem:[%s5] sm:$0xf]
      %v526 = vld [vmem:[%s5 + $0x4] sm:$0xf]
      %v527 = vld [vmem:[%s5 + $0x8] sm:$0xf]
      %v528 = vld [vmem:[%s5 + $0xc] sm:$0xf]
      %v529 = vld [vmem:[%s5 + $0x10] sm:$0xf]
      %v530 = vld [vmem:[%s5 + $0x14] sm:$0xf]
      %v531 = vld [vmem:[%s5 + $0x18] sm:$0xf]
      %v532 = vld [vmem:[%s5 + $0x1c] sm:$0xf]
      %v533 = vld [vmem:[%s5 + $0x20] sm:$0xf]
      %v534 = vld [vmem:[%s5 + $0x24] sm:$0xf]
      %v535 = vld [vmem:[%s5 + $0x28] sm:$0xf]
      %v536 = vld [vmem:[%s5 + $0x2c] sm:$0xf]
      %v537 = vld [vmem:[%s5 + $0x30] sm:$0xf]
      %v538 = vld [vmem:[%s5 + $0x34] sm:$0xf]
      %v539 = vld [vmem:[%s5 + $0x38] sm:$0xf]
      %v540 = vld [vmem:[%s5 + $0x3c] sm:$0xf]
      %v541 = vld [vmem:[%s5 + $0x40] sm:$0xf]
      %v542 = vld [vmem:[%s5 + $0x44] sm:$0xf]
      %v543 = vld [vmem:[%s5 + $0x48] sm:$0xf]
      %v544 = vld [vmem:[%s5 + $0x4c] sm:$0xf]
      %v545 = vld [vmem:[%s5 + $0x50] sm:$0xf]
      %v546 = vld [vmem:[%s5 + $0x54] sm:$0xf]
      %v547 = vld [vmem:[%s5 + $0x58] sm:$0xf]
      %v548 = vld [vmem:[%s5 + $0x5c] sm:$0xf]
      %v549 = vld [vmem:[%s5 + $0x60] sm:$0xf]
      %v550 = vld [vmem:[%s5 + $0x64] sm:$0xf]
      %v551 = vld [vmem:[%s5 + $0x68] sm:$0xf]
      %v552 = vld [vmem:[%s5 + $0x6c] sm:$0xf]
      %v553 = vld [vmem:[%s5 + $0x70] sm:$0xf]
      %v554 = vld [vmem:[%s5 + $0x74] sm:$0xf]
      %v555 = vld [vmem:[%s5 + $0x78] sm:$0xf]
      %v556 = vld [vmem:[%s5 + $0x7c] sm:$0xf]
      %v557 = vld [vmem:[%s6] sm:$0x1]
      %v559 = vlaneseq
      %v560 = vshrl.u32 %v559, 7
      %v561 = vsub.s32 0, %v560
      %v562 = vrot.slane %v557, %v561
      %v596 = vunpack.c.l.b16 %v525
      %v597 = vunpack.c.l.b16 %v526
      %v598 = vunpack.c.l.b16 %v527
      %v599 = vunpack.c.l.b16 %v528
      %v600 = vunpack.c.l.b16 %v529
      %v601 = vunpack.c.l.b16 %v530
      %v602 = vunpack.c.l.b16 %v531
      %v603 = vunpack.c.l.b16 %v532
      %v604 = vunpack.c.l.b16 %v533
      %v605 = vunpack.c.l.b16 %v534
      %v606 = vunpack.c.l.b16 %v535
      %v607 = vunpack.c.l.b16 %v536
      %v608 = vunpack.c.l.b16 %v537
      %v609 = vunpack.c.l.b16 %v538
      %v610 = vunpack.c.l.b16 %v539
      %v611 = vunpack.c.l.b16 %v540
      %v612 = vunpack.c.l.b16 %v541
      %v613 = vunpack.c.l.b16 %v542
      %v614 = vunpack.c.l.b16 %v543
      %v615 = vunpack.c.l.b16 %v544
      %v616 = vunpack.c.l.b16 %v545
      %v617 = vunpack.c.l.b16 %v546
      %v618 = vunpack.c.l.b16 %v547
      %v619 = vunpack.c.l.b16 %v548
      %v620 = vunpack.c.l.b16 %v549
      %v621 = vunpack.c.l.b16 %v550
      %v622 = vunpack.c.l.b16 %v551
      %v623 = vunpack.c.l.b16 %v552
      %v624 = vunpack.c.l.b16 %v553
      %v625 = vunpack.c.l.b16 %v554
      %v626 = vunpack.c.l.b16 %v555
      %v627 = vunpack.c.l.b16 %v556
      %v628 = vpack.c.b16 %v597, %v596
      %v629 = vpack.c.b16 %v599, %v598
      %v630 = vpack.c.b16 %v601, %v600
      %v631 = vpack.c.b16 %v603, %v602
      %v632 = vpack.c.b16 %v605, %v604
      %v633 = vpack.c.b16 %v607, %v606
      %v634 = vpack.c.b16 %v609, %v608
      %v635 = vpack.c.b16 %v611, %v610
      %v636 = vpack.c.b16 %v613, %v612
      %v637 = vpack.c.b16 %v615, %v614
      %v638 = vpack.c.b16 %v617, %v616
      %v639 = vpack.c.b16 %v619, %v618
      %v640 = vpack.c.b16 %v621, %v620
      %v641 = vpack.c.b16 %v623, %v622
      %v642 = vpack.c.b16 %v625, %v624
      %v643 = vpack.c.b16 %v627, %v626
      %660 = vmatprep.subr.bf16.mxu0 0
      %661 = vmatpush1.bf16.msra.mxu0 %v628
      %662 = vmatprep.subr.bf16.mxu0 0
      %663 = vmatpush1.bf16.msra.mxu0 %v629
      %664 = vmatprep.subr.bf16.mxu0 0
      %665 = vmatpush1.bf16.msra.mxu0 %v630
      %666 = vmatprep.subr.bf16.mxu0 0
      %667 = vmatpush1.bf16.msra.mxu0 %v631
      %668 = vmatprep.subr.bf16.mxu0 0
      %669 = vmatpush1.bf16.msra.mxu0 %v632
      %670 = vmatprep.subr.bf16.mxu0 0
      %671 = vmatpush1.bf16.msra.mxu0 %v633
      %672 = vmatprep.subr.bf16.mxu0 0
      %673 = vmatpush1.bf16.msra.mxu0 %v634
      %674 = vmatprep.subr.bf16.mxu0 0
      %675 = vmatpush1.bf16.msra.mxu0 %v635
      %676 = vmatprep.subr.bf16.mxu0 0
      %677 = vmatpush1.bf16.msra.mxu0 %v636
      %678 = vmatprep.subr.bf16.mxu0 0
      %679 = vmatpush1.bf16.msra.mxu0 %v637
      %680 = vmatprep.subr.bf16.mxu0 0
      %681 = vmatpush1.bf16.msra.mxu0 %v638
      %682 = vmatprep.subr.bf16.mxu0 0
      %683 = vmatpush1.bf16.msra.mxu0 %v639
      %684 = vmatprep.subr.bf16.mxu0 0
      %685 = vmatpush1.bf16.msra.mxu0 %v640
      %686 = vmatprep.subr.bf16.mxu0 0
      %687 = vmatpush1.bf16.msra.mxu0 %v641
      %688 = vmatprep.subr.bf16.mxu0 0
      %689 = vmatpush1.bf16.msra.mxu0 %v642
      %690 = vmatprep.subr.bf16.mxu0 0
      %691 = vmatpush1.bf16.msra.mxu0 %v643
      %692 = vmatprep.mubr.bf16.mxu0 %v524
      %693 = vmatmul.mubr.bf16.gmra.mrb[0].mxu0 %v523
      %v694 = vpop.f32.mrb[0].mxu0
      %v695 = vadd.f32 %v562, %v694
      %v696 = vpop.f32.mrb[0].mxu0
      %v697 = vpop.f32.mrb[0].mxu0
      %v698 = vpop.f32.mrb[0].mxu0
      %699 = vdwg.mxu0
      %v700 = vadd.f32 %v695, %v275
      %701 = vst.msk [vmem:[%s273] sm:$0xff] %vm278, %v700
      %p702 = scmp.lt.s32.totalorder %s18, 1
      %s703 = scalar_select %p702, %s18, 1
      %s704 = smul.addr %s703, 8
      %s705 = scalar_lea.vmem %s7, %s704
      // Predicated region
      $region49: #{_lambda_.7} parent=47 // pred_check
        %p706 = pneg %p188
      $region50: #{_lambda_.7} parent=47 // pred_check_branch
        %708 = sbr.rel (%p706) target = $region52
      $region51: #{_lambda_.7} parent=47 // pred_region
        _
      $region52: #{_lambda_.7} parent=47 // pred_fallthru
        _
    $region48: #{_lambda_.7} parent=5 // pred_fallthru
      _
    %p709 = scmp.le.s32.totalorder 2, %s13
    // Predicated region
    $region53: #{_lambda_.7} parent=5 // pred_check
      %p710 = pneg %p709
    $region54: #{_lambda_.7} parent=5 // pred_check_branch
      %712 = sbr.rel (%p710) target = $region56
    $region55: #{_lambda_.7} parent=5 // pred_region
      %s713 = ssub.s32 %s13, 2
      // Predicated region
      $region57: #{_lambda_.7} parent=55 // pred_check
        %p714 = pneg %p194
      $region58: #{_lambda_.7} parent=55 // pred_check_branch
        %716 = sbr.rel (%p714) target = $region60
      $region59: #{_lambda_.7} parent=55 // pred_region
        %p717 = scmp.lt.s32.totalorder %s19, 1
        %s718 = scalar_select %p717, %s19, 1
        %s719 = smul.addr %s718, 8
        %s720 = scalar_lea.vmem %s7, %s719
      $region60: #{_lambda_.7} parent=55 // pred_fallthru
        _
    $region56: #{_lambda_.7} parent=5 // pred_fallthru
      _
  $region6: #{_lambda_.7} parent=0 // loop_footer
    %s17 = sadd.s32 1, %s13
  $region7: #{_lambda_.7} parent=0 // loop_footer_branch
    %12 = sbr.rel target = $region3
  $region8: #{_lambda_.7} parent=0 // loop_exit
    _

// kernel: _lambda_.8
$region0: #{_lambda_.8}
  #allocation0 [shape = 'u32[]', space=smem, size = 0x4, offset = 0x4, fixed_abs, tag = 'smem constant byte address 0x4 - core index']
  #allocation1 [shape = 'u32[144,128]{1,0:T(1,128)}', space=vmem, size = 0x12000, scoped, tag = 'internal scratch']
  %s0 = inlined_call_operand.vmem [shape: f32[2,8,64], index: 0, kind: input, shape index: {}]
  %s1 = inlined_call_operand.vmem [shape: f32[1,64], index: 1, kind: input, shape index: {}]
  %s2 = inlined_call_operand.vmem [shape: f32[1,64], index: 2, kind: input, shape index: {}]
  %s3 = inlined_call_operand.vmem [shape: bf16[64,192], index: 3, kind: input, shape index: {}]
  %s4 = inlined_call_operand.vmem [shape: bf16[64,64], index: 4, kind: input, shape index: {}]
  %s5 = inlined_call_operand.vmem [shape: f32[1,64], index: 5, kind: input, shape index: {}]
  %s6 = inlined_call_operand.vmem [shape: f32[2,8,64], index: 6, kind: output, shape index: {}]
  %s7 = sld [smem:[#allocation0]]
  $region57: #{_lambda_.8} parent=0
    _
  %s9 = ssub.s32 1, %s7
  %s10 = scalar_select 0, %s9, %s7
  loop: start=0, step=1, limit=4
  $region2: #{_lambda_.8} parent=0 // loop_pre_header
    _
  $region3: #{_lambda_.8} parent=0 // loop_header
    %s12 = sphi 0, %s16
    %p13 = scmp.ge.s32.totalorder %s12, 4
    %s22 = sphi 0, %s24
    %s25 = sphi 0, %s22
    %s26 = sphi 0, %s25
    %s42 = sphi 0, %s26
    %s46 = sphi 0, %s46
    %s48 = sphi 0, %s46
    %s49 = sphi 0, %s48
    %s63 = sphi 0, %s49
    %s67 = sphi 0, %s67
    %s69 = sphi 0, %s67
    %s70 = sphi 0, %s69
    %s84 = sphi 0, %s70
    %s88 = sphi 0, %s88
    %s90 = sphi 0, %s88
    %s91 = sphi 0, %s90
    %s105 = sphi 0, %s91
    %s109 = sphi 0, %s109
    %s111 = sphi 0, %s109
    %s112 = sphi 0, %s111
    %s126 = sphi 0, %s112
    %s130 = sphi 0, %s130
    %s132 = sphi 0, %s130
    %s133 = sphi 0, %s132
    %s147 = sphi 0, %s133
    %s153 = sphi 0, %s155
    %s156 = sphi 0, %s153
    %s157 = sphi 0, %s156
    %s173 = sphi 0, %s157
  $region4: #{_lambda_.8} parent=0 // loop_header_branch
    %15 = sbr.rel (%p13) target = $region8
  $region5: #{_lambda_.8} parent=0 // loop_body
    %s17 = ssub.s32 %s12, 1
    %s18 = ssub.s32 %s12, 2
    %s19 = sadd.s32 %s12, 1
    %s20 = ssub.s32 %s12, %s19
    %p21 = scmp.eq.s32.totalorder %s20, 0
    %s23 = sadd.s32 %s22, 1
    %s24 = scalar_select %p21, %s22, %s23
    %p27 = pneg %p21
    %p28 = scmp.eq.s32.totalorder %s12, 1
    %p29 = por %p27, %p28
    %p30 = scmp.ne.s32.totalorder %s22, %s25
    %p31 = scmp.eq.s32.totalorder %s12, 0
    %p32 = por %p30, %p31
    %p33 = scmp.ne.s32.totalorder %s22, %s25
    %p34 = scmp.eq.s32.totalorder %s17, 1
    %p35 = por %p33, %p34
    %p36 = scmp.ne.s32.totalorder %s25, %s26
    %p37 = scmp.eq.s32.totalorder %s17, 0
    %p38 = por %p36, %p37
    %p39 = scmp.ne.s32.totalorder %s25, %s26
    %p40 = scmp.eq.s32.totalorder %s18, 1
    %p41 = por %p39, %p40
    %p43 = scmp.ne.s32.totalorder %s26, %s42
    %p44 = scmp.eq.s32.totalorder %s18, 0
    %p45 = por %p43, %p44
    %s47 = sadd.s32 %s46, 1
    %p50 = scmp.eq.s32.totalorder %s12, 1
    %p51 = scmp.ne.s32.totalorder %s46, %s48
    %p52 = scmp.eq.s32.totalorder %s12, 0
    %p53 = por %p51, %p52
    %p54 = scmp.ne.s32.totalorder %s46, %s48
    %p55 = scmp.eq.s32.totalorder %s17, 1
    %p56 = por %p54, %p55
    %p57 = scmp.ne.s32.totalorder %s48, %s49
    %p58 = scmp.eq.s32.totalorder %s17, 0
    %p59 = por %p57, %p58
    %p60 = scmp.ne.s32.totalorder %s48, %s49
    %p61 = scmp.eq.s32.totalorder %s18, 1
    %p62 = por %p60, %p61
    %p64 = scmp.ne.s32.totalorder %s49, %s63
    %p65 = scmp.eq.s32.totalorder %s18, 0
    %p66 = por %p64, %p65
    %s68 = sadd.s32 %s67, 1
    %p71 = scmp.eq.s32.totalorder %s12, 1
    %p72 = scmp.ne.s32.totalorder %s67, %s69
    %p73 = scmp.eq.s32.totalorder %s12, 0
    %p74 = por %p72, %p73
    %p75 = scmp.ne.s32.totalorder %s67, %s69
    %p76 = scmp.eq.s32.totalorder %s17, 1
    %p77 = por %p75, %p76
    %p78 = scmp.ne.s32.totalorder %s69, %s70
    %p79 = scmp.eq.s32.totalorder %s17, 0
    %p80 = por %p78, %p79
    %p81 = scmp.ne.s32.totalorder %s69, %s70
    %p82 = scmp.eq.s32.totalorder %s18, 1
    %p83 = por %p81, %p82
    %p85 = scmp.ne.s32.totalorder %s70, %s84
    %p86 = scmp.eq.s32.totalorder %s18, 0
    %p87 = por %p85, %p86
    %s89 = sadd.s32 %s88, 1
    %p92 = scmp.eq.s32.totalorder %s12, 1
    %p93 = scmp.ne.s32.totalorder %s88, %s90
    %p94 = scmp.eq.s32.totalorder %s12, 0
    %p95 = por %p93, %p94
    %p96 = scmp.ne.s32.totalorder %s88, %s90
    %p97 = scmp.eq.s32.totalorder %s17, 1
    %p98 = por %p96, %p97
    %p99 = scmp.ne.s32.totalorder %s90, %s91
    %p100 = scmp.eq.s32.totalorder %s17, 0
    %p101 = por %p99, %p100
    %p102 = scmp.ne.s32.totalorder %s90, %s91
    %p103 = scmp.eq.s32.totalorder %s18, 1
    %p104 = por %p102, %p103
    %p106 = scmp.ne.s32.totalorder %s91, %s105
    %p107 = scmp.eq.s32.totalorder %s18, 0
    %p108 = por %p106, %p107
    %s110 = sadd.s32 %s109, 1
    %p113 = scmp.eq.s32.totalorder %s12, 1
    %p114 = scmp.ne.s32.totalorder %s109, %s111
    %p115 = scmp.eq.s32.totalorder %s12, 0
    %p116 = por %p114, %p115
    %p117 = scmp.ne.s32.totalorder %s109, %s111
    %p118 = scmp.eq.s32.totalorder %s17, 1
    %p119 = por %p117, %p118
    %p120 = scmp.ne.s32.totalorder %s111, %s112
    %p121 = scmp.eq.s32.totalorder %s17, 0
    %p122 = por %p120, %p121
    %p123 = scmp.ne.s32.totalorder %s111, %s112
    %p124 = scmp.eq.s32.totalorder %s18, 1
    %p125 = por %p123, %p124
    %p127 = scmp.ne.s32.totalorder %s112, %s126
    %p128 = scmp.eq.s32.totalorder %s18, 0
    %p129 = por %p127, %p128
    %s131 = sadd.s32 %s130, 1
    %p134 = scmp.eq.s32.totalorder %s12, 1
    %p135 = scmp.ne.s32.totalorder %s130, %s132
    %p136 = scmp.eq.s32.totalorder %s12, 0
    %p137 = por %p135, %p136
    %p138 = scmp.ne.s32.totalorder %s130, %s132
    %p139 = scmp.eq.s32.totalorder %s17, 1
    %p140 = por %p138, %p139
    %p141 = scmp.ne.s32.totalorder %s132, %s133
    %p142 = scmp.eq.s32.totalorder %s17, 0
    %p143 = por %p141, %p142
    %p144 = scmp.ne.s32.totalorder %s132, %s133
    %p145 = scmp.eq.s32.totalorder %s18, 1
    %p146 = por %p144, %p145
    %p148 = scmp.ne.s32.totalorder %s133, %s147
    %p149 = scmp.eq.s32.totalorder %s18, 0
    %p150 = por %p148, %p149
    %s151 = ssub.s32 %s12, %s19
    %p152 = scmp.eq.s32.totalorder %s151, 0
    %s154 = sadd.s32 %s153, 1
    %s155 = scalar_select %p152, %s153, %s154
    %p158 = pneg %p152
    %p159 = scmp.eq.s32.totalorder %s12, 1
    %p160 = por %p158, %p159
    %p161 = scmp.ne.s32.totalorder %s153, %s156
    %p162 = scmp.eq.s32.totalorder %s12, 0
    %p163 = por %p161, %p162
    %p164 = scmp.ne.s32.totalorder %s153, %s156
    %p165 = scmp.eq.s32.totalorder %s17, 1
    %p166 = por %p164, %p165
    %p167 = scmp.ne.s32.totalorder %s156, %s157
    %p168 = scmp.eq.s32.totalorder %s17, 0
    %p169 = por %p167, %p168
    %p170 = scmp.ne.s32.totalorder %s156, %s157
    %p171 = scmp.eq.s32.totalorder %s18, 1
    %p172 = por %p170, %p171
    %p174 = scmp.ne.s32.totalorder %s157, %s173
    %p175 = scmp.eq.s32.totalorder %s18, 0
    %p176 = por %p174, %p175
    %p177 = scmp.le.s32.totalorder 1, %s12
    %p178 = scmp.lt.s32.totalorder %s12, 3
    %p179 = pnand %p177, %p178
    %p180 = pneg %p179
    // Predicated region
    $region9: #{_lambda_.8} parent=5 // pred_check
      _
    $region10: #{_lambda_.8} parent=5 // pred_check_branch
      %182 = sbr.rel (%p179) target = $region12
    $region11: #{_lambda_.8} parent=5 // pred_region
      %s183 = ssub.s32 %s12, 1
      // Predicated region
      $region13: #{_lambda_.8} parent=11 // pred_check
        %p184 = pneg %p59
      $region14: #{_lambda_.8} parent=11 // pred_check_branch
        %186 = sbr.rel (%p184) target = $region16
      $region15: #{_lambda_.8} parent=11 // pred_region
        _
      $region16: #{_lambda_.8} parent=11 // pred_fallthru
        _
      // Predicated region
      $region17: #{_lambda_.8} parent=11 // pred_check
        %p187 = pneg %p80
      $region18: #{_lambda_.8} parent=11 // pred_check_branch
        %189 = sbr.rel (%p187) target = $region20
      $region19: #{_lambda_.8} parent=11 // pred_region
        _
      $region20: #{_lambda_.8} parent=11 // pred_fallthru
        _
      // Predicated region
      $region21: #{_lambda_.8} parent=11 // pred_check
        %p190 = pneg %p101
      $region22: #{_lambda_.8} parent=11 // pred_check_branch
        %192 = sbr.rel (%p190) target = $region24
      $region23: #{_lambda_.8} parent=11 // pred_region
        _
      $region24: #{_lambda_.8} parent=11 // pred_fallthru
        _
      // Predicated region
      $region25: #{_lambda_.8} parent=11 // pred_check
        %p193 = pneg %p122
      $region26: #{_lambda_.8} parent=11 // pred_check_branch
        %195 = sbr.rel (%p193) target = $region28
      $region27: #{_lambda_.8} parent=11 // pred_region
        _
      $region28: #{_lambda_.8} parent=11 // pred_fallthru
        _
      // Predicated region
      $region29: #{_lambda_.8} parent=11 // pred_check
        %p196 = pneg %p143
      $region30: #{_lambda_.8} parent=11 // pred_check_branch
        %198 = sbr.rel (%p196) target = $region32
      $region31: #{_lambda_.8} parent=11 // pred_region
        _
      $region32: #{_lambda_.8} parent=11 // pred_fallthru
        _
    $region12: #{_lambda_.8} parent=5 // pred_fallthru
      _
    %p199 = scmp.lt.s32.totalorder %s12, 2
    // Predicated region
    $region33: #{_lambda_.8} parent=5 // pred_check
      %p200 = pneg %p199
    $region34: #{_lambda_.8} parent=5 // pred_check_branch
      %202 = sbr.rel (%p200) target = $region36
    $region35: #{_lambda_.8} parent=5 // pred_region
      // Predicated region
      $region37: #{_lambda_.8} parent=35 // pred_check
        %p203 = pneg %p32
      $region38: #{_lambda_.8} parent=35 // pred_check_branch
        %205 = sbr.rel (%p203) target = $region40
      $region39: #{_lambda_.8} parent=35 // pred_region
        %p206 = scmp.lt.s32.totalorder %s12, 1
        %s207 = scalar_select %p206, %s12, 1
        %s208 = smul.addr %s207, 8
        %s209 = scalar_lea.vmem %s0, %s208
      $region40: #{_lambda_.8} parent=35 // pred_fallthru
        _
    $region36: #{_lambda_.8} parent=5 // pred_fallthru
      _
    %p210 = scmp.le.s32.totalorder 1, %s12
    %p211 = scmp.lt.s32.totalorder %s12, 3
    %p212 = pnand %p210, %p211
    %p213 = pneg %p212
    // Predicated region
    $region41: #{_lambda_.8} parent=5 // pred_check
      _
    $region42: #{_lambda_.8} parent=5 // pred_check_branch
      %215 = sbr.rel (%p212) target = $region44
    $region43: #{_lambda_.8} parent=5 // pred_region
      %s216 = ssub.s32 %s12, 1
      %p217 = scmp.lt.s32.totalorder %s17, 1
      %s218 = scalar_select %p217, %s17, 1
      %s219 = smul.addr %s218, 8
      %s220 = scalar_lea.vmem %s0, %s219
      %p221 = pneg %p38
      %p222 = pneg %p35
      %p223 = pneg %p59
      %p224 = pneg %p56
      %p225 = pneg %p80
      %p226 = pneg %p77
      %p227 = pneg %p101
      %p228 = pneg %p98
      %p229 = pneg %p122
      %p230 = pneg %p119
      %p231 = pneg %p143
      %p232 = pneg %p140
      %p233 = pneg %p169
      %p234 = pneg %p166
      %p235 = scmp.lt.s32.totalorder %s17, 1
      %s236 = scalar_select %p235, %s17, 1
      %s237 = smul.addr %s236, 8
      %s238 = scalar_lea.vmem %s6, %s237
      %p239 = scmp.lt.s32.totalorder %s17, 1
      %s240 = scalar_select %p239, %s17, 1
      %s241 = smul.addr %s240, 8
      %s242 = scalar_lea.vmem %s0, %s241
      %p243 = scmp.lt.s32.totalorder %s17, 1
      %s244 = scalar_select %p243, %s17, 1
      %s245 = smul.addr %s244, 8
      %s246 = scalar_lea.vmem %s6, %s245
      %v248 = vld [vmem:[%s242] sm:$0xff]
      %v249 = vld [vmem:[%s1] sm:$0x1]
      %v250 = vld [vmem:[%s2] sm:$0x1]
      %vm251 = vcmask 523264
      %v252 = vsel %vm251, %v248, 0.0
      %253 = vadd.xlane.f32.xlu0 %v252
      %v254 = vpop.xlane.xlu0 %253
      %v255 = vrcp.pop 64.0
      %v256 = vmul.f32 %v254, %v255
      %v257 = vsub.f32 %v248, %v256
      %v258 = vmul.f32 %v257, %v257
      %v259 = vsel %vm251, %v258, 0.0
      %260 = vadd.xlane.f32.xlu0 %v259
      %v261 = vpop.xlane.xlu0 %260
      %v262 = vmul.f32 %v261, %v255
      %v263 = vadd.f32 %v262, 1e-05
      %v264 = vrsqrt.pop %v263
      %v265 = vmul.f32 %v257, %v264
      %v267 = vlaneseq
      %v268 = vshrl.u32 %v267, 7
      %v269 = vsub.s32 0, %v268
      %v270 = vrot.slane %v249, %v269
      %v272 = vmul.f32 %v265, %v270
      %v274 = vlaneseq
      %v275 = vshrl.u32 %v274, 7
      %v276 = vsub.s32 0, %v275
      %v277 = vrot.slane %v250, %v276
      %v279 = vadd.f32 %v272, %v277
      %v280 = vpack.c.bf16 %v279, %v279
      %v281 = vld [vmem:[%s3] sm:$0xff]
      %v282 = vld [vmem:[%s3 + $0x8] sm:$0xff]
      %v283 = vld [vmem:[%s3 + $0x10] sm:$0xff]
      %v284 = vld [vmem:[%s3 + $0x18] sm:$0xff]
      %v285 = vld [vmem:[%s3 + $0x20] sm:$0xff]
      %v286 = vld [vmem:[%s3 + $0x28] sm:$0xff]
      %v287 = vld [vmem:[%s3 + $0x30] sm:$0xff]
      %v288 = vld [vmem:[%s3 + $0x38] sm:$0xff]
      %v297 = vunpack.c.l.b16 %v281
      %v298 = vunpack.c.h.b16 %v281
      %v299 = vunpack.c.l.b16 %v282
      %v300 = vunpack.c.h.b16 %v282
      %v301 = vunpack.c.l.b16 %v283
      %v302 = vunpack.c.h.b16 %v283
      %v303 = vunpack.c.l.b16 %v284
      %v304 = vunpack.c.h.b16 %v284
      %v305 = vunpack.c.l.b16 %v285
      %v306 = vunpack.c.h.b16 %v285
      %v307 = vunpack.c.l.b16 %v286
      %v308 = vunpack.c.h.b16 %v286
      %v309 = vunpack.c.l.b16 %v287
      %v310 = vunpack.c.h.b16 %v287
      %v311 = vunpack.c.l.b16 %v288
      %v312 = vunpack.c.h.b16 %v288
      %v313 = vpack.c.b16 %v299, %v297
      %v314 = vpack.c.b16 %v300, %v298
      %v315 = vpack.c.b16 %v303, %v301
      %v316 = vpack.c.b16 %v304, %v302
      %v317 = vpack.c.b16 %v307, %v305
      %v318 = vpack.c.b16 %v308, %v306
      %v319 = vpack.c.b16 %v311, %v309
      %v320 = vpack.c.b16 %v312, %v310
      %v330 = vsel %vm251, %v280, 0
      %332 = vmatprep.subr.bf16.mxu0 %v314
      %333 = vmatpush1.bf16.msra.mxu0 %v313
      %334 = vmatprep.subr.bf16.mxu0 %v316
      %335 = vmatpush1.bf16.msra.mxu0 %v315
      %336 = vmatprep.subr.bf16.mxu0 %v318
      %337 = vmatpush1.bf16.msra.mxu0 %v317
      %338 = vmatprep.subr.bf16.mxu0 %v320
      %339 = vmatpush1.bf16.msra.mxu0 %v319
      %340 = vmatprep.subr.bf16.mxu0 0
      %341 = vmatpush1.bf16.msra.mxu0 0
      %342 = vmatprep.subr.bf16.mxu0 0
      %343 = vmatpush1.bf16.msra.mxu0 0
      %344 = vmatprep.subr.bf16.mxu0 0
      %345 = vmatpush1.bf16.msra.mxu0 0
      %346 = vmatprep.subr.bf16.mxu0 0
      %347 = vmatpush1.bf16.msra.mxu0 0
      %348 = vmatprep.subr.bf16.mxu0 0
      %349 = vmatpush1.bf16.msra.mxu0 0
      %350 = vmatprep.subr.bf16.mxu0 0
      %351 = vmatpush1.bf16.msra.mxu0 0
      %352 = vmatprep.subr.bf16.mxu0 0
      %353 = vmatpush1.bf16.msra.mxu0 0
      %354 = vmatprep.subr.bf16.mxu0 0
      %355 = vmatpush1.bf16.msra.mxu0 0
      %356 = vmatprep.subr.bf16.mxu0 0
      %357 = vmatpush1.bf16.msra.mxu0 0
      %358 = vmatprep.subr.bf16.mxu0 0
      %359 = vmatpush1.bf16.msra.mxu0 0
      %360 = vmatprep.subr.bf16.mxu0 0
      %361 = vmatpush1.bf16.msra.mxu0 0
      %362 = vmatprep.subr.bf16.mxu0 0
      %363 = vmatpush1.bf16.msra.mxu0 0
      %364 = vmatprep.mubr.bf16.mxu0 0
      %365 = vmatmul.mubr.bf16.gmra.mrb[0].mxu0 %v330
      %v366 = vpop.f32.mrb[0].mxu0
      %v367 = vadd.f32 0.0, %v366
      %v368 = vpop.f32.mrb[0].mxu0
      %v369 = vadd.f32 0.0, %v368
      %v370 = vpop.f32.mrb[0].mxu0
      %v371 = vpop.f32.mrb[0].mxu0
      %372 = vdwg.mxu0
      %v373 = vmul.f32 %v367, 0.25
      %v374 = vld [vmem:[%s4] sm:$0xf]
      %v375 = vld [vmem:[%s4 + $0x4] sm:$0xf]
      %v376 = vld [vmem:[%s4 + $0x8] sm:$0xf]
      %v377 = vld [vmem:[%s4 + $0xc] sm:$0xf]
      %v378 = vld [vmem:[%s4 + $0x10] sm:$0xf]
      %v379 = vld [vmem:[%s4 + $0x14] sm:$0xf]
      %v380 = vld [vmem:[%s4 + $0x18] sm:$0xf]
      %v381 = vld [vmem:[%s4 + $0x1c] sm:$0xf]
      %v382 = vpack.c.bf16 %v373, %v373
      %v383 = vpack.c.bf16 %v367, %v367
      %v384 = vpack.c.bf16 %v369, %v369
      %386 = vrot.lane.b32.xlu0 %v383, 64
      %v387 = vpop.permute.xlu0 %386
      %vm388 = vcmask 130048
      %v390 = vsel %vm388, %v382, 0
      %v393 = vsel %vm388, %v387, 0
      %395 = vmatprep.subr.bf16.mxu0 0
      %396 = vmatpush1.bf16.xpose.msra.mxu0 %v393
      %397 = vmatprep.subr.bf16.mxu0 0
      %398 = vmatpush1.bf16.xpose.msra.mxu0 0
      %399 = vmatprep.subr.bf16.mxu0 0
      %400 = vmatpush1.bf16.xpose.msra.mxu0 0
      %401 = vmatprep.subr.bf16.mxu0 0
      %402 = vmatpush1.bf16.xpose.msra.mxu0 0
      %403 = vmatprep.subr.bf16.mxu0 0
      %404 = vmatpush1.bf16.xpose.msra.mxu0 0
      %405 = vmatprep.subr.bf16.mxu0 0
      %406 = vmatpush1.bf16.xpose.msra.mxu0 0
      %407 = vmatprep.subr.bf16.mxu0 0
      %408 = vmatpush1.bf16.xpose.msra.mxu0 0
      %409 = vmatprep.subr.bf16.mxu0 0
      %410 = vmatpush1.bf16.xpose.msra.mxu0 0
      %411 = vmatprep.subr.bf16.mxu0 0
      %412 = vmatpush1.bf16.xpose.msra.mxu0 0
      %413 = vmatprep.subr.bf16.mxu0 0
      %414 = vmatpush1.bf16.xpose.msra.mxu0 0
      %415 = vmatprep.subr.bf16.mxu0 0
      %416 = vmatpush1.bf16.xpose.msra.mxu0 0
      %417 = vmatprep.subr.bf16.mxu0 0
      %418 = vmatpush1.bf16.xpose.msra.mxu0 0
      %419 = vmatprep.subr.bf16.mxu0 0
      %420 = vmatpush1.bf16.xpose.msra.mxu0 0
      %421 = vmatprep.subr.bf16.mxu0 0
      %422 = vmatpush1.bf16.xpose.msra.mxu0 0
      %423 = vmatprep.subr.bf16.mxu0 0
      %424 = vmatpush1.bf16.xpose.msra.mxu0 0
      %425 = vmatprep.subr.bf16.mxu0 0
      %426 = vmatpush1.bf16.xpose.msra.mxu0 0
      %427 = vmatprep.mubr.bf16.mxu0 0
      %428 = vmatmul.mubr.bf16.gmra.mrb[0].mxu0 %v390
      %v429 = vpop.f32.mrb[0].mxu0
      %v430 = vadd.f32 0.0, %v429
      %v431 = vpop.f32.mrb[0].mxu0
      %v432 = vpop.f32.mrb[0].mxu0
      %v433 = vpop.f32.mrb[0].mxu0
      %434 = vdwg.mxu0
      %vm435 = vcmask 64512
      %v436 = vsel %vm435, %v430, -inf
      %437 = vmax.xlane.f32.xlu0 %v436
      %v438 = vpop.xlane.xlu0 %437
      %v439 = vsub.f32 %v430, %v438
      %v440 = vmul.f32 %v439, 1.442695
      %v441 = vpow.pop %v440
      %v442 = vsel %vm435, %v441, 0.0
      %443 = vadd.xlane.f32.xlu0 %v442
      %v444 = vpop.xlane.xlu0 %443
      %v445 = vrcp.pop %v444
      %v446 = vmul.f32 %v441, %v445
      %v447 = vpack.c.bf16 %v446, %v446
      %v449 = vsel %vm435, %v447, 0
      %vm451 = vcmask 1043456
      %v453 = vsel %vm451, %v384, 0
      %455 = vmatprep.subr.bf16.mxu0 0
      %456 = vmatpush1.bf16.msra.mxu0 %v453
      %457 = vmatprep.subr.bf16.mxu0 0
      %458 = vmatpush1.bf16.msra.mxu0 0
      %459 = vmatprep.subr.bf16.mxu0 0
      %460 = vmatpush1.bf16.msra.mxu0 0
      %461 = vmatprep.subr.bf16.mxu0 0
      %462 = vmatpush1.bf16.msra.mxu0 0
      %463 = vmatprep.subr.bf16.mxu0 0
      %464 = vmatpush1.bf16.msra.mxu0 0
      %465 = vmatprep.subr.bf16.mxu0 0
      %466 = vmatpush1.bf16.msra.mxu0 0
      %467 = vmatprep.subr.bf16.mxu0 0
      %468 = vmatpush1.bf16.msra.mxu0 0
      %469 = vmatprep.subr.bf16.mxu0 0
      %470 = vmatpush1.bf16.msra.mxu0 0
      %471 = vmatprep.subr.bf16.mxu0 0
      %472 = vmatpush1.bf16.msra.mxu0 0
      %473 = vmatprep.subr.bf16.mxu0 0
      %474 = vmatpush1.bf16.msra.mxu0 0
      %475 = vmatprep.subr.bf16.mxu0 0
      %476 = vmatpush1.bf16.msra.mxu0 0
      %477 = vmatprep.subr.bf16.mxu0 0
      %478 = vmatpush1.bf16.msra.mxu0 0
      %479 = vmatprep.subr.bf16.mxu0 0
      %480 = vmatpush1.bf16.msra.mxu0 0
      %481 = vmatprep.subr.bf16.mxu0 0
      %482 = vmatpush1.bf16.msra.mxu0 0
      %483 = vmatprep.subr.bf16.mxu0 0
      %484 = vmatpush1.bf16.msra.mxu0 0
      %485 = vmatprep.subr.bf16.mxu0 0
      %486 = vmatpush1.bf16.msra.mxu0 0
      %487 = vmatprep.mubr.bf16.mxu0 0
      %488 = vmatmul.mubr.bf16.gmra.mrb[0].mxu0 %v449
      %v489 = vpop.f32.mrb[0].mxu0
      %v490 = vadd.f32 0.0, %v489
      %v491 = vpop.f32.mrb[0].mxu0
      %v492 = vpop.f32.mrb[0].mxu0
      %v493 = vpop.f32.mrb[0].mxu0
      %494 = vdwg.mxu0
      %v495 = vpack.c.bf16 %v490, %v490
      %497 = vrot.lane.b32.xlu0 %v382, 112
      %v498 = vpop.permute.xlu0 %497
      %499 = vrot.lane.b32.xlu0 %v383, 48
      %v500 = vpop.permute.xlu0 %499
      %v502 = vsel %vm388, %v498, 0
      %v505 = vsel %vm388, %v500, 0
      %507 = vmatprep.subr.bf16.mxu0 0
      %508 = vmatpush1.bf16.xpose.msra.mxu0 %v505
      %509 = vmatprep.subr.bf16.mxu0 0
      %510 = vmatpush1.bf16.xpose.msra.mxu0 0
      %511 = vmatprep.subr.bf16.mxu0 0
      %512 = vmatpush1.bf16.xpose.msra.mxu0 0
      %513 = vmatprep.subr.bf16.mxu0 0
      %514 = vmatpush1.bf16.xpose.msra.mxu0 0
      %515 = vmatprep.subr.bf16.mxu0 0
      %516 = vmatpush1.bf16.xpose.msra.mxu0 0
      %517 = vmatprep.subr.bf16.mxu0 0
      %518 = vmatpush1.bf16.xpose.msra.mxu0 0
      %519 = vmatprep.subr.bf16.mxu0 0
      %520 = vmatpush1.bf16.xpose.msra.mxu0 0
      %521 = vmatprep.subr.bf16.mxu0 0
      %522 = vmatpush1.bf16.xpose.msra.mxu0 0
      %523 = vmatprep.subr.bf16.mxu0 0
      %524 = vmatpush1.bf16.xpose.msra.mxu0 0
      %525 = vmatprep.subr.bf16.mxu0 0
      %526 = vmatpush1.bf16.xpose.msra.mxu0 0
      %527 = vmatprep.subr.bf16.mxu0 0
      %528 = vmatpush1.bf16.xpose.msra.mxu0 0
      %529 = vmatprep.subr.bf16.mxu0 0
      %530 = vmatpush1.bf16.xpose.msra.mxu0 0
      %531 = vmatprep.subr.bf16.mxu0 0
      %532 = vmatpush1.bf16.xpose.msra.mxu0 0
      %533 = vmatprep.subr.bf16.mxu0 0
      %534 = vmatpush1.bf16.xpose.msra.mxu0 0
      %535 = vmatprep.subr.bf16.mxu0 0
      %536 = vmatpush1.bf16.xpose.msra.mxu0 0
      %537 = vmatprep.subr.bf16.mxu0 0
      %538 = vmatpush1.bf16.xpose.msra.mxu0 0
      %539 = vmatprep.mubr.bf16.mxu0 0
      %540 = vmatmul.mubr.bf16.gmra.mrb[0].mxu0 %v502
      %v541 = vpop.f32.mrb[0].mxu0
      %v542 = vadd.f32 0.0, %v541
      %v543 = vpop.f32.mrb[0].mxu0
      %v544 = vpop.f32.mrb[0].mxu0
      %v545 = vpop.f32.mrb[0].mxu0
      %546 = vdwg.mxu0
      %v547 = vsel %vm435, %v542, -inf
      %548 = vmax.xlane.f32.xlu0 %v547
      %v549 = vpop.xlane.xlu0 %548
      %v550 = vsub.f32 %v542, %v549
      %v551 = vmul.f32 %v550, 1.442695
      %v552 = vpow.pop %v551
      %v553 = vsel %vm435, %v552, 0.0
      %554 = vadd.xlane.f32.xlu0 %v553
      %v555 = vpop.xlane.xlu0 %554
      %v556 = vrcp.pop %v555
      %v557 = vmul.f32 %v552, %v556
      %v558 = vpack.c.bf16 %v557, %v557
      %560 = vrot.lane.b32.xlu0 %v384, 112
      %v561 = vpop.permute.xlu0 %560
      %v563 = vsel %vm435, %v558, 0
      %v566 = vsel %vm451, %v561, 0
      %568 = vmatprep.subr.bf16.mxu0 0
      %569 = vmatpush1.bf16.msra.mxu0 %v566
      %570 = vmatprep.subr.bf16.mxu0 0
      %571 = vmatpush1.bf16.msra.mxu0 0
      %572 = vmatprep.subr.bf16.mxu0 0
      %573 = vmatpush1.bf16.msra.mxu0 0
      %574 = vmatprep.subr.bf16.mxu0 0
      %575 = vmatpush1.bf16.msra.mxu0 0
      %576 = vmatprep.subr.bf16.mxu0 0
      %577 = vmatpush1.bf16.msra.mxu0 0
      %578 = vmatprep.subr.bf16.mxu0 0
      %579 = vmatpush1.bf16.msra.mxu0 0
      %580 = vmatprep.subr.bf16.mxu0 0
      %581 = vmatpush1.bf16.msra.mxu0 0
      %582 = vmatprep.subr.bf16.mxu0 0
      %583 = vmatpush1.bf16.msra.mxu0 0
      %584 = vmatprep.subr.bf16.mxu0 0
      %585 = vmatpush1.bf16.msra.mxu0 0
      %586 = vmatprep.subr.bf16.mxu0 0
      %587 = vmatpush1.bf16.msra.mxu0 0
      %588 = vmatprep.subr.bf16.mxu0 0
      %589 = vmatpush1.bf16.msra.mxu0 0
      %590 = vmatprep.subr.bf16.mxu0 0
      %591 = vmatpush1.bf16.msra.mxu0 0
      %592 = vmatprep.subr.bf16.mxu0 0
      %593 = vmatpush1.bf16.msra.mxu0 0
      %594 = vmatprep.subr.bf16.mxu0 0
      %595 = vmatpush1.bf16.msra.mxu0 0
      %596 = vmatprep.subr.bf16.mxu0 0
      %597 = vmatpush1.bf16.msra.mxu0 0
      %598 = vmatprep.subr.bf16.mxu0 0
      %599 = vmatpush1.bf16.msra.mxu0 0
      %600 = vmatprep.mubr.bf16.mxu0 0
      %601 = vmatmul.mubr.bf16.gmra.mrb[0].mxu0 %v563
      %v602 = vpop.f32.mrb[0].mxu0
      %v603 = vadd.f32 0.0, %v602
      %v604 = vpop.f32.mrb[0].mxu0
      %v605 = vpop.f32.mrb[0].mxu0
      %v606 = vpop.f32.mrb[0].mxu0
      %607 = vdwg.mxu0
      %v608 = vpack.c.bf16 %v603, %v603
      %v611 = vunpack.c.l.b16 %v376
      %v612 = vunpack.c.l.b16 %v377
      %v613 = vpack.c.b16 %v612, %v611
      %v616 = vsel %vm388, %v608, 0
      %618 = vmatprep.subr.bf16.mxu0 0
      %619 = vmatpush1.bf16.msra.mxu0 %v613
      %620 = vmatprep.subr.bf16.mxu0 0
      %621 = vmatpush1.bf16.msra.mxu0 0
      %622 = vmatprep.subr.bf16.mxu0 0
      %623 = vmatpush1.bf16.msra.mxu0 0
      %624 = vmatprep.subr.bf16.mxu0 0
      %625 = vmatpush1.bf16.msra.mxu0 0
      %626 = vmatprep.subr.bf16.mxu0 0
      %627 = vmatpush1.bf16.msra.mxu0 0
      %628 = vmatprep.subr.bf16.mxu0 0
      %629 = vmatpush1.bf16.msra.mxu0 0
      %630 = vmatprep.subr.bf16.mxu0 0
      %631 = vmatpush1.bf16.msra.mxu0 0
      %632 = vmatprep.subr.bf16.mxu0 0
      %633 = vmatpush1.bf16.msra.mxu0 0
      %634 = vmatprep.subr.bf16.mxu0 0
      %635 = vmatpush1.bf16.msra.mxu0 0
      %636 = vmatprep.subr.bf16.mxu0 0
      %637 = vmatpush1.bf16.msra.mxu0 0
      %638 = vmatprep.subr.bf16.mxu0 0
      %639 = vmatpush1.bf16.msra.mxu0 0
      %640 = vmatprep.subr.bf16.mxu0 0
      %641 = vmatpush1.bf16.msra.mxu0 0
      %642 = vmatprep.subr.bf16.mxu0 0
      %643 = vmatpush1.bf16.msra.mxu0 0
      %644 = vmatprep.subr.bf16.mxu0 0
      %645 = vmatpush1.bf16.msra.mxu0 0
      %646 = vmatprep.subr.bf16.mxu0 0
      %647 = vmatpush1.bf16.msra.mxu0 0
      %648 = vmatprep.subr.bf16.mxu0 0
      %649 = vmatpush1.bf16.msra.mxu0 0
      %650 = vmatprep.mubr.bf16.mxu0 0
      %651 = vmatmul.mubr.bf16.gmra.mrb[0].mxu0 %v616
      %v652 = vpop.f32.mrb[0].mxu0
      %v653 = vadd.f32 0.0, %v652
      %v654 = vpop.f32.mrb[0].mxu0
      %v655 = vpop.f32.mrb[0].mxu0
      %v656 = vpop.f32.mrb[0].mxu0
      %657 = vdwg.mxu0
      %v660 = vunpack.c.l.b16 %v374
      %v661 = vunpack.c.l.b16 %v375
      %v662 = vpack.c.b16 %v661, %v660
      %v665 = vsel %vm388, %v495, 0
      %667 = vmatprep.subr.bf16.mxu0 0
      %668 = vmatpush1.bf16.msra.mxu0 %v662
      %669 = vmatprep.subr.bf16.mxu0 0
      %670 = vmatpush1.bf16.msra.mxu0 0
      %671 = vmatprep.subr.bf16.mxu0 0
      %672 = vmatpush1.bf16.msra.mxu0 0
      %673 = vmatprep.subr.bf16.mxu0 0
      %674 = vmatpush1.bf16.msra.mxu0 0
      %675 = vmatprep.subr.bf16.mxu0 0
      %676 = vmatpush1.bf16.msra.mxu0 0
      %677 = vmatprep.subr.bf16.mxu0 0
      %678 = vmatpush1.bf16.msra.mxu0 0
      %679 = vmatprep.subr.bf16.mxu0 0
      %680 = vmatpush1.bf16.msra.mxu0 0
      %681 = vmatprep.subr.bf16.mxu0 0
      %682 = vmatpush1.bf16.msra.mxu0 0
      %683 = vmatprep.subr.bf16.mxu0 0
      %684 = vmatpush1.bf16.msra.mxu0 0
      %685 = vmatprep.subr.bf16.mxu0 0
      %686 = vmatpush1.bf16.msra.mxu0 0
      %687 = vmatprep.subr.bf16.mxu0 0
      %688 = vmatpush1.bf16.msra.mxu0 0
      %689 = vmatprep.subr.bf16.mxu0 0
      %690 = vmatpush1.bf16.msra.mxu0 0
      %691 = vmatprep.subr.bf16.mxu0 0
      %692 = vmatpush1.bf16.msra.mxu0 0
      %693 = vmatprep.subr.bf16.mxu0 0
      %694 = vmatpush1.bf16.msra.mxu0 0
      %695 = vmatprep.subr.bf16.mxu0 0
      %696 = vmatpush1.bf16.msra.mxu0 0
      %697 = vmatprep.subr.bf16.mxu0 0
      %698 = vmatpush1.bf16.msra.mxu0 0
      %699 = vmatprep.mubr.bf16.mxu0 0
      %700 = vmatmul.mubr.bf16.gmra.mrb[0].mxu0 %v665
      %v701 = vpop.f32.mrb[0].mxu0
      %v702 = vadd.f32 %v653, %v701
      %v703 = vpop.f32.mrb[0].mxu0
      %v704 = vpop.f32.mrb[0].mxu0
      %v705 = vpop.f32.mrb[0].mxu0
      %706 = vdwg.mxu0
      %707 = vrot.lane.b32.xlu0 %v382, 96
      %v708 = vpop.permute.xlu0 %707
      %709 = vrot.lane.b32.xlu0 %v383, 32
      %v710 = vpop.permute.xlu0 %709
      %v712 = vsel %vm388, %v708, 0
      %v715 = vsel %vm388, %v710, 0
      %717 = vmatprep.subr.bf16.mxu0 0
      %718 = vmatpush1.bf16.xpose.msra.mxu0 %v715
      %719 = vmatprep.subr.bf16.mxu0 0
      %720 = vmatpush1.bf16.xpose.msra.mxu0 0
      %721 = vmatprep.subr.bf16.mxu0 0
      %722 = vmatpush1.bf16.xpose.msra.mxu0 0
      %723 = vmatprep.subr.bf16.mxu0 0
      %724 = vmatpush1.bf16.xpose.msra.mxu0 0
      %725 = vmatprep.subr.bf16.mxu0 0
      %726 = vmatpush1.bf16.xpose.msra.mxu0 0
      %727 = vmatprep.subr.bf16.mxu0 0
      %728 = vmatpush1.bf16.xpose.msra.mxu0 0
      %729 = vmatprep.subr.bf16.mxu0 0
      %730 = vmatpush1.bf16.xpose.msra.mxu0 0
      %731 = vmatprep.subr.bf16.mxu0 0
      %732 = vmatpush1.bf16.xpose.msra.mxu0 0
      %733 = vmatprep.subr.bf16.mxu0 0
      %734 = vmatpush1.bf16.xpose.msra.mxu0 0
      %735 = vmatprep.subr.bf16.mxu0 0
      %736 = vmatpush1.bf16.xpose.msra.mxu0 0
      %737 = vmatprep.subr.bf16.mxu0 0
      %738 = vmatpush1.bf16.xpose.msra.mxu0 0
      %739 = vmatprep.subr.bf16.mxu0 0
      %740 = vmatpush1.bf16.xpose.msra.mxu0 0
      %741 = vmatprep.subr.bf16.mxu0 0
      %742 = vmatpush1.bf16.xpose.msra.mxu0 0
      %743 = vmatprep.subr.bf16.mxu0 0
      %744 = vmatpush1.bf16.xpose.msra.mxu0 0
      %745 = vmatprep.subr.bf16.mxu0 0
      %746 = vmatpush1.bf16.xpose.msra.mxu0 0
      %747 = vmatprep.subr.bf16.mxu0 0
      %748 = vmatpush1.bf16.xpose.msra.mxu0 0
      %749 = vmatprep.mubr.bf16.mxu0 0
      %750 = vmatmul.mubr.bf16.gmra.mrb[0].mxu0 %v712
      %v751 = vpop.f32.mrb[0].mxu0
      %v752 = vadd.f32 0.0, %v751
      %v753 = vpop.f32.mrb[0].mxu0
      %v754 = vpop.f32.mrb[0].mxu0
      %v755 = vpop.f32.mrb[0].mxu0
      %756 = vdwg.mxu0
      %v757 = vsel %vm435, %v752, -inf
      %758 = vmax.xlane.f32.xlu0 %v757
      %v759 = vpop.xlane.xlu0 %758
      %v760 = vsub.f32 %v752, %v759
      %v761 = vmul.f32 %v760, 1.442695
      %v762 = vpow.pop %v761
      %v763 = vsel %vm435, %v762, 0.0
      %764 = vadd.xlane.f32.xlu0 %v763
      %v765 = vpop.xlane.xlu0 %764
      %v766 = vrcp.pop %v765
      %v767 = vmul.f32 %v762, %v766
      %v768 = vpack.c.bf16 %v767, %v767
      %769 = vrot.lane.b32.xlu0 %v384, 96
      %v770 = vpop.permute.xlu0 %769
      %v772 = vsel %vm435, %v768, 0
      %v775 = vsel %vm451, %v770, 0
      %777 = vmatprep.subr.bf16.mxu0 0
      %778 = vmatpush1.bf16.msra.mxu0 %v775
      %779 = vmatprep.subr.bf16.mxu0 0
      %780 = vmatpush1.bf16.msra.mxu0 0
      %781 = vmatprep.subr.bf16.mxu0 0
      %782 = vmatpush1.bf16.msra.mxu0 0
      %783 = vmatprep.subr.bf16.mxu0 0
      %784 = vmatpush1.bf16.msra.mxu0 0
      %785 = vmatprep.subr.bf16.mxu0 0
      %786 = vmatpush1.bf16.msra.mxu0 0
      %787 = vmatprep.subr.bf16.mxu0 0
      %788 = vmatpush1.bf16.msra.mxu0 0
      %789 = vmatprep.subr.bf16.mxu0 0
      %790 = vmatpush1.bf16.msra.mxu0 0
      %791 = vmatprep.subr.bf16.mxu0 0
      %792 = vmatpush1.bf16.msra.mxu0 0
      %793 = vmatprep.subr.bf16.mxu0 0
      %794 = vmatpush1.bf16.msra.mxu0 0
      %795 = vmatprep.subr.bf16.mxu0 0
      %796 = vmatpush1.bf16.msra.mxu0 0
      %797 = vmatprep.subr.bf16.mxu0 0
      %798 = vmatpush1.bf16.msra.mxu0 0
      %799 = vmatprep.subr.bf16.mxu0 0
      %800 = vmatpush1.bf16.msra.mxu0 0
      %801 = vmatprep.subr.bf16.mxu0 0
      %802 = vmatpush1.bf16.msra.mxu0 0
      %803 = vmatprep.subr.bf16.mxu0 0
      %804 = vmatpush1.bf16.msra.mxu0 0
      %805 = vmatprep.subr.bf16.mxu0 0
      %806 = vmatpush1.bf16.msra.mxu0 0
      %807 = vmatprep.subr.bf16.mxu0 0
      %808 = vmatpush1.bf16.msra.mxu0 0
      %809 = vmatprep.mubr.bf16.mxu0 0
      %810 = vmatmul.mubr.bf16.gmra.mrb[0].mxu0 %v772
      %v811 = vpop.f32.mrb[0].mxu0
      %v812 = vadd.f32 0.0, %v811
      %v813 = vpop.f32.mrb[0].mxu0
      %v814 = vpop.f32.mrb[0].mxu0
      %v815 = vpop.f32.mrb[0].mxu0
      %816 = vdwg.mxu0
      %v817 = vpack.c.bf16 %v812, %v812
      %v820 = vunpack.c.l.b16 %v378
      %v821 = vunpack.c.l.b16 %v379
      %v822 = vpack.c.b16 %v821, %v820
      %v825 = vsel %vm388, %v817, 0
      %827 = vmatprep.subr.bf16.mxu0 0
      %828 = vmatpush1.bf16.msra.mxu0 %v822
      %829 = vmatprep.subr.bf16.mxu0 0
      %830 = vmatpush1.bf16.msra.mxu0 0
      %831 = vmatprep.subr.bf16.mxu0 0
      %832 = vmatpush1.bf16.msra.mxu0 0
      %833 = vmatprep.subr.bf16.mxu0 0
      %834 = vmatpush1.bf16.msra.mxu0 0
      %835 = vmatprep.subr.bf16.mxu0 0
      %836 = vmatpush1.bf16.msra.mxu0 0
      %837 = vmatprep.subr.bf16.mxu0 0
      %838 = vmatpush1.bf16.msra.mxu0 0
      %839 = vmatprep.subr.bf16.mxu0 0
      %840 = vmatpush1.bf16.msra.mxu0 0
      %841 = vmatprep.subr.bf16.mxu0 0
      %842 = vmatpush1.bf16.msra.mxu0 0
      %843 = vmatprep.subr.bf16.mxu0 0
      %844 = vmatpush1.bf16.msra.mxu0 0
      %845 = vmatprep.subr.bf16.mxu0 0
      %846 = vmatpush1.bf16.msra.mxu0 0
      %847 = vmatprep.subr.bf16.mxu0 0
      %848 = vmatpush1.bf16.msra.mxu0 0
      %849 = vmatprep.subr.bf16.mxu0 0
      %850 = vmatpush1.bf16.msra.mxu0 0
      %851 = vmatprep.subr.bf16.mxu0 0
      %852 = vmatpush1.bf16.msra.mxu0 0
      %853 = vmatprep.subr.bf16.mxu0 0
      %854 = vmatpush1.bf16.msra.mxu0 0
      %855 = vmatprep.subr.bf16.mxu0 0
      %856 = vmatpush1.bf16.msra.mxu0 0
      %857 = vmatprep.subr.bf16.mxu0 0
      %858 = vmatpush1.bf16.msra.mxu0 0
      %859 = vmatprep.mubr.bf16.mxu0 0
      %860 = vmatmul.mubr.bf16.gmra.mrb[0].mxu0 %v825
      %v861 = vpop.f32.mrb[0].mxu0
      %v862 = vadd.f32 0.0, %v861
      %v863 = vpop.f32.mrb[0].mxu0
      %v864 = vpop.f32.mrb[0].mxu0
      %v865 = vpop.f32.mrb[0].mxu0
      %866 = vdwg.mxu0
      %v867 = vadd.f32 %v702, %v862
      %868 = vrot.lane.b32.xlu0 %v382, 80
      %v869 = vpop.permute.xlu0 %868
      %870 = vrot.lane.b32.xlu0 %v383, 16
      %v871 = vpop.permute.xlu0 %870
      %v873 = vsel %vm388, %v869, 0
      %v876 = vsel %vm388, %v871, 0
      %878 = vmatprep.subr.bf16.mxu0 0
      %879 = vmatpush1.bf16.xpose.msra.mxu0 %v876
      %880 = vmatprep.subr.bf16.mxu0 0
      %881 = vmatpush1.bf16.xpose.msra.mxu0 0
      %882 = vmatprep.subr.bf16.mxu0 0
      %883 = vmatpush1.bf16.xpose.msra.mxu0 0
      %884 = vmatprep.subr.bf16.mxu0 0
      %885 = vmatpush1.bf16.xpose.msra.mxu0 0
      %886 = vmatprep.subr.bf16.mxu0 0
      %887 = vmatpush1.bf16.xpose.msra.mxu0 0
      %888 = vmatprep.subr.bf16.mxu0 0
      %889 = vmatpush1.bf16.xpose.msra.mxu0 0
      %890 = vmatprep.subr.bf16.mxu0 0
      %891 = vmatpush1.bf16.xpose.msra.mxu0 0
      %892 = vmatprep.subr.bf16.mxu0 0
      %893 = vmatpush1.bf16.xpose.msra.mxu0 0
      %894 = vmatprep.subr.bf16.mxu0 0
      %895 = vmatpush1.bf16.xpose.msra.mxu0 0
      %896 = vmatprep.subr.bf16.mxu0 0
      %897 = vmatpush1.bf16.xpose.msra.mxu0 0
      %898 = vmatprep.subr.bf16.mxu0 0
      %899 = vmatpush1.bf16.xpose.msra.mxu0 0
      %900 = vmatprep.subr.bf16.mxu0 0
      %901 = vmatpush1.bf16.xpose.msra.mxu0 0
      %902 = vmatprep.subr.bf16.mxu0 0
      %903 = vmatpush1.bf16.xpose.msra.mxu0 0
      %904 = vmatprep.subr.bf16.mxu0 0
      %905 = vmatpush1.bf16.xpose.msra.mxu0 0
      %906 = vmatprep.subr.bf16.mxu0 0
      %907 = vmatpush1.bf16.xpose.msra.mxu0 0
      %908 = vmatprep.subr.bf16.mxu0 0
      %909 = vmatpush1.bf16.xpose.msra.mxu0 0
      %910 = vmatprep.mubr.bf16.mxu0 0
      %911 = vmatmul.mubr.bf16.gmra.mrb[0].mxu0 %v873
      %v912 = vpop.f32.mrb[0].mxu0
      %v913 = vadd.f32 0.0, %v912
      %v914 = vpop.f32.mrb[0].mxu0
      %v915 = vpop.f32.mrb[0].mxu0
      %v916 = vpop.f32.mrb[0].mxu0
      %917 = vdwg.mxu0
      %v918 = vsel %vm435, %v913, -inf
      %919 = vmax.xlane.f32.xlu0 %v918
      %v920 = vpop.xlane.xlu0 %919
      %v921 = vsub.f32 %v913, %v920
      %v922 = vmul.f32 %v921, 1.442695
      %v923 = vpow.pop %v922
      %v924 = vsel %vm435, %v923, 0.0
      %925 = vadd.xlane.f32.xlu0 %v924
      %v926 = vpop.xlane.xlu0 %925
      %v927 = vrcp.pop %v926
      %v928 = vmul.f32 %v923, %v927
      %v929 = vpack.c.bf16 %v928, %v928
      %930 = vrot.lane.b32.xlu0 %v384, 80
      %v931 = vpop.permute.xlu0 %930
      %v933 = vsel %vm435, %v929, 0
      %v936 = vsel %vm451, %v931, 0
      %938 = vmatprep.subr.bf16.mxu0 0
      %939 = vmatpush1.bf16.msra.mxu0 %v936
      %940 = vmatprep.subr.bf16.mxu0 0
      %941 = vmatpush1.bf16.msra.mxu0 0
      %942 = vmatprep.subr.bf16.mxu0 0
      %943 = vmatpush1.bf16.msra.mxu0 0
      %944 = vmatprep.subr.bf16.mxu0 0
      %945 = vmatpush1.bf16.msra.mxu0 0
      %946 = vmatprep.subr.bf16.mxu0 0
      %947 = vmatpush1.bf16.msra.mxu0 0
      %948 = vmatprep.subr.bf16.mxu0 0
      %949 = vmatpush1.bf16.msra.mxu0 0
      %950 = vmatprep.subr.bf16.mxu0 0
      %951 = vmatpush1.bf16.msra.mxu0 0
      %952 = vmatprep.subr.bf16.mxu0 0
      %953 = vmatpush1.bf16.msra.mxu0 0
      %954 = vmatprep.subr.bf16.mxu0 0
      %955 = vmatpush1.bf16.msra.mxu0 0
      %956 = vmatprep.subr.bf16.mxu0 0
      %957 = vmatpush1.bf16.msra.mxu0 0
      %958 = vmatprep.subr.bf16.mxu0 0
      %959 = vmatpush1.bf16.msra.mxu0 0
      %960 = vmatprep.subr.bf16.mxu0 0
      %961 = vmatpush1.bf16.msra.mxu0 0
      %962 = vmatprep.subr.bf16.mxu0 0
      %963 = vmatpush1.bf16.msra.mxu0 0
      %964 = vmatprep.subr.bf16.mxu0 0
      %965 = vmatpush1.bf16.msra.mxu0 0
      %966 = vmatprep.subr.bf16.mxu0 0
      %967 = vmatpush1.bf16.msra.mxu0 0
      %968 = vmatprep.subr.bf16.mxu0 0
      %969 = vmatpush1.bf16.msra.mxu0 0
      %970 = vmatprep.mubr.bf16.mxu0 0
      %971 = vmatmul.mubr.bf16.gmra.mrb[0].mxu0 %v933
      %v972 = vpop.f32.mrb[0].mxu0
      %v973 = vadd.f32 0.0, %v972
      %v974 = vpop.f32.mrb[0].mxu0
      %v975 = vpop.f32.mrb[0].mxu0
      %v976 = vpop.f32.mrb[0].mxu0
      %977 = vdwg.mxu0
      %v978 = vpack.c.bf16 %v973, %v973
      %v981 = vunpack.c.l.b16 %v380
      %v982 = vunpack.c.l.b16 %v381
      %v983 = vpack.c.b16 %v982, %v981
      %v986 = vsel %vm388, %v978, 0
      %988 = vmatprep.subr.bf16.mxu0 0
      %989 = vmatpush1.bf16.msra.mxu0 %v983
      %990 = vmatprep.subr.bf16.mxu0 0
      %991 = vmatpush1.bf16.msra.mxu0 0
      %992 = vmatprep.subr.bf16.mxu0 0
      %993 = vmatpush1.bf16.msra.mxu0 0
      %994 = vmatprep.subr.bf16.mxu0 0
      %995 = vmatpush1.bf16.msra.mxu0 0
      %996 = vmatprep.subr.bf16.mxu0 0
      %997 = vmatpush1.bf16.msra.mxu0 0
      %998 = vmatprep.subr.bf16.mxu0 0
      %999 = vmatpush1.bf16.msra.mxu0 0
      %1000 = vmatprep.subr.bf16.mxu0 0
      %1001 = vmatpush1.bf16.msra.mxu0 0
      %1002 = vmatprep.subr.bf16.mxu0 0
      %1003 = vmatpush1.bf16.msra.mxu0 0
      %1004 = vmatprep.subr.bf16.mxu0 0
      %1005 = vmatpush1.bf16.msra.mxu0 0
      %1006 = vmatprep.subr.bf16.mxu0 0
      %1007 = vmatpush1.bf16.msra.mxu0 0
      %1008 = vmatprep.subr.bf16.mxu0 0
      %1009 = vmatpush1.bf16.msra.mxu0 0
      %1010 = vmatprep.subr.bf16.mxu0 0
      %1011 = vmatpush1.bf16.msra.mxu0 0
      %1012 = vmatprep.subr.bf16.mxu0 0
      %1013 = vmatpush1.bf16.msra.mxu0 0
      %1014 = vmatprep.subr.bf16.mxu0 0
      %1015 = vmatpush1.bf16.msra.mxu0 0
      %1016 = vmatprep.subr.bf16.mxu0 0
      %1017 = vmatpush1.bf16.msra.mxu0 0
      %1018 = vmatprep.subr.bf16.mxu0 0
      %1019 = vmatpush1.bf16.msra.mxu0 0
      %1020 = vmatprep.mubr.bf16.mxu0 0
      %1021 = vmatmul.mubr.bf16.gmra.mrb[0].mxu0 %v986
      %v1022 = vpop.f32.mrb[0].mxu0
      %v1023 = vadd.f32 0.0, %v1022
      %v1024 = vpop.f32.mrb[0].mxu0
      %v1025 = vpop.f32.mrb[0].mxu0
      %v1026 = vpop.f32.mrb[0].mxu0
      %1027 = vdwg.mxu0
      %v1028 = vadd.f32 %v867, %v1023
      %v1029 = vld [vmem:[%s5] sm:$0x1]
      %v1031 = vlaneseq
      %v1032 = vshrl.u32 %v1031, 7
      %v1033 = vsub.s32 0, %v1032
      %v1034 = vrot.slane %v1029, %v1033
      %v1036 = vadd.f32 %v1028, %v1034
      %v1037 = vadd.f32 %v1036, %v248
      %1038 = vst.msk [vmem:[%s246] sm:$0xff] %vm251, %v1037
      %p1039 = scmp.lt.s32.totalorder %s17, 1
      %s1040 = scalar_select %p1039, %s17, 1
      %s1041 = smul.addr %s1040, 8
      %s1042 = scalar_lea.vmem %s6, %s1041
      // Predicated region
      $region45: #{_lambda_.8} parent=43 // pred_check
        %p1043 = pneg %p166
      $region46: #{_lambda_.8} parent=43 // pred_check_branch
        %1045 = sbr.rel (%p1043) target = $region48
      $region47: #{_lambda_.8} parent=43 // pred_region
        _
      $region48: #{_lambda_.8} parent=43 // pred_fallthru
        _
    $region44: #{_lambda_.8} parent=5 // pred_fallthru
      _
    %p1046 = scmp.le.s32.totalorder 2, %s12
    // Predicated region
    $region49: #{_lambda_.8} parent=5 // pred_check
      %p1047 = pneg %p1046
    $region50: #{_lambda_.8} parent=5 // pred_check_branch
      %1049 = sbr.rel (%p1047) target = $region52
    $region51: #{_lambda_.8} parent=5 // pred_region
      %s1050 = ssub.s32 %s12, 2
      // Predicated region
      $region53: #{_lambda_.8} parent=51 // pred_check
        %p1051 = pneg %p172
      $region54: #{_lambda_.8} parent=51 // pred_check_branch
        %1053 = sbr.rel (%p1051) target = $region56
      $region55: #{_lambda_.8} parent=51 // pred_region
        %p1054 = scmp.lt.s32.totalorder %s18, 1
        %s1055 = scalar_select %p1054, %s18, 1
        %s1056 = smul.addr %s1055, 8
        %s1057 = scalar_lea.vmem %s6, %s1056
      $region56: #{_lambda_.8} parent=51 // pred_fallthru
        _
    $region52: #{_lambda_.8} parent=5 // pred_fallthru
      _
  $region6: #{_lambda_.8} parent=0 // loop_footer
    %s16 = sadd.s32 1, %s12
  $region7: #{_lambda_.8} parent=0 // loop_footer_branch
    %11 = sbr.rel target = $region3
  $region8: #{_lambda_.8} parent=0 // loop_exit
    _

// kernel: _lambda_.11
$region0: #{_lambda_.11}
  #allocation0 [shape = 'u32[]', space=smem, size = 0x4, offset = 0x4, fixed_abs, tag = 'smem constant byte address 0x4 - core index']
  #allocation1 [shape = 'u32[144,128]{1,0:T(1,128)}', space=vmem, size = 0x12000, scoped, tag = 'internal scratch']
  %s0 = inlined_call_operand.vmem [shape: f32[2,8,64], index: 0, kind: input, shape index: {}]
  %s1 = inlined_call_operand.vmem [shape: f32[1,64], index: 1, kind: input, shape index: {}]
  %s2 = inlined_call_operand.vmem [shape: f32[1,64], index: 2, kind: input, shape index: {}]
  %s3 = inlined_call_operand.vmem [shape: bf16[64,512], index: 3, kind: input, shape index: {}]
  %s4 = inlined_call_operand.vmem [shape: f32[1,512], index: 4, kind: input, shape index: {}]
  %s5 = inlined_call_operand.vmem [shape: bf16[256,64], index: 5, kind: input, shape index: {}]
  %s6 = inlined_call_operand.vmem [shape: f32[1,64], index: 6, kind: input, shape index: {}]
  %s7 = inlined_call_operand.hbm [shape: f32[2,8,64], index: 7, kind: output, shape index: {}]
  %s8 = sld [smem:[#allocation0]]
  $region61: #{_lambda_.11} parent=0
    _
  %s10 = ssub.s32 1, %s8
  %s11 = scalar_select 0, %s10, %s8
  $region1: #{_lambda_.11} parent=0
    #allocation2 [shape = 'u8[8192]{0}', space=vmem, size = 0x2000, scoped, tag = 'output window, operand 0']
    #allocation3 [shape = 's32[2]{0}', space=sflag, size = 0x8, scoped, tag = 'scoped memory for _lambda_.11']
    %12 = vsyncpa [#allocation3], 0
    %s13 = scalar_lea.sflag [#allocation3], 1
    %14 = vsyncpa %s13, 0
    loop: start=0, step=1, limit=4
    $region2: #{_lambda_.11} parent=1 // loop_pre_header
      _
    $region3: #{_lambda_.11} parent=1 // loop_header
      %s16 = sphi 0, %s20
      %p17 = scmp.ge.s32.totalorder %s16, 4
      %s26 = sphi 0, %s28
      %s29 = sphi 0, %s26
      %s30 = sphi 0, %s29
      %s46 = sphi 0, %s30
      %s50 = sphi 0, %s50
      %s52 = sphi 0, %s50
      %s53 = sphi 0, %s52
      %s67 = sphi 0, %s53
      %s71 = sphi 0, %s71
      %s73 = sphi 0, %s71
      %s74 = sphi 0, %s73
      %s88 = sphi 0, %s74
      %s92 = sphi 0, %s92
      %s94 = sphi 0, %s92
      %s95 = sphi 0, %s94
      %s109 = sphi 0, %s95
      %s113 = sphi 0, %s113
      %s115 = sphi 0, %s113
      %s116 = sphi 0, %s115
      %s130 = sphi 0, %s116
      %s134 = sphi 0, %s134
      %s136 = sphi 0, %s134
      %s137 = sphi 0, %s136
      %s151 = sphi 0, %s137
      %s155 = sphi 0, %s155
      %s157 = sphi 0, %s155
      %s158 = sphi 0, %s157
      %s172 = sphi 0, %s158
      %s178 = sphi 0, %s180
      %s181 = sphi 0, %s178
      %s182 = sphi 0, %s181
      %s198 = sphi 0, %s182
    $region4: #{_lambda_.11} parent=1 // loop_header_branch
      %19 = sbr.rel (%p17) target = $region8
    $region5: #{_lambda_.11} parent=1 // loop_body
      %s21 = ssub.s32 %s16, 1
      %s22 = ssub.s32 %s16, 2
      %s23 = sadd.s32 %s16, 1
      %s24 = ssub.s32 %s16, %s23
      %p25 = scmp.eq.s32.totalorder %s24, 0
      %s27 = sadd.s32 %s26, 1
      %s28 = scalar_select %p25, %s26, %s27
      %p31 = pneg %p25
      %p32 = scmp.eq.s32.totalorder %s16, 1
      %p33 = por %p31, %p32
      %p34 = scmp.ne.s32.totalorder %s26, %s29
      %p35 = scmp.eq.s32.totalorder %s16, 0
      %p36 = por %p34, %p35
      %p37 = scmp.ne.s32.totalorder %s26, %s29
      %p38 = scmp.eq.s32.totalorder %s21, 1
      %p39 = por %p37, %p38
      %p40 = scmp.ne.s32.totalorder %s29, %s30
      %p41 = scmp.eq.s32.totalorder %s21, 0
      %p42 = por %p40, %p41
      %p43 = scmp.ne.s32.totalorder %s29, %s30
      %p44 = scmp.eq.s32.totalorder %s22, 1
      %p45 = por %p43, %p44
      %p47 = scmp.ne.s32.totalorder %s30, %s46
      %p48 = scmp.eq.s32.totalorder %s22, 0
      %p49 = por %p47, %p48
      %s51 = sadd.s32 %s50, 1
      %p54 = scmp.eq.s32.totalorder %s16, 1
      %p55 = scmp.ne.s32.totalorder %s50, %s52
      %p56 = scmp.eq.s32.totalorder %s16, 0
      %p57 = por %p55, %p56
      %p58 = scmp.ne.s32.totalorder %s50, %s52
      %p59 = scmp.eq.s32.totalorder %s21, 1
      %p60 = por %p58, %p59
      %p61 = scmp.ne.s32.totalorder %s52, %s53
      %p62 = scmp.eq.s32.totalorder %s21, 0
      %p63 = por %p61, %p62
      %p64 = scmp.ne.s32.totalorder %s52, %s53
      %p65 = scmp.eq.s32.totalorder %s22, 1
      %p66 = por %p64, %p65
      %p68 = scmp.ne.s32.totalorder %s53, %s67
      %p69 = scmp.eq.s32.totalorder %s22, 0
      %p70 = por %p68, %p69
      %s72 = sadd.s32 %s71, 1
      %p75 = scmp.eq.s32.totalorder %s16, 1
      %p76 = scmp.ne.s32.totalorder %s71, %s73
      %p77 = scmp.eq.s32.totalorder %s16, 0
      %p78 = por %p76, %p77
      %p79 = scmp.ne.s32.totalorder %s71, %s73
      %p80 = scmp.eq.s32.totalorder %s21, 1
      %p81 = por %p79, %p80
      %p82 = scmp.ne.s32.totalorder %s73, %s74
      %p83 = scmp.eq.s32.totalorder %s21, 0
      %p84 = por %p82, %p83
      %p85 = scmp.ne.s32.totalorder %s73, %s74
      %p86 = scmp.eq.s32.totalorder %s22, 1
      %p87 = por %p85, %p86
      %p89 = scmp.ne.s32.totalorder %s74, %s88
      %p90 = scmp.eq.s32.totalorder %s22, 0
      %p91 = por %p89, %p90
      %s93 = sadd.s32 %s92, 1
      %p96 = scmp.eq.s32.totalorder %s16, 1
      %p97 = scmp.ne.s32.totalorder %s92, %s94
      %p98 = scmp.eq.s32.totalorder %s16, 0
      %p99 = por %p97, %p98
      %p100 = scmp.ne.s32.totalorder %s92, %s94
      %p101 = scmp.eq.s32.totalorder %s21, 1
      %p102 = por %p100, %p101
      %p103 = scmp.ne.s32.totalorder %s94, %s95
      %p104 = scmp.eq.s32.totalorder %s21, 0
      %p105 = por %p103, %p104
      %p106 = scmp.ne.s32.totalorder %s94, %s95
      %p107 = scmp.eq.s32.totalorder %s22, 1
      %p108 = por %p106, %p107
      %p110 = scmp.ne.s32.totalorder %s95, %s109
      %p111 = scmp.eq.s32.totalorder %s22, 0
      %p112 = por %p110, %p111
      %s114 = sadd.s32 %s113, 1
      %p117 = scmp.eq.s32.totalorder %s16, 1
      %p118 = scmp.ne.s32.totalorder %s113, %s115
      %p119 = scmp.eq.s32.totalorder %s16, 0
      %p120 = por %p118, %p119
      %p121 = scmp.ne.s32.totalorder %s113, %s115
      %p122 = scmp.eq.s32.totalorder %s21, 1
      %p123 = por %p121, %p122
      %p124 = scmp.ne.s32.totalorder %s115, %s116
      %p125 = scmp.eq.s32.totalorder %s21, 0
      %p126 = por %p124, %p125
      %p127 = scmp.ne.s32.totalorder %s115, %s116
      %p128 = scmp.eq.s32.totalorder %s22, 1
      %p129 = por %p127, %p128
      %p131 = scmp.ne.s32.totalorder %s116, %s130
      %p132 = scmp.eq.s32.totalorder %s22, 0
      %p133 = por %p131, %p132
      %s135 = sadd.s32 %s134, 1
      %p138 = scmp.eq.s32.totalorder %s16, 1
      %p139 = scmp.ne.s32.totalorder %s134, %s136
      %p140 = scmp.eq.s32.totalorder %s16, 0
      %p141 = por %p139, %p140
      %p142 = scmp.ne.s32.totalorder %s134, %s136
      %p143 = scmp.eq.s32.totalorder %s21, 1
      %p144 = por %p142, %p143
      %p145 = scmp.ne.s32.totalorder %s136, %s137
      %p146 = scmp.eq.s32.totalorder %s21, 0
      %p147 = por %p145, %p146
      %p148 = scmp.ne.s32.totalorder %s136, %s137
      %p149 = scmp.eq.s32.totalorder %s22, 1
      %p150 = por %p148, %p149
      %p152 = scmp.ne.s32.totalorder %s137, %s151
      %p153 = scmp.eq.s32.totalorder %s22, 0
      %p154 = por %p152, %p153
      %s156 = sadd.s32 %s155, 1
      %p159 = scmp.eq.s32.totalorder %s16, 1
      %p160 = scmp.ne.s32.totalorder %s155, %s157
      %p161 = scmp.eq.s32.totalorder %s16, 0
      %p162 = por %p160, %p161
      %p163 = scmp.ne.s32.totalorder %s155, %s157
      %p164 = scmp.eq.s32.totalorder %s21, 1
      %p165 = por %p163, %p164
      %p166 = scmp.ne.s32.totalorder %s157, %s158
      %p167 = scmp.eq.s32.totalorder %s21, 0
      %p168 = por %p166, %p167
      %p169 = scmp.ne.s32.totalorder %s157, %s158
      %p170 = scmp.eq.s32.totalorder %s22, 1
      %p171 = por %p169, %p170
      %p173 = scmp.ne.s32.totalorder %s158, %s172
      %p174 = scmp.eq.s32.totalorder %s22, 0
      %p175 = por %p173, %p174
      %s176 = ssub.s32 %s16, %s23
      %p177 = scmp.eq.s32.totalorder %s176, 0
      %s179 = sadd.s32 %s178, 1
      %s180 = scalar_select %p177, %s178, %s179
      %p183 = pneg %p177
      %p184 = scmp.eq.s32.totalorder %s16, 1
      %p185 = por %p183, %p184
      %p186 = scmp.ne.s32.totalorder %s178, %s181
      %p187 = scmp.eq.s32.totalorder %s16, 0
      %p188 = por %p186, %p187
      %p189 = scmp.ne.s32.totalorder %s178, %s181
      %p190 = scmp.eq.s32.totalorder %s21, 1
      %p191 = por %p189, %p190
      %p192 = scmp.ne.s32.totalorder %s181, %s182
      %p193 = scmp.eq.s32.totalorder %s21, 0
      %p194 = por %p192, %p193
      %p195 = scmp.ne.s32.totalorder %s181, %s182
      %p196 = scmp.eq.s32.totalorder %s22, 1
      %p197 = por %p195, %p196
      %p199 = scmp.ne.s32.totalorder %s182, %s198
      %p200 = scmp.eq.s32.totalorder %s22, 0
      %p201 = por %p199, %p200
      %p202 = scmp.le.s32.totalorder 1, %s16
      %p203 = scmp.lt.s32.totalorder %s16, 3
      %p204 = pnand %p202, %p203
      %p205 = pneg %p204
      // Predicated region
      $region9: #{_lambda_.11} parent=5 // pred_check
        _
      $region10: #{_lambda_.11} parent=5 // pred_check_branch
        %207 = sbr.rel (%p204) target = $region12
      $region11: #{_lambda_.11} parent=5 // pred_region
        %s208 = ssub.s32 %s16, 1
        // Predicated region
        $region13: #{_lambda_.11} parent=11 // pred_check
          %p209 = pneg %p63
        $region14: #{_lambda_.11} parent=11 // pred_check_branch
          %211 = sbr.rel (%p209) target = $region16
        $region15: #{_lambda_.11} parent=11 // pred_region
          _
        $region16: #{_lambda_.11} parent=11 // pred_fallthru
          _
        // Predicated region
        $region17: #{_lambda_.11} parent=11 // pred_check
          %p212 = pneg %p84
        $region18: #{_lambda_.11} parent=11 // pred_check_branch
          %214 = sbr.rel (%p212) target = $region20
        $region19: #{_lambda_.11} parent=11 // pred_region
          _
        $region20: #{_lambda_.11} parent=11 // pred_fallthru
          _
        // Predicated region
        $region21: #{_lambda_.11} parent=11 // pred_check
          %p215 = pneg %p105
        $region22: #{_lambda_.11} parent=11 // pred_check_branch
          %217 = sbr.rel (%p215) target = $region24
        $region23: #{_lambda_.11} parent=11 // pred_region
          _
        $region24: #{_lambda_.11} parent=11 // pred_fallthru
          _
        // Predicated region
        $region25: #{_lambda_.11} parent=11 // pred_check
          %p218 = pneg %p126
        $region26: #{_lambda_.11} parent=11 // pred_check_branch
          %220 = sbr.rel (%p218) target = $region28
        $region27: #{_lambda_.11} parent=11 // pred_region
          _
        $region28: #{_lambda_.11} parent=11 // pred_fallthru
          _
        // Predicated region
        $region29: #{_lambda_.11} parent=11 // pred_check
          %p221 = pneg %p147
        $region30: #{_lambda_.11} parent=11 // pred_check_branch
          %223 = sbr.rel (%p221) target = $region32
        $region31: #{_lambda_.11} parent=11 // pred_region
          _
        $region32: #{_lambda_.11} parent=11 // pred_fallthru
          _
        // Predicated region
        $region33: #{_lambda_.11} parent=11 // pred_check
          %p224 = pneg %p168
        $region34: #{_lambda_.11} parent=11 // pred_check_branch
          %226 = sbr.rel (%p224) target = $region36
        $region35: #{_lambda_.11} parent=11 // pred_region
          _
        $region36: #{_lambda_.11} parent=11 // pred_fallthru
          _
      $region12: #{_lambda_.11} parent=5 // pred_fallthru
        _
      %p227 = scmp.lt.s32.totalorder %s16, 2
      // Predicated region
      $region37: #{_lambda_.11} parent=5 // pred_check
        %p228 = pneg %p227
      $region38: #{_lambda_.11} parent=5 // pred_check_branch
        %230 = sbr.rel (%p228) target = $region40
      $region39: #{_lambda_.11} parent=5 // pred_region
        // Predicated region
        $region41: #{_lambda_.11} parent=39 // pred_check
          %p231 = pneg %p36
        $region42: #{_lambda_.11} parent=39 // pred_check_branch
          %233 = sbr.rel (%p231) target = $region44
        $region43: #{_lambda_.11} parent=39 // pred_region
          %p234 = scmp.lt.s32.totalorder %s16, 1
          %s235 = scalar_select %p234, %s16, 1
          %s236 = smul.addr %s235, 8
          %s237 = scalar_lea.vmem %s0, %s236
        $region44: #{_lambda_.11} parent=39 // pred_fallthru
          _
      $region40: #{_lambda_.11} parent=5 // pred_fallthru
        _
      %p238 = scmp.le.s32.totalorder 1, %s16
      %p239 = scmp.lt.s32.totalorder %s16, 3
      %p240 = pnand %p238, %p239
      %p241 = pneg %p240
      // Predicated region
      $region45: #{_lambda_.11} parent=5 // pred_check
        _
      $region46: #{_lambda_.11} parent=5 // pred_check_branch
        %243 = sbr.rel (%p240) target = $region48
      $region47: #{_lambda_.11} parent=5 // pred_region
        %s244 = ssub.s32 %s16, 1
        %p245 = scmp.lt.s32.totalorder %s21, 1
        %s246 = scalar_select %p245, %s21, 1
        %s247 = smul.addr %s246, 8
        %s248 = scalar_lea.vmem %s0, %s247
        %p249 = pneg %p42
        %p250 = pneg %p39
        %p251 = pneg %p63
        %p252 = pneg %p60
        %p253 = pneg %p84
        %p254 = pneg %p81
        %p255 = pneg %p105
        %p256 = pneg %p102
        %p257 = pneg %p126
        %p258 = pneg %p123
        %p259 = pneg %p147
        %p260 = pneg %p144
        %p261 = pneg %p168
        %p262 = pneg %p165
        %p263 = pneg %p194
        %p264 = pneg %p191
        %s265 = sand.u32 %s181, 1
        %s266 = scalar_lea.sflag [#allocation3], %s265
        %s267 = sand.u32 %s181, 1
        %s268 = smul.addr %s267, 8
        %s269 = scalar_lea.vmem [#allocation2], %s268
        %p270 = scmp.lt.s32.totalorder %s21, 1
        %s271 = scalar_select %p270, %s21, 1
        %s272 = smul.addr %s271, 8
        %s273 = scalar_lea.vmem %s0, %s272
        %v275 = vld [vmem:[%s273] sm:$0xff]
        %v276 = vld [vmem:[%s1] sm:$0x1]
        %v277 = vld [vmem:[%s2] sm:$0x1]
        %vm278 = vcmask 523264
        %v279 = vsel %vm278, %v275, 0.0
        %280 = vadd.xlane.f32.xlu0 %v279
        %v281 = vpop.xlane.xlu0 %280
        %v282 = vrcp.pop 64.0
        %v283 = vmul.f32 %v281, %v282
        %v284 = vsub.f32 %v275, %v283
        %v285 = vmul.f32 %v284, %v284
        %v286 = vsel %vm278, %v285, 0.0
        %287 = vadd.xlane.f32.xlu0 %v286
        %v288 = vpop.xlane.xlu0 %287
        %v289 = vmul.f32 %v288, %v282
        %v290 = vadd.f32 %v289, 1e-05
        %v291 = vrsqrt.pop %v290
        %v292 = vmul.f32 %v284, %v291
        %v294 = vlaneseq
        %v295 = vshrl.u32 %v294, 7
        %v296 = vsub.s32 0, %v295
        %v297 = vrot.slane %v276, %v296
        %v299 = vmul.f32 %v292, %v297
        %v301 = vlaneseq
        %v302 = vshrl.u32 %v301, 7
        %v303 = vsub.s32 0, %v302
        %v304 = vrot.slane %v277, %v303
        %v306 = vadd.f32 %v299, %v304
        %v307 = vpack.c.bf16 %v306, %v306
        %v308 = vld [vmem:[%s3] sm:$0xff]
        %v309 = vld [vmem:[%s3 + $0x8] sm:$0xff]
        %v310 = vld [vmem:[%s3 + $0x10] sm:$0xff]
        %v311 = vld [vmem:[%s3 + $0x18] sm:$0xff]
        %v312 = vld [vmem:[%s3 + $0x20] sm:$0xff]
        %v313 = vld [vmem:[%s3 + $0x28] sm:$0xff]
        %v314 = vld [vmem:[%s3 + $0x30] sm:$0xff]
        %v315 = vld [vmem:[%s3 + $0x38] sm:$0xff]
        %v316 = vld [vmem:[%s3 + $0x40] sm:$0xff]
        %v317 = vld [vmem:[%s3 + $0x48] sm:$0xff]
        %v318 = vld [vmem:[%s3 + $0x50] sm:$0xff]
        %v319 = vld [vmem:[%s3 + $0x58] sm:$0xff]
        %v320 = vld [vmem:[%s3 + $0x60] sm:$0xff]
        %v321 = vld [vmem:[%s3 + $0x68] sm:$0xff]
        %v322 = vld [vmem:[%s3 + $0x70] sm:$0xff]
        %v323 = vld [vmem:[%s3 + $0x78] sm:$0xff]
        %v324 = vld [vmem:[%s4] sm:$0xf]
        %v326 = vlaneseq
        %v327 = vshrl.u32 %v326, 7
        %v328 = vsub.s32 0, %v327
        %v329 = vrot.slane %v324, %v328
        %v330 = vlaneseq
        %v331 = vshrl.u32 %v330, 7
        %v332 = vsub.s32 1, %v331
        %v333 = vrot.slane %v324, %v332
        %v334 = vlaneseq
        %v335 = vshrl.u32 %v334, 7
        %v336 = vsub.s32 2, %v335
        %v337 = vrot.slane %v324, %v336
        %v338 = vlaneseq
        %v339 = vshrl.u32 %v338, 7
        %v340 = vsub.s32 3, %v339
        %v341 = vrot.slane %v324, %v340
        %v362 = vunpack.c.l.b16 %v308
        %v363 = vunpack.c.h.b16 %v308
        %v364 = vunpack.c.l.b16 %v309
        %v365 = vunpack.c.h.b16 %v309
        %v366 = vunpack.c.l.b16 %v310
        %v367 = vunpack.c.h.b16 %v310
        %v368 = vunpack.c.l.b16 %v311
        %v369 = vunpack.c.h.b16 %v311
        %v370 = vunpack.c.l.b16 %v312
        %v371 = vunpack.c.h.b16 %v312
        %v372 = vunpack.c.l.b16 %v313
        %v373 = vunpack.c.h.b16 %v313
        %v374 = vunpack.c.l.b16 %v314
        %v375 = vunpack.c.h.b16 %v314
        %v376 = vunpack.c.l.b16 %v315
        %v377 = vunpack.c.h.b16 %v315
        %v378 = vunpack.c.l.b16 %v316
        %v379 = vunpack.c.h.b16 %v316
        %v380 = vunpack.c.l.b16 %v317
        %v381 = vunpack.c.h.b16 %v317
        %v382 = vunpack.c.l.b16 %v318
        %v383 = vunpack.c.h.b16 %v318
        %v384 = vunpack.c.l.b16 %v319
        %v385 = vunpack.c.h.b16 %v319
        %v386 = vunpack.c.l.b16 %v320
        %v387 = vunpack.c.h.b16 %v320
        %v388 = vunpack.c.l.b16 %v321
        %v389 = vunpack.c.h.b16 %v321
        %v390 = vunpack.c.l.b16 %v322
        %v391 = vunpack.c.h.b16 %v322
        %v392 = vunpack.c.l.b16 %v323
        %v393 = vunpack.c.h.b16 %v323
        %v394 = vpack.c.b16 %v366, %v362
        %v395 = vpack.c.b16 %v367, %v363
        %v396 = vpack.c.b16 %v368, %v364
        %v397 = vpack.c.b16 %v369, %v365
        %v398 = vpack.c.b16 %v374, %v370
        %v399 = vpack.c.b16 %v375, %v371
        %v400 = vpack.c.b16 %v376, %v372
        %v401 = vpack.c.b16 %v377, %v373
        %v402 = vpack.c.b16 %v382, %v378
        %v403 = vpack.c.b16 %v383, %v379
        %v404 = vpack.c.b16 %v384, %v380
        %v405 = vpack.c.b16 %v385, %v381
        %v406 = vpack.c.b16 %v390, %v386
        %v407 = vpack.c.b16 %v391, %v387
        %v408 = vpack.c.b16 %v392, %v388
        %v409 = vpack.c.b16 %v393, %v389
        %v427 = vsel %vm278, %v307, 0
        %429 = vmatprep.subr.bf16.mxu0 %v395
        %430 = vmatpush1.bf16.msra.mxu0 %v394
        %431 = vmatprep.subr.bf16.mxu0 %v399
        %432 = vmatpush1.bf16.msra.mxu0 %v398
        %433 = vmatprep.subr.bf16.mxu0 %v403
        %434 = vmatpush1.bf16.msra.mxu0 %v402
        %435 = vmatprep.subr.bf16.mxu0 %v407
        %436 = vmatpush1.bf16.msra.mxu0 %v406
        %437 = vmatprep.subr.bf16.mxu0 0
        %438 = vmatpush1.bf16.msra.mxu0 0
        %439 = vmatprep.subr.bf16.mxu0 0
        %440 = vmatpush1.bf16.msra.mxu0 0
        %441 = vmatprep.subr.bf16.mxu0 0
        %442 = vmatpush1.bf16.msra.mxu0 0
        %443 = vmatprep.subr.bf16.mxu0 0
        %444 = vmatpush1.bf16.msra.mxu0 0
        %445 = vmatprep.subr.bf16.mxu0 0
        %446 = vmatpush1.bf16.msra.mxu0 0
        %447 = vmatprep.subr.bf16.mxu0 0
        %448 = vmatpush1.bf16.msra.mxu0 0
        %449 = vmatprep.subr.bf16.mxu0 0
        %450 = vmatpush1.bf16.msra.mxu0 0
        %451 = vmatprep.subr.bf16.mxu0 0
        %452 = vmatpush1.bf16.msra.mxu0 0
        %453 = vmatprep.subr.bf16.mxu0 0
        %454 = vmatpush1.bf16.msra.mxu0 0
        %455 = vmatprep.subr.bf16.mxu0 0
        %456 = vmatpush1.bf16.msra.mxu0 0
        %457 = vmatprep.subr.bf16.mxu0 0
        %458 = vmatpush1.bf16.msra.mxu0 0
        %459 = vmatprep.subr.bf16.mxu0 0
        %460 = vmatpush1.bf16.msra.mxu0 0
        %461 = vmatprep.mubr.bf16.mxu0 0
        %462 = vmatmul.mubr.bf16.gmra.mrb[0].mxu0 %v427
        %v463 = vpop.f32.mrb[0].mxu0
        %v464 = vadd.f32 %v329, %v463
        %v465 = vpop.f32.mrb[0].mxu0
        %v466 = vadd.f32 %v333, %v465
        %v467 = vpop.f32.mrb[0].mxu0
        %v468 = vpop.f32.mrb[0].mxu0
        %469 = vdwg.mxu0
        %470 = vmatprep.subr.bf16.mxu0 %v397
        %471 = vmatpush1.bf16.msra.mxu0 %v396
        %472 = vmatprep.subr.bf16.mxu0 %v401
        %473 = vmatpush1.bf16.msra.mxu0 %v400
        %474 = vmatprep.subr.bf16.mxu0 %v405
        %475 = vmatpush1.bf16.msra.mxu0 %v404
        %476 = vmatprep.subr.bf16.mxu0 %v409
        %477 = vmatpush1.bf16.msra.mxu0 %v408
        %478 = vmatprep.subr.bf16.mxu0 0
        %479 = vmatpush1.bf16.msra.mxu0 0
        %480 = vmatprep.subr.bf16.mxu0 0
        %481 = vmatpush1.bf16.msra.mxu0 0
        %482 = vmatprep.subr.bf16.mxu0 0
        %483 = vmatpush1.bf16.msra.mxu0 0
        %484 = vmatprep.subr.bf16.mxu0 0
        %485 = vmatpush1.bf16.msra.mxu0 0
        %486 = vmatprep.subr.bf16.mxu0 0
        %487 = vmatpush1.bf16.msra.mxu0 0
        %488 = vmatprep.subr.bf16.mxu0 0
        %489 = vmatpush1.bf16.msra.mxu0 0
        %490 = vmatprep.subr.bf16.mxu0 0
        %491 = vmatpush1.bf16.msra.mxu0 0
        %492 = vmatprep.subr.bf16.mxu0 0
        %493 = vmatpush1.bf16.msra.mxu0 0
        %494 = vmatprep.subr.bf16.mxu0 0
        %495 = vmatpush1.bf16.msra.mxu0 0
        %496 = vmatprep.subr.bf16.mxu0 0
        %497 = vmatpush1.bf16.msra.mxu0 0
        %498 = vmatprep.subr.bf16.mxu0 0
        %499 = vmatpush1.bf16.msra.mxu0 0
        %500 = vmatprep.subr.bf16.mxu0 0
        %501 = vmatpush1.bf16.msra.mxu0 0
        %502 = vmatprep.mubr.bf16.mxu0 0
        %503 = vmatmul.mubr.bf16.gmra.mrb[0].mxu0 %v427
        %v504 = vpop.f32.mrb[0].mxu0
        %v505 = vadd.f32 %v337, %v504
        %v506 = vpop.f32.mrb[0].mxu0
        %v507 = vadd.f32 %v341, %v506
        %v508 = vpop.f32.mrb[0].mxu0
        %v509 = vpop.f32.mrb[0].mxu0
        %510 = vdwg.mxu0
        %v511 = vmul.f32 %v505, 0.5
        %v512 = vmul.f32 %v507, 0.5
        %v513 = vmul.f32 %v505, 0.70710677
        %v514 = vmul.f32 %v507, 0.70710677
        %v515 = verf.f32.pop %v513
        %v516 = verf.f32.pop %v514
        %v517 = vadd.f32 %v515, 1.0
        %v518 = vadd.f32 %v516, 1.0
        %v519 = vmul.f32 %v511, %v517
        %v520 = vmul.f32 %v512, %v518
        %v521 = vmul.f32 %v464, %v519
        %v522 = vmul.f32 %v466, %v520
        %v523 = vpack.c.bf16 %v521, %v521
        %v524 = vpack.c.bf16 %v522, %v522
        %v525 = vld [vmem:[%s5] sm:$0xf]
        %v526 = vld [vmem:[%s5 + $0x4] sm:$0xf]
        %v527 = vld [vmem:[%s5 + $0x8] sm:$0xf]
        %v528 = vld [vmem:[%s5 + $0xc] sm:$0xf]
        %v529 = vld [vmem:[%s5 + $0x10] sm:$0xf]
        %v530 = vld [vmem:[%s5 + $0x14] sm:$0xf]
        %v531 = vld [vmem:[%s5 + $0x18] sm:$0xf]
        %v532 = vld [vmem:[%s5 + $0x1c] sm:$0xf]
        %v533 = vld [vmem:[%s5 + $0x20] sm:$0xf]
        %v534 = vld [vmem:[%s5 + $0x24] sm:$0xf]
        %v535 = vld [vmem:[%s5 + $0x28] sm:$0xf]
        %v536 = vld [vmem:[%s5 + $0x2c] sm:$0xf]
        %v537 = vld [vmem:[%s5 + $0x30] sm:$0xf]
        %v538 = vld [vmem:[%s5 + $0x34] sm:$0xf]
        %v539 = vld [vmem:[%s5 + $0x38] sm:$0xf]
        %v540 = vld [vmem:[%s5 + $0x3c] sm:$0xf]
        %v541 = vld [vmem:[%s5 + $0x40] sm:$0xf]
        %v542 = vld [vmem:[%s5 + $0x44] sm:$0xf]
        %v543 = vld [vmem:[%s5 + $0x48] sm:$0xf]
        %v544 = vld [vmem:[%s5 + $0x4c] sm:$0xf]
        %v545 = vld [vmem:[%s5 + $0x50] sm:$0xf]
        %v546 = vld [vmem:[%s5 + $0x54] sm:$0xf]
        %v547 = vld [vmem:[%s5 + $0x58] sm:$0xf]
        %v548 = vld [vmem:[%s5 + $0x5c] sm:$0xf]
        %v549 = vld [vmem:[%s5 + $0x60] sm:$0xf]
        %v550 = vld [vmem:[%s5 + $0x64] sm:$0xf]
        %v551 = vld [vmem:[%s5 + $0x68] sm:$0xf]
        %v552 = vld [vmem:[%s5 + $0x6c] sm:$0xf]
        %v553 = vld [vmem:[%s5 + $0x70] sm:$0xf]
        %v554 = vld [vmem:[%s5 + $0x74] sm:$0xf]
        %v555 = vld [vmem:[%s5 + $0x78] sm:$0xf]
        %v556 = vld [vmem:[%s5 + $0x7c] sm:$0xf]
        %v557 = vld [vmem:[%s6] sm:$0x1]
        %v559 = vlaneseq
        %v560 = vshrl.u32 %v559, 7
        %v561 = vsub.s32 0, %v560
        %v562 = vrot.slane %v557, %v561
        %v596 = vunpack.c.l.b16 %v525
        %v597 = vunpack.c.l.b16 %v526
        %v598 = vunpack.c.l.b16 %v527
        %v599 = vunpack.c.l.b16 %v528
        %v600 = vunpack.c.l.b16 %v529
        %v601 = vunpack.c.l.b16 %v530
        %v602 = vunpack.c.l.b16 %v531
        %v603 = vunpack.c.l.b16 %v532
        %v604 = vunpack.c.l.b16 %v533
        %v605 = vunpack.c.l.b16 %v534
        %v606 = vunpack.c.l.b16 %v535
        %v607 = vunpack.c.l.b16 %v536
        %v608 = vunpack.c.l.b16 %v537
        %v609 = vunpack.c.l.b16 %v538
        %v610 = vunpack.c.l.b16 %v539
        %v611 = vunpack.c.l.b16 %v540
        %v612 = vunpack.c.l.b16 %v541
        %v613 = vunpack.c.l.b16 %v542
        %v614 = vunpack.c.l.b16 %v543
        %v615 = vunpack.c.l.b16 %v544
        %v616 = vunpack.c.l.b16 %v545
        %v617 = vunpack.c.l.b16 %v546
        %v618 = vunpack.c.l.b16 %v547
        %v619 = vunpack.c.l.b16 %v548
        %v620 = vunpack.c.l.b16 %v549
        %v621 = vunpack.c.l.b16 %v550
        %v622 = vunpack.c.l.b16 %v551
        %v623 = vunpack.c.l.b16 %v552
        %v624 = vunpack.c.l.b16 %v553
        %v625 = vunpack.c.l.b16 %v554
        %v626 = vunpack.c.l.b16 %v555
        %v627 = vunpack.c.l.b16 %v556
        %v628 = vpack.c.b16 %v597, %v596
        %v629 = vpack.c.b16 %v599, %v598
        %v630 = vpack.c.b16 %v601, %v600
        %v631 = vpack.c.b16 %v603, %v602
        %v632 = vpack.c.b16 %v605, %v604
        %v633 = vpack.c.b16 %v607, %v606
        %v634 = vpack.c.b16 %v609, %v608
        %v635 = vpack.c.b16 %v611, %v610
        %v636 = vpack.c.b16 %v613, %v612
        %v637 = vpack.c.b16 %v615, %v614
        %v638 = vpack.c.b16 %v617, %v616
        %v639 = vpack.c.b16 %v619, %v618
        %v640 = vpack.c.b16 %v621, %v620
        %v641 = vpack.c.b16 %v623, %v622
        %v642 = vpack.c.b16 %v625, %v624
        %v643 = vpack.c.b16 %v627, %v626
        %660 = vmatprep.subr.bf16.mxu0 0
        %661 = vmatpush1.bf16.msra.mxu0 %v628
        %662 = vmatprep.subr.bf16.mxu0 0
        %663 = vmatpush1.bf16.msra.mxu0 %v629
        %664 = vmatprep.subr.bf16.mxu0 0
        %665 = vmatpush1.bf16.msra.mxu0 %v630
        %666 = vmatprep.subr.bf16.mxu0 0
        %667 = vmatpush1.bf16.msra.mxu0 %v631
        %668 = vmatprep.subr.bf16.mxu0 0
        %669 = vmatpush1.bf16.msra.mxu0 %v632
        %670 = vmatprep.subr.bf16.mxu0 0
        %671 = vmatpush1.bf16.msra.mxu0 %v633
        %672 = vmatprep.subr.bf16.mxu0 0
        %673 = vmatpush1.bf16.msra.mxu0 %v634
        %674 = vmatprep.subr.bf16.mxu0 0
        %675 = vmatpush1.bf16.msra.mxu0 %v635
        %676 = vmatprep.subr.bf16.mxu0 0
        %677 = vmatpush1.bf16.msra.mxu0 %v636
        %678 = vmatprep.subr.bf16.mxu0 0
        %679 = vmatpush1.bf16.msra.mxu0 %v637
        %680 = vmatprep.subr.bf16.mxu0 0
        %681 = vmatpush1.bf16.msra.mxu0 %v638
        %682 = vmatprep.subr.bf16.mxu0 0
        %683 = vmatpush1.bf16.msra.mxu0 %v639
        %684 = vmatprep.subr.bf16.mxu0 0
        %685 = vmatpush1.bf16.msra.mxu0 %v640
        %686 = vmatprep.subr.bf16.mxu0 0
        %687 = vmatpush1.bf16.msra.mxu0 %v641
        %688 = vmatprep.subr.bf16.mxu0 0
        %689 = vmatpush1.bf16.msra.mxu0 %v642
        %690 = vmatprep.subr.bf16.mxu0 0
        %691 = vmatpush1.bf16.msra.mxu0 %v643
        %692 = vmatprep.mubr.bf16.mxu0 %v524
        %693 = vmatmul.mubr.bf16.gmra.mrb[0].mxu0 %v523
        %v694 = vpop.f32.mrb[0].mxu0
        %v695 = vadd.f32 %v562, %v694
        %v696 = vpop.f32.mrb[0].mxu0
        %v697 = vpop.f32.mrb[0].mxu0
        %v698 = vpop.f32.mrb[0].mxu0
        %699 = vdwg.mxu0
        %v700 = vadd.f32 %v695, %v275
        %701 = vst.msk [vmem:[%s269] sm:$0xff] %vm278, %v700
        %s702 = sand.u32 %s181, 1
        %s703 = scalar_lea.sflag [#allocation3], %s702
        %s704 = sand.u32 %s181, 1
        %s705 = smul.addr %s704, 8
        %s706 = scalar_lea.vmem [#allocation2], %s705
        // Predicated region
        $region49: #{_lambda_.11} parent=47 // pred_check
          %p707 = pneg %p191
        $region50: #{_lambda_.11} parent=47 // pred_check_branch
          %709 = sbr.rel (%p707) target = $region52
        $region51: #{_lambda_.11} parent=47 // pred_region
          %s711 = ssub.s32 128, 128
          %712 = vsyncadd %s703, %s711
          %s713 = smul.addr %s21, 128
          %s714 = scalar_lea.hbm %s7, %s713
          %s716 = sshll.u32 %s706, 4
          %s717 = int_to_ptr.vmem [resolvable:$true] %s716
          %719 = dma.vmem_to_hbm [thread:$0]  %s717, 128, %s714, %s703
        $region52: #{_lambda_.11} parent=47 // pred_fallthru
          _
      $region48: #{_lambda_.11} parent=5 // pred_fallthru
        _
      %p720 = scmp.le.s32.totalorder 2, %s16
      // Predicated region
      $region53: #{_lambda_.11} parent=5 // pred_check
        %p721 = pneg %p720
      $region54: #{_lambda_.11} parent=5 // pred_check_branch
        %723 = sbr.rel (%p721) target = $region56
      $region55: #{_lambda_.11} parent=5 // pred_region
        %s724 = ssub.s32 %s16, 2
        // Predicated region
        $region57: #{_lambda_.11} parent=55 // pred_check
          %p725 = pneg %p197
        $region58: #{_lambda_.11} parent=55 // pred_check_branch
          %727 = sbr.rel (%p725) target = $region60
        $region59: #{_lambda_.11} parent=55 // pred_region
          %s728 = sand.u32 %s182, 1
          %s729 = scalar_lea.sflag [#allocation3], %s728
          %s730 = sand.u32 %s182, 1
          %s731 = smul.addr %s730, 8
          %s732 = scalar_lea.vmem [#allocation2], %s731
          %733 = dma.done %s729, 128
        $region60: #{_lambda_.11} parent=55 // pred_fallthru
          _
      $region56: #{_lambda_.11} parent=5 // pred_fallthru
        _
    $region6: #{_lambda_.11} parent=1 // loop_footer
      %s20 = sadd.s32 1, %s16
    $region7: #{_lambda_.11} parent=1 // loop_footer_branch
      %15 = sbr.rel target = $region3
    $region8: #{_lambda_.11} parent=1 // loop_exit
      _
    %734 = vsyncpa [#allocation3], 1
    %s735 = scalar_lea.sflag [#allocation3], 1
    %736 = vsyncpa %s735, 1

</llo_original>
